<compile_context>
chip_gen: v5e
topology: v5e:2x2
jax: 0.10.0
libtpu: 0.0.40
codegen_flags: <defaults>
</compile_context>

<pallas_src>
import functools
import math

import jax
import jax.numpy as jnp
from jax import lax
from jax.experimental import pallas as pl
from jax.experimental.pallas import tpu as pltpu

# ----------------------------- config (small, forward-consistent) ----------------------
B = 2              # batch
C_IN = 3           # image channels
IMG = 16           # spatial
PATCH = 8          # patch size -> 4 patches / image, 8 after img+dcp merge
N_PATCH = (IMG // PATCH) ** 2

D_VIS = 64         # vision width   (768 in real CLIP)
HEADS_VIS = 4
D_TXT = 32         # text width     (512 in real CLIP)
HEADS_TXT = 4
EMBED = 32         # shared embedding dim
N_LAYERS = 3       # transformer depth (both towers)

N_CLS = 2          # ["bad_photo", "good_photo"]
N_CTX = 4
PROMPTS_DEPTH = 12
S_TXT = 1 + N_CTX + 3          # SOS + ctx + (classname, '.', EOT) = 8
S_VIS0 = 1 + 2 * N_PATCH       # cls + merged(img,dcp) patch tokens = 9
S_VIS = S_VIS0 + N_CTX         # + visual prompt tokens = 13


def _vmem_specs(n):
    return [pl.BlockSpec(memory_space=pltpu.MemorySpace.VMEM) for _ in range(n)]


# ----------------------------- in-kernel helpers ----------------------------------------
def _mm(a, b):
    """MXU matmul: bf16 operands, f32 accumulation (v6e/v7x friendly, v5e-safe)."""
    return jnp.dot(a.astype(jnp.bfloat16), b.astype(jnp.bfloat16),
                   preferred_element_type=jnp.float32)


def _ln(x, g, b):
    """LayerNorm over last dim, f32 statistics (VPU/EUP stay f32 -> v5e-safe)."""
    mu = jnp.mean(x, axis=-1, keepdims=True)
    xc = x - mu
    var = jnp.mean(xc * xc, axis=-1, keepdims=True)
    return xc * lax.rsqrt(var + 1e-5) * g + b


# ----------------------------- Pallas kernels -------------------------------------------
def _matmul_kernel(x_ref, w_ref, o_ref):
    o_ref[...] = _mm(x_ref[...], w_ref[...])


def matmul(x, w):
    m = x.shape[0]
    n = w.shape[1]
    return pl.pallas_call(
        _matmul_kernel,
        out_shape=jax.ShapeDtypeStruct((m, n), jnp.float32),
        in_specs=_vmem_specs(2),
        out_specs=pl.BlockSpec(memory_space=pltpu.MemorySpace.VMEM),
    )(x, w)


def _layernorm_kernel(x_ref, g_ref, b_ref, o_ref):
    o_ref[...] = _ln(x_ref[...], g_ref[...], b_ref[...])


def layernorm(x, g, b):
    m, d = x.shape
    return pl.pallas_call(
        _layernorm_kernel,
        out_shape=jax.ShapeDtypeStruct((m, d), jnp.float32),
        in_specs=_vmem_specs(3),
        out_specs=pl.BlockSpec(memory_space=pltpu.MemorySpace.VMEM),
    )(x, g.reshape(1, d), b.reshape(1, d))


def _ln_proj_kernel(x_ref, g_ref, b_ref, w_ref, o_ref):
    h = _ln(x_ref[...], g_ref[...], b_ref[...])
    o_ref[...] = _mm(h, w_ref[...])


def ln_proj(x, g, b, w):
    """Fused final layernorm + linear projection (no bias)."""
    m, d = x.shape
    n = w.shape[1]
    return pl.pallas_call(
        _ln_proj_kernel,
        out_shape=jax.ShapeDtypeStruct((m, n), jnp.float32),
        in_specs=_vmem_specs(4),
        out_specs=pl.BlockSpec(memory_space=pltpu.MemorySpace.VMEM),
    )(x, g.reshape(1, d), b.reshape(1, d), w)


def _batched_proj_kernel(x_ref, w_ref, b_ref, o_ref):
    x = x_ref[...].astype(jnp.bfloat16)       # [n, c, d]
    w = w_ref[...].astype(jnp.bfloat16)       # [n, d, k]
    o_ref[...] = jnp.einsum("ncd,ndk->nck", x, w,
                            preferred_element_type=jnp.float32) + b_ref[...]


def batched_projection(x, w, b):
    """All PROMPTS_DEPTH prompt projections in one kernel (was 12 separate calls)."""
    n, c, d = x.shape
    k = w.shape[2]
    return pl.pallas_call(
        _batched_proj_kernel,
        out_shape=jax.ShapeDtypeStruct((n, c, k), jnp.float32),
        in_specs=_vmem_specs(3),
        out_specs=pl.BlockSpec(memory_space=pltpu.MemorySpace.VMEM),
    )(x, w, b.reshape(n, 1, k))


def _block_kernel(x_ref, mask_ref, ln1g_ref, ln1b_ref, qkvw_ref, qkvb_ref,
                  outw_ref, outb_ref, ln2g_ref, ln2b_ref, fcw_ref, fcb_ref,
                  pjw_ref, pjb_ref, o_ref, *, n_heads, scale):
    """Fully fused pre-LN transformer block on packed [b*s, d] tokens.

    The attention mask is block-diagonal over batch elements (+ causal for text),
    which makes the packed-sequence attention exactly equal to per-batch attention.
    """
    d = x_ref.shape[-1]
    dh = d // n_heads
    x = x_ref[...]                                              # [M, d]  (M = b*s)
    mask = mask_ref[...]                                        # [M, M]

    # ---- attention branch ----
    h = _ln(x, ln1g_ref[...], ln1b_ref[...])
    qkv = _mm(h, qkvw_ref[...]) + qkvb_ref[...]                 # [M, 3d] f32
    attn = jnp.zeros_like(x)
    for hd in range(n_heads):                                   # static unroll
        q = qkv[:, hd * dh:(hd + 1) * dh] * scale               # fold 1/sqrt(dh) into Q
        k = qkv[:, d + hd * dh: d + (hd + 1) * dh]
        v = qkv[:, 2 * d + hd * dh: 2 * d + (hd + 1) * dh]
        sc = lax.dot_general(q.astype(jnp.bfloat16), k.astype(jnp.bfloat16),
                             (((1,), (1,)), ((), ())),
                             preferred_element_type=jnp.float32)
        sc = sc + mask
        sc = sc - jnp.max(sc, axis=-1, keepdims=True)
        prob = jnp.exp(sc)
        prob = prob / jnp.sum(prob, axis=-1, keepdims=True)     # f32 softmax
        ctx = _mm(prob, v)                                      # [M, dh]
        # out projection of the concatenated heads == sum of per-head slices of out_w
        attn = attn + _mm(ctx, outw_ref[hd * dh:(hd + 1) * dh, :])
    x = x + attn + outb_ref[...]

    # ---- MLP branch ----
    h = _ln(x, ln2g_ref[...], ln2b_ref[...])
    h = _mm(h, fcw_ref[...]) + fcb_ref[...]
    h = h * jax.nn.sigmoid(1.702 * h)                           # QuickGELU, f32
    h = _mm(h, pjw_ref[...]) + pjb_ref[...]
    o_ref[...] = x + h


def transformer_block(x2d, p, mask, n_heads):
    m, d = x2d.shape
    dh = d // n_heads
    kern = functools.partial(_block_kernel, n_heads=n_heads, scale=1.0 / math.sqrt(dh))
    return pl.pallas_call(
        kern,
        out_shape=jax.ShapeDtypeStruct((m, d), jnp.float32),
        in_specs=_vmem_specs(14),
        out_specs=pl.BlockSpec(memory_space=pltpu.MemorySpace.VMEM),
    )(x2d, mask,
      p["ln1_g"].reshape(1, d), p["ln1_b"].reshape(1, d),
      p["qkv_w"], p["qkv_b"].reshape(1, 3 * d),
      p["out_w"], p["out_b"].reshape(1, d),
      p["ln2_g"].reshape(1, d), p["ln2_b"].reshape(1, d),
      p["fc_w"], p["fc_b"].reshape(1, 4 * d),
      p["proj_w"], p["proj_b"].reshape(1, d))


def _score_kernel(img_ref, txt_ref, ls_ref, o_ref):
    img = img_ref[...]
    txt = txt_ref[...]
    img = img * lax.rsqrt(jnp.sum(img * img, axis=-1, keepdims=True) + 1e-12)
    txt = txt * lax.rsqrt(jnp.sum(txt * txt, axis=-1, keepdims=True) + 1e-12)
    logits = ls_ref[0] * lax.dot_general(
        img, txt, (((1,), (1,)), ((), ())), preferred_element_type=jnp.float32)
    logits = logits - jnp.max(logits, axis=-1, keepdims=True)
    prob = jnp.exp(logits)
    prob = prob / jnp.sum(prob, axis=-1, keepdims=True)
    o_ref[...] = prob[:, 1:]


def final_score(image_features, text_features, logit_scale):
    b = image_features.shape[0]
    n_cls = text_features.shape[0]
    ls = jnp.exp(logit_scale).reshape(1)        # .exp() done outside, as in the module
    return pl.pallas_call(
        _score_kernel,
        out_shape=jax.ShapeDtypeStruct((b, n_cls - 1), jnp.float32),
        in_specs=[pl.BlockSpec(memory_space=pltpu.MemorySpace.VMEM),
                  pl.BlockSpec(memory_space=pltpu.MemorySpace.VMEM),
                  pl.BlockSpec(memory_space=pltpu.MemorySpace.SMEM)],
        out_specs=pl.BlockSpec(memory_space=pltpu.MemorySpace.VMEM),
    )(image_features, text_features, ls)


# ----------------------------- glue helpers ----------------------------------------------
def _block_diag_mask(base, nb):
    """Block-diagonal attention mask: `base` on the diagonal blocks, -1e9 elsewhere."""
    s = base.shape[0]
    idx = jnp.arange(nb * s)
    same = (idx[:, None] // s) == (idx[None, :] // s)
    return jnp.where(same, jnp.tile(base, (nb, nb)), -1e9).astype(jnp.float32)


# ----------------------------- composite modules -----------------------------------------
def prompt_learner_forward(p):
    txt_deep = batched_projection(p["prompts_text"], p["txt_proj_w"], p["txt_proj_b"])
    vis_deep = batched_projection(p["prompts_vis"], p["vis_proj_w"], p["vis_proj_b"])
    ctx = jnp.broadcast_to(txt_deep[0][None], (N_CLS, N_CTX, D_TXT))
    prompts = jnp.concatenate([p["token_prefix"], ctx, p["token_suffix"]], axis=1)
    return prompts, vis_deep[0], txt_deep[1:], vis_deep[1:]


def text_encoder(prompts, tokenized_prompts, deep_text, p):
    n_cls, s, d = prompts.shape
    x = prompts + p["pos"][None]
    mask = _block_diag_mask(p["causal_mask"], n_cls)            # packed-batch causal mask
    x2 = x.reshape(n_cls * s, d)
    for i in range(N_LAYERS):
        if i > 0 and (i - 1) < deep_text.shape[0]:
            x3 = x2.reshape(n_cls, s, d)
            ctx_i = jnp.broadcast_to(deep_text[i - 1][None], (n_cls, N_CTX, d))
            x3 = jnp.concatenate([x3[:, :1], ctx_i, x3[:, 1 + N_CTX:]], axis=1)
            x2 = x3.reshape(n_cls * s, d)
        x2 = transformer_block(x2, p["blocks"][i], mask, HEADS_TXT)
    x = x2.reshape(n_cls, s, d)
    eot = jnp.argmax(tokenized_prompts, axis=-1)
    feats = x[jnp.arange(n_cls), eot]                           # EOT-token features
    return ln_proj(feats, p["ln_final_g"], p["ln_final_b"], p["text_projection"])


# TODO(synk): the modified CLIP visual `tokenize` / `forward_merge` source is not provided;
# reconstructed here following MaPLe conventions (patch-conv tokenize, cls+pos+ln_pre,
# append/replace visual prompt tokens per layer, ln_post on cls, linear projection).
def image_tokenize_pair(image, dcp, p):
    """Patch-embed image and dcp with ONE kernel (concatenated along batch)."""
    both = jnp.concatenate([image, dcp], axis=0)                # [2B, C, H, W]
    bb, c, hh, ww = both.shape
    gh, gw = hh // PATCH, ww // PATCH
    x = both.reshape(bb, c, gh, PATCH, gw, PATCH)
    x = x.transpose(0, 2, 4, 1, 3, 5).reshape(bb * gh * gw, c * PATCH * PATCH)
    tok = matmul(x, p["conv_w"])                                # conv (bias=False)
    tok = tok.reshape(bb, gh * gw, D_VIS)
    b = bb // 2
    return jnp.concatenate([tok[:b], tok[b:]], axis=1)          # [B, 2*np, D_VIS]


def image_forward_merge(tokens, shared_ctx, deep_vis, p):
    b, _, d = tokens.shape
    cls = jnp.broadcast_to(p["cls_emb"][None, None, :], (b, 1, d))
    x = jnp.concatenate([cls, tokens], axis=1) + p["pos"][None]
    s0 = x.shape[1]
    x = layernorm(x.reshape(b * s0, d), p["ln_pre_g"], p["ln_pre_b"]).reshape(b, s0, d)
    ctx = jnp.broadcast_to(shared_ctx[None], (b, N_CTX, d))
    x = jnp.concatenate([x, ctx], axis=1)
    s = x.shape[1]
    mask = _block_diag_mask(jnp.zeros((s, s), jnp.float32), b)  # no cross-image attention
    x2 = x.reshape(b * s, d)
    for i in range(N_LAYERS):
        if i > 0 and (i - 1) < deep_vis.shape[0]:
            x3 = x2.reshape(b, s, d)
            new_ctx = jnp.broadcast_to(deep_vis[i - 1][None], (b, N_CTX, d))
            x3 = jnp.concatenate([x3[:, : s - N_CTX], new_ctx], axis=1)
            x2 = x3.reshape(b * s, d)
        x2 = transformer_block(x2, p["blocks"][i], mask, HEADS_VIS)
    x = x2.reshape(b, s, d)
    return ln_proj(x[:, 0], p["ln_post_g"], p["ln_post_b"], p["proj"])


def custom_clip_forward(params, image, dcp):
    merged = image_tokenize_pair(image, dcp, params["visual"])  # cat along token dim
    prompts, shared_ctx, deep_text, deep_vis = prompt_learner_forward(params["prompt_learner"])
    text_features = text_encoder(prompts, params["tokenized_prompts"], deep_text, params["text"])
    image_features = image_forward_merge(merged, shared_ctx, deep_vis, params["visual"])
    return final_score(image_features, text_features, params["logit_scale"])


# ----------------------------- deterministic parameter init ------------------------------
def init_params(key):
    keys = iter(jax.random.split(key, 256))

    def nrm(shape, std=0.02):
        return (std * jax.random.normal(next(keys), shape)).astype(jnp.float32)

    def init_block(d):
        return dict(
            ln1_g=jnp.ones((d,), jnp.float32), ln1_b=jnp.zeros((d,), jnp.float32),
            qkv_w=nrm((d, 3 * d), d ** -0.5), qkv_b=jnp.zeros((3 * d,), jnp.float32),
            out_w=nrm((d, d), d ** -0.5), out_b=jnp.zeros((d,), jnp.float32),
            ln2_g=jnp.ones((d,), jnp.float32), ln2_b=jnp.zeros((d,), jnp.float32),
            fc_w=nrm((d, 4 * d), d ** -0.5), fc_b=jnp.zeros((4 * d,), jnp.float32),
            proj_w=nrm((4 * d, d), (4 * d) ** -0.5), proj_b=jnp.zeros((d,), jnp.float32),
        )

    causal = jnp.where(
        jnp.tril(jnp.ones((S_TXT, S_TXT), bool)), 0.0, -1e9
    ).astype(jnp.float32)

    text = dict(
        pos=nrm((S_TXT, D_TXT), 0.01),
        blocks=[init_block(D_TXT) for _ in range(N_LAYERS)],
        ln_final_g=jnp.ones((D_TXT,), jnp.float32),
        ln_final_b=jnp.zeros((D_TXT,), jnp.float32),
        text_projection=nrm((D_TXT, EMBED), D_TXT ** -0.5),
        causal_mask=causal,
    )

    visual = dict(
        conv_w=nrm((C_IN * PATCH * PATCH, D_VIS), (C_IN * PATCH * PATCH) ** -0.5),
        cls_emb=nrm((D_VIS,), D_VIS ** -0.5),
        pos=nrm((S_VIS0, D_VIS), 0.01),
        ln_pre_g=jnp.ones((D_VIS,), jnp.float32), ln_pre_b=jnp.zeros((D_VIS,), jnp.float32),
        blocks=[init_block(D_VIS) for _ in range(N_LAYERS)],
        ln_post_g=jnp.ones((D_VIS,), jnp.float32), ln_post_b=jnp.zeros((D_VIS,), jnp.float32),
        proj=nrm((D_VIS, EMBED), D_VIS ** -0.5),
    )

    # TODO(synk): clip.tokenize / token_embedding of real classnames not available;
    # token_prefix / token_suffix buffers are synthetic embeddings (same shapes as module).
    prompt_learner = dict(
        token_prefix=nrm((N_CLS, 1, D_TXT), 0.02),
        token_suffix=nrm((N_CLS, S_TXT - 1 - N_CTX, D_TXT), 0.02),
        prompts_text=nrm((PROMPTS_DEPTH, N_CTX, D_TXT), 0.02),
        prompts_vis=nrm((PROMPTS_DEPTH, N_CTX, D_VIS), 0.02),
        txt_proj_w=nrm((PROMPTS_DEPTH, D_TXT, D_TXT), D_TXT ** -0.5),
        txt_proj_b=nrm((PROMPTS_DEPTH, D_TXT), 0.01),
        vis_proj_w=nrm((PROMPTS_DEPTH, D_VIS, D_VIS), D_VIS ** -0.5),
        vis_proj_b=nrm((PROMPTS_DEPTH, D_VIS), 0.01),
    )

    tokenized_prompts = jnp.array(
        [[49406, 343, 344, 345, 346, 1125, 269, 49407],
         [49406, 343, 344, 345, 346, 1420, 269, 49407]], dtype=jnp.int32
    )  # argmax(-1) == EOT position

    return dict(
        text=text,
        visual=visual,
        prompt_learner=prompt_learner,
        tokenized_prompts=tokenized_prompts,
        logit_scale=jnp.array(math.log(1.0 / 0.07), jnp.float32),
    )


# ----------------------------- main ------------------------------------------------------
if __name__ == "__main__":
    key = jax.random.PRNGKey(0)
    k_param, k_img, k_dcp = jax.random.split(key, 3)
    params = init_params(k_param)
    image = jax.random.normal(k_img, (B, C_IN, IMG, IMG), jnp.float32)   # NCHW
    dcp = jax.random.normal(k_dcp, (B, C_IN, IMG, IMG), jnp.float32)     # NCHW

    fwd = jax.jit(custom_clip_forward)
    score = fwd(params, image, dcp)
    jax.block_until_ready(score)

    assert score.shape == (B, N_CLS - 1)
    assert bool(jnp.all(jnp.isfinite(score)))
    print("KERNEL_OK")
</pallas_src>

<mosaic_0001>
module attributes {stable_mosaic.version = 11 : i64} {
  func.func @_batched_proj_kernel(%arg0: memref<12x4x32xf32, #tpu.memory_space<vmem>>, %arg1: memref<12x32x32xf32, #tpu.memory_space<vmem>>, %arg2: memref<12x1x32xf32, #tpu.memory_space<vmem>>, %arg3: memref<12x4x32xf32, #tpu.memory_space<vmem>>) attributes {dimension_semantics = [], scalar_prefetch = 0 : i64, scratch_operands = 0 : i64, tpu.core_type = #tpu.core_type<tc>} {
    %c0 = arith.constant 0 : index
    %c0_0 = arith.constant 0 : index
    %c0_1 = arith.constant 0 : index
    %0 = vector.load %arg0[%c0, %c0_0, %c0_1] : memref<12x4x32xf32, #tpu.memory_space<vmem>>, vector<12x4x32xf32>
    %1 = arith.truncf %0 : vector<12x4x32xf32> to vector<12x4x32xbf16>
    %c0_2 = arith.constant 0 : index
    %c0_3 = arith.constant 0 : index
    %c0_4 = arith.constant 0 : index
    %2 = vector.load %arg1[%c0_2, %c0_3, %c0_4] : memref<12x32x32xf32, #tpu.memory_space<vmem>>, vector<12x32x32xf32>
    %3 = arith.truncf %2 : vector<12x32x32xf32> to vector<12x32x32xbf16>
    "tpu.trace_start"() <{level = 10 : i32, message = "ncd,ndk->nck"}> : () -> ()
    %cst = arith.constant dense<0.000000e+00> : vector<12x4x32xf32>
    %4 = tpu.matmul %1, %3, %cst {dimension_numbers = #tpu.dot_dimension_numbers<[2], [1], [1], [2], [0, 0, 0, 1, 1, 2], [0], [0]>} : vector<12x4x32xbf16>, vector<12x32x32xbf16>, vector<12x4x32xf32> -> vector<12x4x32xf32>
    "tpu.trace_stop"() : () -> ()
    %c0_5 = arith.constant 0 : index
    %c0_6 = arith.constant 0 : index
    %c0_7 = arith.constant 0 : index
    %5 = vector.load %arg2[%c0_5, %c0_6, %c0_7] : memref<12x1x32xf32, #tpu.memory_space<vmem>>, vector<12x1x32xf32>
    %6 = vector.broadcast %5 : vector<12x1x32xf32> to vector<12x4x32xf32>
    %7 = arith.addf %4, %6 : vector<12x4x32xf32>
    %c0_8 = arith.constant 0 : index
    %c0_9 = arith.constant 0 : index
    %c0_10 = arith.constant 0 : index
    %8 = vector.load %arg3[%c0_8, %c0_9, %c0_10] : memref<12x4x32xf32, #tpu.memory_space<vmem>>, vector<12x4x32xf32>
    tpu.vector_store %arg3[%c0_8, %c0_9, %c0_10], %7 {strides = array<i32>} : memref<12x4x32xf32, #tpu.memory_space<vmem>>, vector<12x4x32xf32>,
    return
  }
}

module attributes {stable_mosaic.version = 11 : i64} {
  func.func @_block_kernel(%arg0: memref<16x32xf32, #tpu.memory_space<vmem>>, %arg1: memref<16x16xf32, #tpu.memory_space<vmem>>, %arg2: memref<1x32xf32, #tpu.memory_space<vmem>>, %arg3: memref<1x32xf32, #tpu.memory_space<vmem>>, %arg4: memref<32x96xf32, #tpu.memory_space<vmem>>, %arg5: memref<1x96xf32, #tpu.memory_space<vmem>>, %arg6: memref<32x32xf32, #tpu.memory_space<vmem>>, %arg7: memref<1x32xf32, #tpu.memory_space<vmem>>, %arg8: memref<1x32xf32, #tpu.memory_space<vmem>>, %arg9: memref<1x32xf32, #tpu.memory_space<vmem>>, %arg10: memref<32x128xf32, #tpu.memory_space<vmem>>, %arg11: memref<1x128xf32, #tpu.memory_space<vmem>>, %arg12: memref<128x32xf32, #tpu.memory_space<vmem>>, %arg13: memref<1x32xf32, #tpu.memory_space<vmem>>, %arg14: memref<16x32xf32, #tpu.memory_space<vmem>>) attributes {dimension_semantics = [], scalar_prefetch = 0 : i64, scratch_operands = 0 : i64, tpu.core_type = #tpu.core_type<tc>} {
    %c0 = arith.constant 0 : index
    %c0_0 = arith.constant 0 : index
    %0 = vector.load %arg0[%c0, %c0_0] : memref<16x32xf32, #tpu.memory_space<vmem>>, vector<16x32xf32>
    %c0_1 = arith.constant 0 : index
    %c0_2 = arith.constant 0 : index
    %1 = vector.load %arg1[%c0_1, %c0_2] : memref<16x16xf32, #tpu.memory_space<vmem>>, vector<16x16xf32>
    %c0_3 = arith.constant 0 : index
    %c0_4 = arith.constant 0 : index
    %2 = vector.load %arg2[%c0_3, %c0_4] : memref<1x32xf32, #tpu.memory_space<vmem>>, vector<1x32xf32>
    %c0_5 = arith.constant 0 : index
    %c0_6 = arith.constant 0 : index
    %3 = vector.load %arg3[%c0_5, %c0_6] : memref<1x32xf32, #tpu.memory_space<vmem>>, vector<1x32xf32>
    %cst = arith.constant dense<0.000000e+00> : vector<16xf32>
    %4 = vector.multi_reduction <add>, %0, %cst [1] : vector<16x32xf32> to vector<16xf32>
    %5 = vector.shape_cast %4 : vector<16xf32> to vector<16x1xf32>
    %cst_7 = arith.constant 3.200000e+01 : f32
    %6 = vector.broadcast %cst_7 : f32 to vector<16x1xf32>
    %7 = arith.divf %5, %6 : vector<16x1xf32>
    %8 = vector.broadcast %7 : vector<16x1xf32> to vector<16x32xf32>
    %9 = arith.subf %0, %8 : vector<16x32xf32>
    %10 = arith.mulf %9, %9 : vector<16x32xf32>
    %cst_8 = arith.constant dense<0.000000e+00> : vector<16xf32>
    %11 = vector.multi_reduction <add>, %10, %cst_8 [1] : vector<16x32xf32> to vector<16xf32>
    %12 = vector.shape_cast %11 : vector<16xf32> to vector<16x1xf32>
    %cst_9 = arith.constant 3.200000e+01 : f32
    %13 = vector.broadcast %cst_9 : f32 to vector<16x1xf32>
    %14 = arith.divf %12, %13 : vector<16x1xf32>
    %cst_10 = arith.constant 9.99999974E-6 : f32
    %15 = vector.broadcast %cst_10 : f32 to vector<16x1xf32>
    %16 = arith.addf %14, %15 : vector<16x1xf32>
    %17 = math.rsqrt %16 : vector<16x1xf32>
    %18 = vector.broadcast %17 : vector<16x1xf32> to vector<16x32xf32>
    %19 = arith.mulf %9, %18 : vector<16x32xf32>
    %20 = vector.broadcast %2 : vector<1x32xf32> to vector<16x32xf32>
    %21 = arith.mulf %19, %20 : vector<16x32xf32>
    %22 = vector.broadcast %3 : vector<1x32xf32> to vector<16x32xf32>
    %23 = arith.addf %21, %22 : vector<16x32xf32>
    %c0_11 = arith.constant 0 : index
    %c0_12 = arith.constant 0 : index
    %24 = vector.load %arg4[%c0_11, %c0_12] : memref<32x96xf32, #tpu.memory_space<vmem>>, vector<32x96xf32>
    %25 = arith.truncf %23 : vector<16x32xf32> to vector<16x32xbf16>
    %26 = arith.truncf %24 : vector<32x96xf32> to vector<32x96xbf16>
    %cst_13 = arith.constant dense<0.000000e+00> : vector<16x96xf32>
    %27 = tpu.matmul %25, %26, %cst_13 {dimension_numbers = #tpu.dot_dimension_numbers<[1], [0], [0], [1], [0, 0, 1, 1], [], []>} : vector<16x32xbf16>, vector<32x96xbf16>, vector<16x96xf32> -> vector<16x96xf32>
    %c0_14 = arith.constant 0 : index
    %c0_15 = arith.constant 0 : index
    %28 = vector.load %arg5[%c0_14, %c0_15] : memref<1x96xf32, #tpu.memory_space<vmem>>, vector<1x96xf32>
    %29 = vector.broadcast %28 : vector<1x96xf32> to vector<16x96xf32>
    %30 = arith.addf %27, %29 : vector<16x96xf32>
    %cst_16 = arith.constant 0.000000e+00 : f32
    %31 = vector.broadcast %cst_16 : f32 to vector<16x32xf32>
    %32 = vector.extract_strided_slice %30 {offsets = [0, 0], sizes = [16, 8], strides = [1, 1]} : vector<16x96xf32> to vector<16x8xf32>
    %cst_17 = arith.constant 0.353553385 : f32
    %33 = vector.broadcast %cst_17 : f32 to vector<16x8xf32>
    %34 = arith.mulf %32, %33 : vector<16x8xf32>
    %35 = vector.extract_strided_slice %30 {offsets = [0, 32], sizes = [16, 8], strides = [1, 1]} : vector<16x96xf32> to vector<16x8xf32>
    %36 = vector.extract_strided_slice %30 {offsets = [0, 64], sizes = [16, 8], strides = [1, 1]} : vector<16x96xf32> to vector<16x8xf32>
    %37 = arith.truncf %34 : vector<16x8xf32> to vector<16x8xbf16>
    %38 = arith.truncf %35 : vector<16x8xf32> to vector<16x8xbf16>
    %cst_18 = arith.constant dense<0.000000e+00> : vector<16x16xf32>
    %39 = tpu.matmul %37, %38, %cst_18 {dimension_numbers = #tpu.dot_dimension_numbers<[1], [1], [0], [0], [0, 0, 1, 0], [], []>} : vector<16x8xbf16>, vector<16x8xbf16>, vector<16x16xf32> -> vector<16x16xf32>
    %40 = arith.addf %39, %1 : vector<16x16xf32>
    %cst_19 = arith.constant dense<0xFF800000> : vector<16xf32>
    %41 = vector.multi_reduction <maximumf>, %40, %cst_19 [1] : vector<16x16xf32> to vector<16xf32>
    %42 = vector.shape_cast %41 : vector<16xf32> to vector<16x1xf32>
    %43 = vector.broadcast %42 : vector<16x1xf32> to vector<16x16xf32>
    %44 = arith.subf %40, %43 : vector<16x16xf32>
    %45 = math.exp %44 : vector<16x16xf32>
    %cst_20 = arith.constant dense<0.000000e+00> : vector<16xf32>
    %46 = vector.multi_reduction <add>, %45, %cst_20 [1] : vector<16x16xf32> to vector<16xf32>
    %47 = vector.shape_cast %46 : vector<16xf32> to vector<16x1xf32>
    %48 = vector.broadcast %47 : vector<16x1xf32> to vector<16x16xf32>
    %49 = arith.divf %45, %48 : vector<16x16xf32>
    %50 = arith.truncf %49 : vector<16x16xf32> to vector<16x16xbf16>
    %51 = arith.truncf %36 : vector<16x8xf32> to vector<16x8xbf16>
    %cst_21 = arith.constant dense<0.000000e+00> : vector<16x8xf32>
    %52 = tpu.matmul %50, %51, %cst_21 {dimension_numbers = #tpu.dot_dimension_numbers<[1], [0], [0], [1], [0, 0, 1, 1], [], []>} : vector<16x16xbf16>, vector<16x8xbf16>, vector<16x8xf32> -> vector<16x8xf32>
    %c0_22 = arith.constant 0 : index
    %c0_23 = arith.constant 0 : index
    %53 = vector.load %arg6[%c0_22, %c0_23] : memref<32x32xf32, #tpu.memory_space<vmem>>, vector<8x32xf32>
    %54 = arith.truncf %52 : vector<16x8xf32> to vector<16x8xbf16>
    %55 = arith.truncf %53 : vector<8x32xf32> to vector<8x32xbf16>
    %cst_24 = arith.constant dense<0.000000e+00> : vector<16x32xf32>
    %56 = tpu.matmul %54, %55, %cst_24 {dimension_numbers = #tpu.dot_dimension_numbers<[1], [0], [0], [1], [0, 0, 1, 1], [], []>} : vector<16x8xbf16>, vector<8x32xbf16>, vector<16x32xf32> -> vector<16x32xf32>
    %57 = arith.addf %31, %56 : vector<16x32xf32>
    %58 = vector.extract_strided_slice %30 {offsets = [0, 8], sizes = [16, 8], strides = [1, 1]} : vector<16x96xf32> to vector<16x8xf32>
    %cst_25 = arith.constant 0.353553385 : f32
    %59 = vector.broadcast %cst_25 : f32 to vector<16x8xf32>
    %60 = arith.mulf %58, %59 : vector<16x8xf32>
    %61 = vector.extract_strided_slice %30 {offsets = [0, 40], sizes = [16, 8], strides = [1, 1]} : vector<16x96xf32> to vector<16x8xf32>
    %62 = vector.extract_strided_slice %30 {offsets = [0, 72], sizes = [16, 8], strides = [1, 1]} : vector<16x96xf32> to vector<16x8xf32>
    %63 = arith.truncf %60 : vector<16x8xf32> to vector<16x8xbf16>
    %64 = arith.truncf %61 : vector<16x8xf32> to vector<16x8xbf16>
    %cst_26 = arith.constant dense<0.000000e+00> : vector<16x16xf32>
    %65 = tpu.matmul %63, %64, %cst_26 {dimension_numbers = #tpu.dot_dimension_numbers<[1], [1], [0], [0], [0, 0, 1, 0], [], []>} : vector<16x8xbf16>, vector<16x8xbf16>, vector<16x16xf32> -> vector<16x16xf32>
    %66 = arith.addf %65, %1 : vector<16x16xf32>
    %cst_27 = arith.constant dense<0xFF800000> : vector<16xf32>
    %67 = vector.multi_reduction <maximumf>, %66, %cst_27 [1] : vector<16x16xf32> to vector<16xf32>
    %68 = vector.shape_cast %67 : vector<16xf32> to vector<16x1xf32>
    %69 = vector.broadcast %68 : vector<16x1xf32> to vector<16x16xf32>
    %70 = arith.subf %66, %69 : vector<16x16xf32>
    %71 = math.exp %70 : vector<16x16xf32>
    %cst_28 = arith.constant dense<0.000000e+00> : vector<16xf32>
    %72 = vector.multi_reduction <add>, %71, %cst_28 [1] : vector<16x16xf32> to vector<16xf32>
    %73 = vector.shape_cast %72 : vector<16xf32> to vector<16x1xf32>
    %74 = vector.broadcast %73 : vector<16x1xf32> to vector<16x16xf32>
    %75 = arith.divf %71, %74 : vector<16x16xf32>
    %76 = arith.truncf %75 : vector<16x16xf32> to vector<16x16xbf16>
    %77 = arith.truncf %62 : vector<16x8xf32> to vector<16x8xbf16>
    %cst_29 = arith.constant dense<0.000000e+00> : vector<16x8xf32>
    %78 = tpu.matmul %76, %77, %cst_29 {dimension_numbers = #tpu.dot_dimension_numbers<[1], [0], [0], [1], [0, 0, 1, 1], [], []>} : vector<16x16xbf16>, vector<16x8xbf16>, vector<16x8xf32> -> vector<16x8xf32>
    %c8 = arith.constant 8 : index
    %c0_30 = arith.constant 0 : index
    %79 = vector.load %arg6[%c8, %c0_30] : memref<32x32xf32, #tpu.memory_space<vmem>>, vector<8x32xf32>
    %80 = arith.truncf %78 : vector<16x8xf32> to vector<16x8xbf16>
    %81 = arith.truncf %79 : vector<8x32xf32> to vector<8x32xbf16>
    %cst_31 = arith.constant dense<0.000000e+00> : vector<16x32xf32>
    %82 = tpu.matmul %80, %81, %cst_31 {dimension_numbers = #tpu.dot_dimension_numbers<[1], [0], [0], [1], [0, 0, 1, 1], [], []>} : vector<16x8xbf16>, vector<8x32xbf16>, vector<16x32xf32> -> vector<16x32xf32>
    %83 = arith.addf %57, %82 : vector<16x32xf32>
    %84 = vector.extract_strided_slice %30 {offsets = [0, 16], sizes = [16, 8], strides = [1, 1]} : vector<16x96xf32> to vector<16x8xf32>
    %cst_32 = arith.constant 0.353553385 : f32
    %85 = vector.broadcast %cst_32 : f32 to vector<16x8xf32>
    %86 = arith.mulf %84, %85 : vector<16x8xf32>
    %87 = vector.extract_strided_slice %30 {offsets = [0, 48], sizes = [16, 8], strides = [1, 1]} : vector<16x96xf32> to vector<16x8xf32>
    %88 = vector.extract_strided_slice %30 {offsets = [0, 80], sizes = [16, 8], strides = [1, 1]} : vector<16x96xf32> to vector<16x8xf32>
    %89 = arith.truncf %86 : vector<16x8xf32> to vector<16x8xbf16>
    %90 = arith.truncf %87 : vector<16x8xf32> to vector<16x8xbf16>
    %cst_33 = arith.constant dense<0.000000e+00> : vector<16x16xf32>
    %91 = tpu.matmul %89, %90, %cst_33 {dimension_numbers = #tpu.dot_dimension_numbers<[1], [1], [0], [0], [0, 0, 1, 0], [], []>} : vector<16x8xbf16>, vector<16x8xbf16>, vector<16x16xf32> -> vector<16x16xf32>
    %92 = arith.addf %91, %1 : vector<16x16xf32>
    %cst_34 = arith.constant dense<0xFF800000> : vector<16xf32>
    %93 = vector.multi_reduction <maximumf>, %92, %cst_34 [1] : vector<16x16xf32> to vector<16xf32>
    %94 = vector.shape_cast %93 : vector<16xf32> to vector<16x1xf32>
    %95 = vector.broadcast %94 : vector<16x1xf32> to vector<16x16xf32>
    %96 = arith.subf %92, %95 : vector<16x16xf32>
    %97 = math.exp %96 : vector<16x16xf32>
    %cst_35 = arith.constant dense<0.000000e+00> : vector<16xf32>
    %98 = vector.multi_reduction <add>, %97, %cst_35 [1] : vector<16x16xf32> to vector<16xf32>
    %99 = vector.shape_cast %98 : vector<16xf32> to vector<16x1xf32>
    %100 = vector.broadcast %99 : vector<16x1xf32> to vector<16x16xf32>
    %101 = arith.divf %97, %100 : vector<16x16xf32>
    %102 = arith.truncf %101 : vector<16x16xf32> to vector<16x16xbf16>
    %103 = arith.truncf %88 : vector<16x8xf32> to vector<16x8xbf16>
    %cst_36 = arith.constant dense<0.000000e+00> : vector<16x8xf32>
    %104 = tpu.matmul %102, %103, %cst_36 {dimension_numbers = #tpu.dot_dimension_numbers<[1], [0], [0], [1], [0, 0, 1, 1], [], []>} : vector<16x16xbf16>, vector<16x8xbf16>, vector<16x8xf32> -> vector<16x8xf32>
    %c16 = arith.constant 16 : index
    %c0_37 = arith.constant 0 : index
    %105 = vector.load %arg6[%c16, %c0_37] : memref<32x32xf32, #tpu.memory_space<vmem>>, vector<8x32xf32>
    %106 = arith.truncf %104 : vector<16x8xf32> to vector<16x8xbf16>
    %107 = arith.truncf %105 : vector<8x32xf32> to vector<8x32xbf16>
    %cst_38 = arith.constant dense<0.000000e+00> : vector<16x32xf32>
    %108 = tpu.matmul %106, %107, %cst_38 {dimension_numbers = #tpu.dot_dimension_numbers<[1], [0], [0], [1], [0, 0, 1, 1], [], []>} : vector<16x8xbf16>, vector<8x32xbf16>, vector<16x32xf32> -> vector<16x32xf32>
    %109 = arith.addf %83, %108 : vector<16x32xf32>
    %110 = vector.extract_strided_slice %30 {offsets = [0, 24], sizes = [16, 8], strides = [1, 1]} : vector<16x96xf32> to vector<16x8xf32>
    %cst_39 = arith.constant 0.353553385 : f32
    %111 = vector.broadcast %cst_39 : f32 to vector<16x8xf32>
    %112 = arith.mulf %110, %111 : vector<16x8xf32>
    %113 = vector.extract_strided_slice %30 {offsets = [0, 56], sizes = [16, 8], strides = [1, 1]} : vector<16x96xf32> to vector<16x8xf32>
    %114 = vector.extract_strided_slice %30 {offsets = [0, 88], sizes = [16, 8], strides = [1, 1]} : vector<16x96xf32> to vector<16x8xf32>
    %115 = arith.truncf %112 : vector<16x8xf32> to vector<16x8xbf16>
    %116 = arith.truncf %113 : vector<16x8xf32> to vector<16x8xbf16>
    %cst_40 = arith.constant dense<0.000000e+00> : vector<16x16xf32>
    %117 = tpu.matmul %115, %116, %cst_40 {dimension_numbers = #tpu.dot_dimension_numbers<[1], [1], [0], [0], [0, 0, 1, 0], [], []>} : vector<16x8xbf16>, vector<16x8xbf16>, vector<16x16xf32> -> vector<16x16xf32>
    %118 = arith.addf %117, %1 : vector<16x16xf32>
    %cst_41 = arith.constant dense<0xFF800000> : vector<16xf32>
    %119 = vector.multi_reduction <maximumf>, %118, %cst_41 [1] : vector<16x16xf32> to vector<16xf32>
    %120 = vector.shape_cast %119 : vector<16xf32> to vector<16x1xf32>
    %121 = vector.broadcast %120 : vector<16x1xf32> to vector<16x16xf32>
    %122 = arith.subf %118, %121 : vector<16x16xf32>
    %123 = math.exp %122 : vector<16x16xf32>
    %cst_42 = arith.constant dense<0.000000e+00> : vector<16xf32>
    %124 = vector.multi_reduction <add>, %123, %cst_42 [1] : vector<16x16xf32> to vector<16xf32>
    %125 = vector.shape_cast %124 : vector<16xf32> to vector<16x1xf32>
    %126 = vector.broadcast %125 : vector<16x1xf32> to vector<16x16xf32>
    %127 = arith.divf %123, %126 : vector<16x16xf32>
    %128 = arith.truncf %127 : vector<16x16xf32> to vector<16x16xbf16>
    %129 = arith.truncf %114 : vector<16x8xf32> to vector<16x8xbf16>
    %cst_43 = arith.constant dense<0.000000e+00> : vector<16x8xf32>
    %130 = tpu.matmul %128, %129, %cst_43 {dimension_numbers = #tpu.dot_dimension_numbers<[1], [0], [0], [1], [0, 0, 1, 1], [], []>} : vector<16x16xbf16>, vector<16x8xbf16>, vector<16x8xf32> -> vector<16x8xf32>
    %c24 = arith.constant 24 : index
    %c0_44 = arith.constant 0 : index
    %131 = vector.load %arg6[%c24, %c0_44] : memref<32x32xf32, #tpu.memory_space<vmem>>, vector<8x32xf32>
    %132 = arith.truncf %130 : vector<16x8xf32> to vector<16x8xbf16>
    %133 = arith.truncf %131 : vector<8x32xf32> to vector<8x32xbf16>
    %cst_45 = arith.constant dense<0.000000e+00> : vector<16x32xf32>
    %134 = tpu.matmul %132, %133, %cst_45 {dimension_numbers = #tpu.dot_dimension_numbers<[1], [0], [0], [1], [0, 0, 1, 1], [], []>} : vector<16x8xbf16>, vector<8x32xbf16>, vector<16x32xf32> -> vector<16x32xf32>
    %135 = arith.addf %109, %134 : vector<16x32xf32>
    %136 = arith.addf %0, %135 : vector<16x32xf32>
    %c0_46 = arith.constant 0 : index
    %c0_47 = arith.constant 0 : index
    %137 = vector.load %arg7[%c0_46, %c0_47] : memref<1x32xf32, #tpu.memory_space<vmem>>, vector<1x32xf32>
    %138 = vector.broadcast %137 : vector<1x32xf32> to vector<16x32xf32>
    %139 = arith.addf %136, %138 : vector<16x32xf32>
    %c0_48 = arith.constant 0 : index
    %c0_49 = arith.constant 0 : index
    %140 = vector.load %arg8[%c0_48, %c0_49] : memref<1x32xf32, #tpu.memory_space<vmem>>, vector<1x32xf32>
    %c0_50 = arith.constant 0 : index
    %c0_51 = arith.constant 0 : index
    %141 = vector.load %arg9[%c0_50, %c0_51] : memref<1x32xf32, #tpu.memory_space<vmem>>, vector<1x32xf32>
    %cst_52 = arith.constant dense<0.000000e+00> : vector<16xf32>
    %142 = vector.multi_reduction <add>, %139, %cst_52 [1] : vector<16x32xf32> to vector<16xf32>
    %143 = vector.shape_cast %142 : vector<16xf32> to vector<16x1xf32>
    %cst_53 = arith.constant 3.200000e+01 : f32
    %144 = vector.broadcast %cst_53 : f32 to vector<16x1xf32>
    %145 = arith.divf %143, %144 : vector<16x1xf32>
    %146 = vector.broadcast %145 : vector<16x1xf32> to vector<16x32xf32>
    %147 = arith.subf %139, %146 : vector<16x32xf32>
    %148 = arith.mulf %147, %147 : vector<16x32xf32>
    %cst_54 = arith.constant dense<0.000000e+00> : vector<16xf32>
    %149 = vector.multi_reduction <add>, %148, %cst_54 [1] : vector<16x32xf32> to vector<16xf32>
    %150 = vector.shape_cast %149 : vector<16xf32> to vector<16x1xf32>
    %cst_55 = arith.constant 3.200000e+01 : f32
    %151 = vector.broadcast %cst_55 : f32 to vector<16x1xf32>
    %152 = arith.divf %150, %151 : vector<16x1xf32>
    %cst_56 = arith.constant 9.99999974E-6 : f32
    %153 = vector.broadcast %cst_56 : f32 to vector<16x1xf32>
    %154 = arith.addf %152, %153 : vector<16x1xf32>
    %155 = math.rsqrt %154 : vector<16x1xf32>
    %156 = vector.broadcast %155 : vector<16x1xf32> to vector<16x32xf32>
    %157 = arith.mulf %147, %156 : vector<16x32xf32>
    %158 = vector.broadcast %140 : vector<1x32xf32> to vector<16x32xf32>
    %159 = arith.mulf %157, %158 : vector<16x32xf32>
    %160 = vector.broadcast %141 : vector<1x32xf32> to vector<16x32xf32>
    %161 = arith.addf %159, %160 : vector<16x32xf32>
    %c0_57 = arith.constant 0 : index
    %c0_58 = arith.constant 0 : index
    %162 = vector.load %arg10[%c0_57, %c0_58] : memref<32x128xf32, #tpu.memory_space<vmem>>, vector<32x128xf32>
    %163 = arith.truncf %161 : vector<16x32xf32> to vector<16x32xbf16>
    %164 = arith.truncf %162 : vector<32x128xf32> to vector<32x128xbf16>
    %cst_59 = arith.constant dense<0.000000e+00> : vector<16x128xf32>
    %165 = tpu.matmul %163, %164, %cst_59 {dimension_numbers = #tpu.dot_dimension_numbers<[1], [0], [0], [1], [0, 0, 1, 1], [], []>} : vector<16x32xbf16>, vector<32x128xbf16>, vector<16x128xf32> -> vector<16x128xf32>
    %c0_60 = arith.constant 0 : index
    %c0_61 = arith.constant 0 : index
    %166 = vector.load %arg11[%c0_60, %c0_61] : memref<1x128xf32, #tpu.memory_space<vmem>>, vector<1x128xf32>
    %167 = vector.broadcast %166 : vector<1x128xf32> to vector<16x128xf32>
    %168 = arith.addf %165, %167 : vector<16x128xf32>
    %cst_62 = arith.constant 1.702000e+00 : f32
    %169 = vector.broadcast %cst_62 : f32 to vector<16x128xf32>
    %170 = arith.mulf %169, %168 : vector<16x128xf32>
    %171 = arith.negf %170 : vector<16x128xf32>
    %172 = math.exp %171 : vector<16x128xf32>
    %cst_63 = arith.constant 1.000000e+00 : f32
    %173 = vector.broadcast %cst_63 : f32 to vector<16x128xf32>
    %174 = arith.addf %173, %172 : vector<16x128xf32>
    %175 = arith.divf %173, %174 : vector<16x128xf32>
    %176 = arith.mulf %168, %175 : vector<16x128xf32>
    %c0_64 = arith.constant 0 : index
    %c0_65 = arith.constant 0 : index
    %177 = vector.load %arg12[%c0_64, %c0_65] : memref<128x32xf32, #tpu.memory_space<vmem>>, vector<128x32xf32>
    %178 = arith.truncf %176 : vector<16x128xf32> to vector<16x128xbf16>
    %179 = arith.truncf %177 : vector<128x32xf32> to vector<128x32xbf16>
    %cst_66 = arith.constant dense<0.000000e+00> : vector<16x32xf32>
    %180 = tpu.matmul %178, %179, %cst_66 {dimension_numbers = #tpu.dot_dimension_numbers<[1], [0], [0], [1], [0, 0, 1, 1], [], []>} : vector<16x128xbf16>, vector<128x32xbf16>, vector<16x32xf32> -> vector<16x32xf32>
    %c0_67 = arith.constant 0 : index
    %c0_68 = arith.constant 0 : index
    %181 = vector.load %arg13[%c0_67, %c0_68] : memref<1x32xf32, #tpu.memory_space<vmem>>, vector<1x32xf32>
    %182 = vector.broadcast %181 : vector<1x32xf32> to vector<16x32xf32>
    %183 = arith.addf %180, %182 : vector<16x32xf32>
    %184 = arith.addf %139, %183 : vector<16x32xf32>
    %c0_69 = arith.constant 0 : index
    %c0_70 = arith.constant 0 : index
    %185 = vector.load %arg14[%c0_69, %c0_70] : memref<16x32xf32, #tpu.memory_space<vmem>>, vector<16x32xf32>
    tpu.vector_store %arg14[%c0_69, %c0_70], %184 {strides = array<i32>} : memref<16x32xf32, #tpu.memory_space<vmem>>, vector<16x32xf32>,
    return
  }
}

module attributes {stable_mosaic.version = 11 : i64} {
  func.func @_ln_proj_kernel(%arg0: memref<2x32xf32, #tpu.memory_space<vmem>>, %arg1: memref<1x32xf32, #tpu.memory_space<vmem>>, %arg2: memref<1x32xf32, #tpu.memory_space<vmem>>, %arg3: memref<32x32xf32, #tpu.memory_space<vmem>>, %arg4: memref<2x32xf32, #tpu.memory_space<vmem>>) attributes {dimension_semantics = [], scalar_prefetch = 0 : i64, scratch_operands = 0 : i64, tpu.core_type = #tpu.core_type<tc>} {
    %c0 = arith.constant 0 : index
    %c0_0 = arith.constant 0 : index
    %0 = vector.load %arg0[%c0, %c0_0] : memref<2x32xf32, #tpu.memory_space<vmem>>, vector<2x32xf32>
    %c0_1 = arith.constant 0 : index
    %c0_2 = arith.constant 0 : index
    %1 = vector.load %arg1[%c0_1, %c0_2] : memref<1x32xf32, #tpu.memory_space<vmem>>, vector<1x32xf32>
    %c0_3 = arith.constant 0 : index
    %c0_4 = arith.constant 0 : index
    %2 = vector.load %arg2[%c0_3, %c0_4] : memref<1x32xf32, #tpu.memory_space<vmem>>, vector<1x32xf32>
    %cst = arith.constant dense<0.000000e+00> : vector<2xf32>
    %3 = vector.multi_reduction <add>, %0, %cst [1] : vector<2x32xf32> to vector<2xf32>
    %4 = vector.shape_cast %3 : vector<2xf32> to vector<2x1xf32>
    %cst_5 = arith.constant 3.200000e+01 : f32
    %5 = vector.broadcast %cst_5 : f32 to vector<2x1xf32>
    %6 = arith.divf %4, %5 : vector<2x1xf32>
    %7 = vector.broadcast %6 : vector<2x1xf32> to vector<2x32xf32>
    %8 = arith.subf %0, %7 : vector<2x32xf32>
    %9 = arith.mulf %8, %8 : vector<2x32xf32>
    %cst_6 = arith.constant dense<0.000000e+00> : vector<2xf32>
    %10 = vector.multi_reduction <add>, %9, %cst_6 [1] : vector<2x32xf32> to vector<2xf32>
    %11 = vector.shape_cast %10 : vector<2xf32> to vector<2x1xf32>
    %cst_7 = arith.constant 3.200000e+01 : f32
    %12 = vector.broadcast %cst_7 : f32 to vector<2x1xf32>
    %13 = arith.divf %11, %12 : vector<2x1xf32>
    %cst_8 = arith.constant 9.99999974E-6 : f32
    %14 = vector.broadcast %cst_8 : f32 to vector<2x1xf32>
    %15 = arith.addf %13, %14 : vector<2x1xf32>
    %16 = math.rsqrt %15 : vector<2x1xf32>
    %17 = vector.broadcast %16 : vector<2x1xf32> to vector<2x32xf32>
    %18 = arith.mulf %8, %17 : vector<2x32xf32>
    %19 = vector.broadcast %1 : vector<1x32xf32> to vector<2x32xf32>
    %20 = arith.mulf %18, %19 : vector<2x32xf32>
    %21 = vector.broadcast %2 : vector<1x32xf32> to vector<2x32xf32>
    %22 = arith.addf %20, %21 : vector<2x32xf32>
    %c0_9 = arith.constant 0 : index
    %c0_10 = arith.constant 0 : index
    %23 = vector.load %arg3[%c0_9, %c0_10] : memref<32x32xf32, #tpu.memory_space<vmem>>, vector<32x32xf32>
    %24 = arith.truncf %22 : vector<2x32xf32> to vector<2x32xbf16>
    %25 = arith.truncf %23 : vector<32x32xf32> to vector<32x32xbf16>
    %cst_11 = arith.constant dense<0.000000e+00> : vector<2x32xf32>
    %26 = tpu.matmul %24, %25, %cst_11 {dimension_numbers = #tpu.dot_dimension_numbers<[1], [0], [0], [1], [0, 0, 1, 1], [], []>} : vector<2x32xbf16>, vector<32x32xbf16>, vector<2x32xf32> -> vector<2x32xf32>
    %c0_12 = arith.constant 0 : index
    %c0_13 = arith.constant 0 : index
    %27 = vector.load %arg4[%c0_12, %c0_13] : memref<2x32xf32, #tpu.memory_space<vmem>>, vector<2x32xf32>
    tpu.vector_store %arg4[%c0_12, %c0_13], %26 {strides = array<i32>} : memref<2x32xf32, #tpu.memory_space<vmem>>, vector<2x32xf32>,
    return
  }
}

module attributes {stable_mosaic.version = 11 : i64} {
  func.func @_matmul_kernel(%arg0: memref<16x192xf32, #tpu.memory_space<vmem>>, %arg1: memref<192x64xf32, #tpu.memory_space<vmem>>, %arg2: memref<16x64xf32, #tpu.memory_space<vmem>>) attributes {dimension_semantics = [], scalar_prefetch = 0 : i64, scratch_operands = 0 : i64, tpu.core_type = #tpu.core_type<tc>} {
    %c0 = arith.constant 0 : index
    %c0_0 = arith.constant 0 : index
    %0 = vector.load %arg0[%c0, %c0_0] : memref<16x192xf32, #tpu.memory_space<vmem>>, vector<16x192xf32>
    %c0_1 = arith.constant 0 : index
    %c0_2 = arith.constant 0 : index
    %1 = vector.load %arg1[%c0_1, %c0_2] : memref<192x64xf32, #tpu.memory_space<vmem>>, vector<192x64xf32>
    %2 = arith.truncf %0 : vector<16x192xf32> to vector<16x192xbf16>
    %3 = arith.truncf %1 : vector<192x64xf32> to vector<192x64xbf16>
    %cst = arith.constant dense<0.000000e+00> : vector<16x64xf32>
    %4 = tpu.matmul %2, %3, %cst {dimension_numbers = #tpu.dot_dimension_numbers<[1], [0], [0], [1], [0, 0, 1, 1], [], []>} : vector<16x192xbf16>, vector<192x64xbf16>, vector<16x64xf32> -> vector<16x64xf32>
    %c0_3 = arith.constant 0 : index
    %c0_4 = arith.constant 0 : index
    %5 = vector.load %arg2[%c0_3, %c0_4] : memref<16x64xf32, #tpu.memory_space<vmem>>, vector<16x64xf32>
    tpu.vector_store %arg2[%c0_3, %c0_4], %4 {strides = array<i32>} : memref<16x64xf32, #tpu.memory_space<vmem>>, vector<16x64xf32>,
    return
  }
}

module attributes {stable_mosaic.version = 11 : i64} {
  func.func @_batched_proj_kernel(%arg0: memref<12x4x64xf32, #tpu.memory_space<vmem>>, %arg1: memref<12x64x64xf32, #tpu.memory_space<vmem>>, %arg2: memref<12x1x64xf32, #tpu.memory_space<vmem>>, %arg3: memref<12x4x64xf32, #tpu.memory_space<vmem>>) attributes {dimension_semantics = [], scalar_prefetch = 0 : i64, scratch_operands = 0 : i64, tpu.core_type = #tpu.core_type<tc>} {
    %c0 = arith.constant 0 : index
    %c0_0 = arith.constant 0 : index
    %c0_1 = arith.constant 0 : index
    %0 = vector.load %arg0[%c0, %c0_0, %c0_1] : memref<12x4x64xf32, #tpu.memory_space<vmem>>, vector<12x4x64xf32>
    %1 = arith.truncf %0 : vector<12x4x64xf32> to vector<12x4x64xbf16>
    %c0_2 = arith.constant 0 : index
    %c0_3 = arith.constant 0 : index
    %c0_4 = arith.constant 0 : index
    %2 = vector.load %arg1[%c0_2, %c0_3, %c0_4] : memref<12x64x64xf32, #tpu.memory_space<vmem>>, vector<12x64x64xf32>
    %3 = arith.truncf %2 : vector<12x64x64xf32> to vector<12x64x64xbf16>
    "tpu.trace_start"() <{level = 10 : i32, message = "ncd,ndk->nck"}> : () -> ()
    %cst = arith.constant dense<0.000000e+00> : vector<12x4x64xf32>
    %4 = tpu.matmul %1, %3, %cst {dimension_numbers = #tpu.dot_dimension_numbers<[2], [1], [1], [2], [0, 0, 0, 1, 1, 2], [0], [0]>} : vector<12x4x64xbf16>, vector<12x64x64xbf16>, vector<12x4x64xf32> -> vector<12x4x64xf32>
    "tpu.trace_stop"() : () -> ()
    %c0_5 = arith.constant 0 : index
    %c0_6 = arith.constant 0 : index
    %c0_7 = arith.constant 0 : index
    %5 = vector.load %arg2[%c0_5, %c0_6, %c0_7] : memref<12x1x64xf32, #tpu.memory_space<vmem>>, vector<12x1x64xf32>
    %6 = vector.broadcast %5 : vector<12x1x64xf32> to vector<12x4x64xf32>
    %7 = arith.addf %4, %6 : vector<12x4x64xf32>
    %c0_8 = arith.constant 0 : index
    %c0_9 = arith.constant 0 : index
    %c0_10 = arith.constant 0 : index
    %8 = vector.load %arg3[%c0_8, %c0_9, %c0_10] : memref<12x4x64xf32, #tpu.memory_space<vmem>>, vector<12x4x64xf32>
    tpu.vector_store %arg3[%c0_8, %c0_9, %c0_10], %7 {strides = array<i32>} : memref<12x4x64xf32, #tpu.memory_space<vmem>>, vector<12x4x64xf32>,
    return
  }
}

module attributes {stable_mosaic.version = 11 : i64} {
  func.func @_layernorm_kernel(%arg0: memref<18x64xf32, #tpu.memory_space<vmem>>, %arg1: memref<1x64xf32, #tpu.memory_space<vmem>>, %arg2: memref<1x64xf32, #tpu.memory_space<vmem>>, %arg3: memref<18x64xf32, #tpu.memory_space<vmem>>) attributes {dimension_semantics = [], scalar_prefetch = 0 : i64, scratch_operands = 0 : i64, tpu.core_type = #tpu.core_type<tc>} {
    %c0 = arith.constant 0 : index
    %c0_0 = arith.constant 0 : index
    %0 = vector.load %arg0[%c0, %c0_0] : memref<18x64xf32, #tpu.memory_space<vmem>>, vector<18x64xf32>
    %c0_1 = arith.constant 0 : index
    %c0_2 = arith.constant 0 : index
    %1 = vector.load %arg1[%c0_1, %c0_2] : memref<1x64xf32, #tpu.memory_space<vmem>>, vector<1x64xf32>
    %c0_3 = arith.constant 0 : index
    %c0_4 = arith.constant 0 : index
    %2 = vector.load %arg2[%c0_3, %c0_4] : memref<1x64xf32, #tpu.memory_space<vmem>>, vector<1x64xf32>
    %cst = arith.constant dense<0.000000e+00> : vector<18xf32>
    %3 = vector.multi_reduction <add>, %0, %cst [1] : vector<18x64xf32> to vector<18xf32>
    %4 = vector.shape_cast %3 : vector<18xf32> to vector<18x1xf32>
    %cst_5 = arith.constant 6.400000e+01 : f32
    %5 = vector.broadcast %cst_5 : f32 to vector<18x1xf32>
    %6 = arith.divf %4, %5 : vector<18x1xf32>
    %7 = vector.broadcast %6 : vector<18x1xf32> to vector<18x64xf32>
    %8 = arith.subf %0, %7 : vector<18x64xf32>
    %9 = arith.mulf %8, %8 : vector<18x64xf32>
    %cst_6 = arith.constant dense<0.000000e+00> : vector<18xf32>
    %10 = vector.multi_reduction <add>, %9, %cst_6 [1] : vector<18x64xf32> to vector<18xf32>
    %11 = vector.shape_cast %10 : vector<18xf32> to vector<18x1xf32>
    %cst_7 = arith.constant 6.400000e+01 : f32
    %12 = vector.broadcast %cst_7 : f32 to vector<18x1xf32>
    %13 = arith.divf %11, %12 : vector<18x1xf32>
    %cst_8 = arith.constant 9.99999974E-6 : f32
    %14 = vector.broadcast %cst_8 : f32 to vector<18x1xf32>
    %15 = arith.addf %13, %14 : vector<18x1xf32>
    %16 = math.rsqrt %15 : vector<18x1xf32>
    %17 = vector.broadcast %16 : vector<18x1xf32> to vector<18x64xf32>
    %18 = arith.mulf %8, %17 : vector<18x64xf32>
    %19 = vector.broadcast %1 : vector<1x64xf32> to vector<18x64xf32>
    %20 = arith.mulf %18, %19 : vector<18x64xf32>
    %21 = vector.broadcast %2 : vector<1x64xf32> to vector<18x64xf32>
    %22 = arith.addf %20, %21 : vector<18x64xf32>
    %c0_9 = arith.constant 0 : index
    %c0_10 = arith.constant 0 : index
    %23 = vector.load %arg3[%c0_9, %c0_10] : memref<18x64xf32, #tpu.memory_space<vmem>>, vector<18x64xf32>
    tpu.vector_store %arg3[%c0_9, %c0_10], %22 {strides = array<i32>} : memref<18x64xf32, #tpu.memory_space<vmem>>, vector<18x64xf32>,
    return
  }
}

module attributes {stable_mosaic.version = 11 : i64} {
  func.func @_block_kernel(%arg0: memref<26x64xf32, #tpu.memory_space<vmem>>, %arg1: memref<26x26xf32, #tpu.memory_space<vmem>>, %arg2: memref<1x64xf32, #tpu.memory_space<vmem>>, %arg3: memref<1x64xf32, #tpu.memory_space<vmem>>, %arg4: memref<64x192xf32, #tpu.memory_space<vmem>>, %arg5: memref<1x192xf32, #tpu.memory_space<vmem>>, %arg6: memref<64x64xf32, #tpu.memory_space<vmem>>, %arg7: memref<1x64xf32, #tpu.memory_space<vmem>>, %arg8: memref<1x64xf32, #tpu.memory_space<vmem>>, %arg9: memref<1x64xf32, #tpu.memory_space<vmem>>, %arg10: memref<64x256xf32, #tpu.memory_space<vmem>>, %arg11: memref<1x256xf32, #tpu.memory_space<vmem>>, %arg12: memref<256x64xf32, #tpu.memory_space<vmem>>, %arg13: memref<1x64xf32, #tpu.memory_space<vmem>>, %arg14: memref<26x64xf32, #tpu.memory_space<vmem>>) attributes {dimension_semantics = [], scalar_prefetch = 0 : i64, scratch_operands = 0 : i64, tpu.core_type = #tpu.core_type<tc>} {
    %c0 = arith.constant 0 : index
    %c0_0 = arith.constant 0 : index
    %0 = vector.load %arg0[%c0, %c0_0] : memref<26x64xf32, #tpu.memory_space<vmem>>, vector<26x64xf32>
    %c0_1 = arith.constant 0 : index
    %c0_2 = arith.constant 0 : index
    %1 = vector.load %arg1[%c0_1, %c0_2] : memref<26x26xf32, #tpu.memory_space<vmem>>, vector<26x26xf32>
    %c0_3 = arith.constant 0 : index
    %c0_4 = arith.constant 0 : index
    %2 = vector.load %arg2[%c0_3, %c0_4] : memref<1x64xf32, #tpu.memory_space<vmem>>, vector<1x64xf32>
    %c0_5 = arith.constant 0 : index
    %c0_6 = arith.constant 0 : index
    %3 = vector.load %arg3[%c0_5, %c0_6] : memref<1x64xf32, #tpu.memory_space<vmem>>, vector<1x64xf32>
    %cst = arith.constant dense<0.000000e+00> : vector<26xf32>
    %4 = vector.multi_reduction <add>, %0, %cst [1] : vector<26x64xf32> to vector<26xf32>
    %5 = vector.shape_cast %4 : vector<26xf32> to vector<26x1xf32>
    %cst_7 = arith.constant 6.400000e+01 : f32
    %6 = vector.broadcast %cst_7 : f32 to vector<26x1xf32>
    %7 = arith.divf %5, %6 : vector<26x1xf32>
    %8 = vector.broadcast %7 : vector<26x1xf32> to vector<26x64xf32>
    %9 = arith.subf %0, %8 : vector<26x64xf32>
    %10 = arith.mulf %9, %9 : vector<26x64xf32>
    %cst_8 = arith.constant dense<0.000000e+00> : vector<26xf32>
    %11 = vector.multi_reduction <add>, %10, %cst_8 [1] : vector<26x64xf32> to vector<26xf32>
    %12 = vector.shape_cast %11 : vector<26xf32> to vector<26x1xf32>
    %cst_9 = arith.constant 6.400000e+01 : f32
    %13 = vector.broadcast %cst_9 : f32 to vector<26x1xf32>
    %14 = arith.divf %12, %13 : vector<26x1xf32>
    %cst_10 = arith.constant 9.99999974E-6 : f32
    %15 = vector.broadcast %cst_10 : f32 to vector<26x1xf32>
    %16 = arith.addf %14, %15 : vector<26x1xf32>
    %17 = math.rsqrt %16 : vector<26x1xf32>
    %18 = vector.broadcast %17 : vector<26x1xf32> to vector<26x64xf32>
    %19 = arith.mulf %9, %18 : vector<26x64xf32>
    %20 = vector.broadcast %2 : vector<1x64xf32> to vector<26x64xf32>
    %21 = arith.mulf %19, %20 : vector<26x64xf32>
    %22 = vector.broadcast %3 : vector<1x64xf32> to vector<26x64xf32>
    %23 = arith.addf %21, %22 : vector<26x64xf32>
    %c0_11 = arith.constant 0 : index
    %c0_12 = arith.constant 0 : index
    %24 = vector.load %arg4[%c0_11, %c0_12] : memref<64x192xf32, #tpu.memory_space<vmem>>, vector<64x192xf32>
    %25 = arith.truncf %23 : vector<26x64xf32> to vector<26x64xbf16>
    %26 = arith.truncf %24 : vector<64x192xf32> to vector<64x192xbf16>
    %cst_13 = arith.constant dense<0.000000e+00> : vector<26x192xf32>
    %27 = tpu.matmul %25, %26, %cst_13 {dimension_numbers = #tpu.dot_dimension_numbers<[1], [0], [0], [1], [0, 0, 1, 1], [], []>} : vector<26x64xbf16>, vector<64x192xbf16>, vector<26x192xf32> -> vector<26x192xf32>
    %c0_14 = arith.constant 0 : index
    %c0_15 = arith.constant 0 : index
    %28 = vector.load %arg5[%c0_14, %c0_15] : memref<1x192xf32, #tpu.memory_space<vmem>>, vector<1x192xf32>
    %29 = vector.broadcast %28 : vector<1x192xf32> to vector<26x192xf32>
    %30 = arith.addf %27, %29 : vector<26x192xf32>
    %cst_16 = arith.constant 0.000000e+00 : f32
    %31 = vector.broadcast %cst_16 : f32 to vector<26x64xf32>
    %32 = vector.extract_strided_slice %30 {offsets = [0, 0], sizes = [26, 16], strides = [1, 1]} : vector<26x192xf32> to vector<26x16xf32>
    %cst_17 = arith.constant 2.500000e-01 : f32
    %33 = vector.broadcast %cst_17 : f32 to vector<26x16xf32>
    %34 = arith.mulf %32, %33 : vector<26x16xf32>
    %35 = vector.extract_strided_slice %30 {offsets = [0, 64], sizes = [26, 16], strides = [1, 1]} : vector<26x192xf32> to vector<26x16xf32>
    %36 = vector.extract_strided_slice %30 {offsets = [0, 128], sizes = [26, 16], strides = [1, 1]} : vector<26x192xf32> to vector<26x16xf32>
    %37 = arith.truncf %34 : vector<26x16xf32> to vector<26x16xbf16>
    %38 = arith.truncf %35 : vector<26x16xf32> to vector<26x16xbf16>
    %cst_18 = arith.constant dense<0.000000e+00> : vector<26x26xf32>
    %39 = tpu.matmul %37, %38, %cst_18 {dimension_numbers = #tpu.dot_dimension_numbers<[1], [1], [0], [0], [0, 0, 1, 0], [], []>} : vector<26x16xbf16>, vector<26x16xbf16>, vector<26x26xf32> -> vector<26x26xf32>
    %40 = arith.addf %39, %1 : vector<26x26xf32>
    %cst_19 = arith.constant dense<0xFF800000> : vector<26xf32>
    %41 = vector.multi_reduction <maximumf>, %40, %cst_19 [1] : vector<26x26xf32> to vector<26xf32>
    %42 = vector.shape_cast %41 : vector<26xf32> to vector<26x1xf32>
    %43 = vector.broadcast %42 : vector<26x1xf32> to vector<26x26xf32>
    %44 = arith.subf %40, %43 : vector<26x26xf32>
    %45 = math.exp %44 : vector<26x26xf32>
    %cst_20 = arith.constant dense<0.000000e+00> : vector<26xf32>
    %46 = vector.multi_reduction <add>, %45, %cst_20 [1] : vector<26x26xf32> to vector<26xf32>
    %47 = vector.shape_cast %46 : vector<26xf32> to vector<26x1xf32>
    %48 = vector.broadcast %47 : vector<26x1xf32> to vector<26x26xf32>
    %49 = arith.divf %45, %48 : vector<26x26xf32>
    %50 = arith.truncf %49 : vector<26x26xf32> to vector<26x26xbf16>
    %51 = arith.truncf %36 : vector<26x16xf32> to vector<26x16xbf16>
    %cst_21 = arith.constant dense<0.000000e+00> : vector<26x16xf32>
    %52 = tpu.matmul %50, %51, %cst_21 {dimension_numbers = #tpu.dot_dimension_numbers<[1], [0], [0], [1], [0, 0, 1, 1], [], []>} : vector<26x26xbf16>, vector<26x16xbf16>, vector<26x16xf32> -> vector<26x16xf32>
    %c0_22 = arith.constant 0 : index
    %c0_23 = arith.constant 0 : index
    %53 = vector.load %arg6[%c0_22, %c0_23] : memref<64x64xf32, #tpu.memory_space<vmem>>, vector<16x64xf32>
    %54 = arith.truncf %52 : vector<26x16xf32> to vector<26x16xbf16>
    %55 = arith.truncf %53 : vector<16x64xf32> to vector<16x64xbf16>
    %cst_24 = arith.constant dense<0.000000e+00> : vector<26x64xf32>
    %56 = tpu.matmul %54, %55, %cst_24 {dimension_numbers = #tpu.dot_dimension_numbers<[1], [0], [0], [1], [0, 0, 1, 1], [], []>} : vector<26x16xbf16>, vector<16x64xbf16>, vector<26x64xf32> -> vector<26x64xf32>
    %57 = arith.addf %31, %56 : vector<26x64xf32>
    %58 = vector.extract_strided_slice %30 {offsets = [0, 16], sizes = [26, 16], strides = [1, 1]} : vector<26x192xf32> to vector<26x16xf32>
    %cst_25 = arith.constant 2.500000e-01 : f32
    %59 = vector.broadcast %cst_25 : f32 to vector<26x16xf32>
    %60 = arith.mulf %58, %59 : vector<26x16xf32>
    %61 = vector.extract_strided_slice %30 {offsets = [0, 80], sizes = [26, 16], strides = [1, 1]} : vector<26x192xf32> to vector<26x16xf32>
    %62 = vector.extract_strided_slice %30 {offsets = [0, 144], sizes = [26, 16], strides = [1, 1]} : vector<26x192xf32> to vector<26x16xf32>
    %63 = arith.truncf %60 : vector<26x16xf32> to vector<26x16xbf16>
    %64 = arith.truncf %61 : vector<26x16xf32> to vector<26x16xbf16>
    %cst_26 = arith.constant dense<0.000000e+00> : vector<26x26xf32>
    %65 = tpu.matmul %63, %64, %cst_26 {dimension_numbers = #tpu.dot_dimension_numbers<[1], [1], [0], [0], [0, 0, 1, 0], [], []>} : vector<26x16xbf16>, vector<26x16xbf16>, vector<26x26xf32> -> vector<26x26xf32>
    %66 = arith.addf %65, %1 : vector<26x26xf32>
    %cst_27 = arith.constant dense<0xFF800000> : vector<26xf32>
    %67 = vector.multi_reduction <maximumf>, %66, %cst_27 [1] : vector<26x26xf32> to vector<26xf32>
    %68 = vector.shape_cast %67 : vector<26xf32> to vector<26x1xf32>
    %69 = vector.broadcast %68 : vector<26x1xf32> to vector<26x26xf32>
    %70 = arith.subf %66, %69 : vector<26x26xf32>
    %71 = math.exp %70 : vector<26x26xf32>
    %cst_28 = arith.constant dense<0.000000e+00> : vector<26xf32>
    %72 = vector.multi_reduction <add>, %71, %cst_28 [1] : vector<26x26xf32> to vector<26xf32>
    %73 = vector.shape_cast %72 : vector<26xf32> to vector<26x1xf32>
    %74 = vector.broadcast %73 : vector<26x1xf32> to vector<26x26xf32>
    %75 = arith.divf %71, %74 : vector<26x26xf32>
    %76 = arith.truncf %75 : vector<26x26xf32> to vector<26x26xbf16>
    %77 = arith.truncf %62 : vector<26x16xf32> to vector<26x16xbf16>
    %cst_29 = arith.constant dense<0.000000e+00> : vector<26x16xf32>
    %78 = tpu.matmul %76, %77, %cst_29 {dimension_numbers = #tpu.dot_dimension_numbers<[1], [0], [0], [1], [0, 0, 1, 1], [], []>} : vector<26x26xbf16>, vector<26x16xbf16>, vector<26x16xf32> -> vector<26x16xf32>
    %c16 = arith.constant 16 : index
    %c0_30 = arith.constant 0 : index
    %79 = vector.load %arg6[%c16, %c0_30] : memref<64x64xf32, #tpu.memory_space<vmem>>, vector<16x64xf32>
    %80 = arith.truncf %78 : vector<26x16xf32> to vector<26x16xbf16>
    %81 = arith.truncf %79 : vector<16x64xf32> to vector<16x64xbf16>
    %cst_31 = arith.constant dense<0.000000e+00> : vector<26x64xf32>
    %82 = tpu.matmul %80, %81, %cst_31 {dimension_numbers = #tpu.dot_dimension_numbers<[1], [0], [0], [1], [0, 0, 1, 1], [], []>} : vector<26x16xbf16>, vector<16x64xbf16>, vector<26x64xf32> -> vector<26x64xf32>
    %83 = arith.addf %57, %82 : vector<26x64xf32>
    %84 = vector.extract_strided_slice %30 {offsets = [0, 32], sizes = [26, 16], strides = [1, 1]} : vector<26x192xf32> to vector<26x16xf32>
    %cst_32 = arith.constant 2.500000e-01 : f32
    %85 = vector.broadcast %cst_32 : f32 to vector<26x16xf32>
    %86 = arith.mulf %84, %85 : vector<26x16xf32>
    %87 = vector.extract_strided_slice %30 {offsets = [0, 96], sizes = [26, 16], strides = [1, 1]} : vector<26x192xf32> to vector<26x16xf32>
    %88 = vector.extract_strided_slice %30 {offsets = [0, 160], sizes = [26, 16], strides = [1, 1]} : vector<26x192xf32> to vector<26x16xf32>
    %89 = arith.truncf %86 : vector<26x16xf32> to vector<26x16xbf16>
    %90 = arith.truncf %87 : vector<26x16xf32> to vector<26x16xbf16>
    %cst_33 = arith.constant dense<0.000000e+00> : vector<26x26xf32>
    %91 = tpu.matmul %89, %90, %cst_33 {dimension_numbers = #tpu.dot_dimension_numbers<[1], [1], [0], [0], [0, 0, 1, 0], [], []>} : vector<26x16xbf16>, vector<26x16xbf16>, vector<26x26xf32> -> vector<26x26xf32>
    %92 = arith.addf %91, %1 : vector<26x26xf32>
    %cst_34 = arith.constant dense<0xFF800000> : vector<26xf32>
    %93 = vector.multi_reduction <maximumf>, %92, %cst_34 [1] : vector<26x26xf32> to vector<26xf32>
    %94 = vector.shape_cast %93 : vector<26xf32> to vector<26x1xf32>
    %95 = vector.broadcast %94 : vector<26x1xf32> to vector<26x26xf32>
    %96 = arith.subf %92, %95 : vector<26x26xf32>
    %97 = math.exp %96 : vector<26x26xf32>
    %cst_35 = arith.constant dense<0.000000e+00> : vector<26xf32>
    %98 = vector.multi_reduction <add>, %97, %cst_35 [1] : vector<26x26xf32> to vector<26xf32>
    %99 = vector.shape_cast %98 : vector<26xf32> to vector<26x1xf32>
    %100 = vector.broadcast %99 : vector<26x1xf32> to vector<26x26xf32>
    %101 = arith.divf %97, %100 : vector<26x26xf32>
    %102 = arith.truncf %101 : vector<26x26xf32> to vector<26x26xbf16>
    %103 = arith.truncf %88 : vector<26x16xf32> to vector<26x16xbf16>
    %cst_36 = arith.constant dense<0.000000e+00> : vector<26x16xf32>
    %104 = tpu.matmul %102, %103, %cst_36 {dimension_numbers = #tpu.dot_dimension_numbers<[1], [0], [0], [1], [0, 0, 1, 1], [], []>} : vector<26x26xbf16>, vector<26x16xbf16>, vector<26x16xf32> -> vector<26x16xf32>
    %c32 = arith.constant 32 : index
    %c0_37 = arith.constant 0 : index
    %105 = vector.load %arg6[%c32, %c0_37] : memref<64x64xf32, #tpu.memory_space<vmem>>, vector<16x64xf32>
    %106 = arith.truncf %104 : vector<26x16xf32> to vector<26x16xbf16>
    %107 = arith.truncf %105 : vector<16x64xf32> to vector<16x64xbf16>
    %cst_38 = arith.constant dense<0.000000e+00> : vector<26x64xf32>
    %108 = tpu.matmul %106, %107, %cst_38 {dimension_numbers = #tpu.dot_dimension_numbers<[1], [0], [0], [1], [0, 0, 1, 1], [], []>} : vector<26x16xbf16>, vector<16x64xbf16>, vector<26x64xf32> -> vector<26x64xf32>
    %109 = arith.addf %83, %108 : vector<26x64xf32>
    %110 = vector.extract_strided_slice %30 {offsets = [0, 48], sizes = [26, 16], strides = [1, 1]} : vector<26x192xf32> to vector<26x16xf32>
    %cst_39 = arith.constant 2.500000e-01 : f32
    %111 = vector.broadcast %cst_39 : f32 to vector<26x16xf32>
    %112 = arith.mulf %110, %111 : vector<26x16xf32>
    %113 = vector.extract_strided_slice %30 {offsets = [0, 112], sizes = [26, 16], strides = [1, 1]} : vector<26x192xf32> to vector<26x16xf32>
    %114 = vector.extract_strided_slice %30 {offsets = [0, 176], sizes = [26, 16], strides = [1, 1]} : vector<26x192xf32> to vector<26x16xf32>
    %115 = arith.truncf %112 : vector<26x16xf32> to vector<26x16xbf16>
    %116 = arith.truncf %113 : vector<26x16xf32> to vector<26x16xbf16>
    %cst_40 = arith.constant dense<0.000000e+00> : vector<26x26xf32>
    %117 = tpu.matmul %115, %116, %cst_40 {dimension_numbers = #tpu.dot_dimension_numbers<[1], [1], [0], [0], [0, 0, 1, 0], [], []>} : vector<26x16xbf16>, vector<26x16xbf16>, vector<26x26xf32> -> vector<26x26xf32>
    %118 = arith.addf %117, %1 : vector<26x26xf32>
    %cst_41 = arith.constant dense<0xFF800000> : vector<26xf32>
    %119 = vector.multi_reduction <maximumf>, %118, %cst_41 [1] : vector<26x26xf32> to vector<26xf32>
    %120 = vector.shape_cast %119 : vector<26xf32> to vector<26x1xf32>
    %121 = vector.broadcast %120 : vector<26x1xf32> to vector<26x26xf32>
    %122 = arith.subf %118, %121 : vector<26x26xf32>
    %123 = math.exp %122 : vector<26x26xf32>
    %cst_42 = arith.constant dense<0.000000e+00> : vector<26xf32>
    %124 = vector.multi_reduction <add>, %123, %cst_42 [1] : vector<26x26xf32> to vector<26xf32>
    %125 = vector.shape_cast %124 : vector<26xf32> to vector<26x1xf32>
    %126 = vector.broadcast %125 : vector<26x1xf32> to vector<26x26xf32>
    %127 = arith.divf %123, %126 : vector<26x26xf32>
    %128 = arith.truncf %127 : vector<26x26xf32> to vector<26x26xbf16>
    %129 = arith.truncf %114 : vector<26x16xf32> to vector<26x16xbf16>
    %cst_43 = arith.constant dense<0.000000e+00> : vector<26x16xf32>
    %130 = tpu.matmul %128, %129, %cst_43 {dimension_numbers = #tpu.dot_dimension_numbers<[1], [0], [0], [1], [0, 0, 1, 1], [], []>} : vector<26x26xbf16>, vector<26x16xbf16>, vector<26x16xf32> -> vector<26x16xf32>
    %c48 = arith.constant 48 : index
    %c0_44 = arith.constant 0 : index
    %131 = vector.load %arg6[%c48, %c0_44] : memref<64x64xf32, #tpu.memory_space<vmem>>, vector<16x64xf32>
    %132 = arith.truncf %130 : vector<26x16xf32> to vector<26x16xbf16>
    %133 = arith.truncf %131 : vector<16x64xf32> to vector<16x64xbf16>
    %cst_45 = arith.constant dense<0.000000e+00> : vector<26x64xf32>
    %134 = tpu.matmul %132, %133, %cst_45 {dimension_numbers = #tpu.dot_dimension_numbers<[1], [0], [0], [1], [0, 0, 1, 1], [], []>} : vector<26x16xbf16>, vector<16x64xbf16>, vector<26x64xf32> -> vector<26x64xf32>
    %135 = arith.addf %109, %134 : vector<26x64xf32>
    %136 = arith.addf %0, %135 : vector<26x64xf32>
    %c0_46 = arith.constant 0 : index
    %c0_47 = arith.constant 0 : index
    %137 = vector.load %arg7[%c0_46, %c0_47] : memref<1x64xf32, #tpu.memory_space<vmem>>, vector<1x64xf32>
    %138 = vector.broadcast %137 : vector<1x64xf32> to vector<26x64xf32>
    %139 = arith.addf %136, %138 : vector<26x64xf32>
    %c0_48 = arith.constant 0 : index
    %c0_49 = arith.constant 0 : index
    %140 = vector.load %arg8[%c0_48, %c0_49] : memref<1x64xf32, #tpu.memory_space<vmem>>, vector<1x64xf32>
    %c0_50 = arith.constant 0 : index
    %c0_51 = arith.constant 0 : index
    %141 = vector.load %arg9[%c0_50, %c0_51] : memref<1x64xf32, #tpu.memory_space<vmem>>, vector<1x64xf32>
    %cst_52 = arith.constant dense<0.000000e+00> : vector<26xf32>
    %142 = vector.multi_reduction <add>, %139, %cst_52 [1] : vector<26x64xf32> to vector<26xf32>
    %143 = vector.shape_cast %142 : vector<26xf32> to vector<26x1xf32>
    %cst_53 = arith.constant 6.400000e+01 : f32
    %144 = vector.broadcast %cst_53 : f32 to vector<26x1xf32>
    %145 = arith.divf %143, %144 : vector<26x1xf32>
    %146 = vector.broadcast %145 : vector<26x1xf32> to vector<26x64xf32>
    %147 = arith.subf %139, %146 : vector<26x64xf32>
    %148 = arith.mulf %147, %147 : vector<26x64xf32>
    %cst_54 = arith.constant dense<0.000000e+00> : vector<26xf32>
    %149 = vector.multi_reduction <add>, %148, %cst_54 [1] : vector<26x64xf32> to vector<26xf32>
    %150 = vector.shape_cast %149 : vector<26xf32> to vector<26x1xf32>
    %cst_55 = arith.constant 6.400000e+01 : f32
    %151 = vector.broadcast %cst_55 : f32 to vector<26x1xf32>
    %152 = arith.divf %150, %151 : vector<26x1xf32>
    %cst_56 = arith.constant 9.99999974E-6 : f32
    %153 = vector.broadcast %cst_56 : f32 to vector<26x1xf32>
    %154 = arith.addf %152, %153 : vector<26x1xf32>
    %155 = math.rsqrt %154 : vector<26x1xf32>
    %156 = vector.broadcast %155 : vector<26x1xf32> to vector<26x64xf32>
    %157 = arith.mulf %147, %156 : vector<26x64xf32>
    %158 = vector.broadcast %140 : vector<1x64xf32> to vector<26x64xf32>
    %159 = arith.mulf %157, %158 : vector<26x64xf32>
    %160 = vector.broadcast %141 : vector<1x64xf32> to vector<26x64xf32>
    %161 = arith.addf %159, %160 : vector<26x64xf32>
    %c0_57 = arith.constant 0 : index
    %c0_58 = arith.constant 0 : index
    %162 = vector.load %arg10[%c0_57, %c0_58] : memref<64x256xf32, #tpu.memory_space<vmem>>, vector<64x256xf32>
    %163 = arith.truncf %161 : vector<26x64xf32> to vector<26x64xbf16>
    %164 = arith.truncf %162 : vector<64x256xf32> to vector<64x256xbf16>
    %cst_59 = arith.constant dense<0.000000e+00> : vector<26x256xf32>
    %165 = tpu.matmul %163, %164, %cst_59 {dimension_numbers = #tpu.dot_dimension_numbers<[1], [0], [0], [1], [0, 0, 1, 1], [], []>} : vector<26x64xbf16>, vector<64x256xbf16>, vector<26x256xf32> -> vector<26x256xf32>
    %c0_60 = arith.constant 0 : index
    %c0_61 = arith.constant 0 : index
    %166 = vector.load %arg11[%c0_60, %c0_61] : memref<1x256xf32, #tpu.memory_space<vmem>>, vector<1x256xf32>
    %167 = vector.broadcast %166 : vector<1x256xf32> to vector<26x256xf32>
    %168 = arith.addf %165, %167 : vector<26x256xf32>
    %cst_62 = arith.constant 1.702000e+00 : f32
    %169 = vector.broadcast %cst_62 : f32 to vector<26x256xf32>
    %170 = arith.mulf %169, %168 : vector<26x256xf32>
    %171 = arith.negf %170 : vector<26x256xf32>
    %172 = math.exp %171 : vector<26x256xf32>
    %cst_63 = arith.constant 1.000000e+00 : f32
    %173 = vector.broadcast %cst_63 : f32 to vector<26x256xf32>
    %174 = arith.addf %173, %172 : vector<26x256xf32>
    %175 = arith.divf %173, %174 : vector<26x256xf32>
    %176 = arith.mulf %168, %175 : vector<26x256xf32>
    %c0_64 = arith.constant 0 : index
    %c0_65 = arith.constant 0 : index
    %177 = vector.load %arg12[%c0_64, %c0_65] : memref<256x64xf32, #tpu.memory_space<vmem>>, vector<256x64xf32>
    %178 = arith.truncf %176 : vector<26x256xf32> to vector<26x256xbf16>
    %179 = arith.truncf %177 : vector<256x64xf32> to vector<256x64xbf16>
    %cst_66 = arith.constant dense<0.000000e+00> : vector<26x64xf32>
    %180 = tpu.matmul %178, %179, %cst_66 {dimension_numbers = #tpu.dot_dimension_numbers<[1], [0], [0], [1], [0, 0, 1, 1], [], []>} : vector<26x256xbf16>, vector<256x64xbf16>, vector<26x64xf32> -> vector<26x64xf32>
    %c0_67 = arith.constant 0 : index
    %c0_68 = arith.constant 0 : index
    %181 = vector.load %arg13[%c0_67, %c0_68] : memref<1x64xf32, #tpu.memory_space<vmem>>, vector<1x64xf32>
    %182 = vector.broadcast %181 : vector<1x64xf32> to vector<26x64xf32>
    %183 = arith.addf %180, %182 : vector<26x64xf32>
    %184 = arith.addf %139, %183 : vector<26x64xf32>
    %c0_69 = arith.constant 0 : index
    %c0_70 = arith.constant 0 : index
    %185 = vector.load %arg14[%c0_69, %c0_70] : memref<26x64xf32, #tpu.memory_space<vmem>>, vector<26x64xf32>
    tpu.vector_store %arg14[%c0_69, %c0_70], %184 {strides = array<i32>} : memref<26x64xf32, #tpu.memory_space<vmem>>, vector<26x64xf32>,
    return
  }
}

module attributes {stable_mosaic.version = 11 : i64} {
  func.func @_ln_proj_kernel(%arg0: memref<2x64xf32, #tpu.memory_space<vmem>>, %arg1: memref<1x64xf32, #tpu.memory_space<vmem>>, %arg2: memref<1x64xf32, #tpu.memory_space<vmem>>, %arg3: memref<64x32xf32, #tpu.memory_space<vmem>>, %arg4: memref<2x32xf32, #tpu.memory_space<vmem>>) attributes {dimension_semantics = [], scalar_prefetch = 0 : i64, scratch_operands = 0 : i64, tpu.core_type = #tpu.core_type<tc>} {
    %c0 = arith.constant 0 : index
    %c0_0 = arith.constant 0 : index
    %0 = vector.load %arg0[%c0, %c0_0] : memref<2x64xf32, #tpu.memory_space<vmem>>, vector<2x64xf32>
    %c0_1 = arith.constant 0 : index
    %c0_2 = arith.constant 0 : index
    %1 = vector.load %arg1[%c0_1, %c0_2] : memref<1x64xf32, #tpu.memory_space<vmem>>, vector<1x64xf32>
    %c0_3 = arith.constant 0 : index
    %c0_4 = arith.constant 0 : index
    %2 = vector.load %arg2[%c0_3, %c0_4] : memref<1x64xf32, #tpu.memory_space<vmem>>, vector<1x64xf32>
    %cst = arith.constant dense<0.000000e+00> : vector<2xf32>
    %3 = vector.multi_reduction <add>, %0, %cst [1] : vector<2x64xf32> to vector<2xf32>
    %4 = vector.shape_cast %3 : vector<2xf32> to vector<2x1xf32>
    %cst_5 = arith.constant 6.400000e+01 : f32
    %5 = vector.broadcast %cst_5 : f32 to vector<2x1xf32>
    %6 = arith.divf %4, %5 : vector<2x1xf32>
    %7 = vector.broadcast %6 : vector<2x1xf32> to vector<2x64xf32>
    %8 = arith.subf %0, %7 : vector<2x64xf32>
    %9 = arith.mulf %8, %8 : vector<2x64xf32>
    %cst_6 = arith.constant dense<0.000000e+00> : vector<2xf32>
    %10 = vector.multi_reduction <add>, %9, %cst_6 [1] : vector<2x64xf32> to vector<2xf32>
    %11 = vector.shape_cast %10 : vector<2xf32> to vector<2x1xf32>
    %cst_7 = arith.constant 6.400000e+01 : f32
    %12 = vector.broadcast %cst_7 : f32 to vector<2x1xf32>
    %13 = arith.divf %11, %12 : vector<2x1xf32>
    %cst_8 = arith.constant 9.99999974E-6 : f32
    %14 = vector.broadcast %cst_8 : f32 to vector<2x1xf32>
    %15 = arith.addf %13, %14 : vector<2x1xf32>
    %16 = math.rsqrt %15 : vector<2x1xf32>
    %17 = vector.broadcast %16 : vector<2x1xf32> to vector<2x64xf32>
    %18 = arith.mulf %8, %17 : vector<2x64xf32>
    %19 = vector.broadcast %1 : vector<1x64xf32> to vector<2x64xf32>
    %20 = arith.mulf %18, %19 : vector<2x64xf32>
    %21 = vector.broadcast %2 : vector<1x64xf32> to vector<2x64xf32>
    %22 = arith.addf %20, %21 : vector<2x64xf32>
    %c0_9 = arith.constant 0 : index
    %c0_10 = arith.constant 0 : index
    %23 = vector.load %arg3[%c0_9, %c0_10] : memref<64x32xf32, #tpu.memory_space<vmem>>, vector<64x32xf32>
    %24 = arith.truncf %22 : vector<2x64xf32> to vector<2x64xbf16>
    %25 = arith.truncf %23 : vector<64x32xf32> to vector<64x32xbf16>
    %cst_11 = arith.constant dense<0.000000e+00> : vector<2x32xf32>
    %26 = tpu.matmul %24, %25, %cst_11 {dimension_numbers = #tpu.dot_dimension_numbers<[1], [0], [0], [1], [0, 0, 1, 1], [], []>} : vector<2x64xbf16>, vector<64x32xbf16>, vector<2x32xf32> -> vector<2x32xf32>
    %c0_12 = arith.constant 0 : index
    %c0_13 = arith.constant 0 : index
    %27 = vector.load %arg4[%c0_12, %c0_13] : memref<2x32xf32, #tpu.memory_space<vmem>>, vector<2x32xf32>
    tpu.vector_store %arg4[%c0_12, %c0_13], %26 {strides = array<i32>} : memref<2x32xf32, #tpu.memory_space<vmem>>, vector<2x32xf32>,
    return
  }
}

module attributes {stable_mosaic.version = 11 : i64} {
  func.func @_score_kernel(%arg0: memref<2x32xf32, #tpu.memory_space<vmem>>, %arg1: memref<2x32xf32, #tpu.memory_space<vmem>>, %arg2: memref<1xf32, #tpu.memory_space<smem>>, %arg3: memref<2x1xf32, #tpu.memory_space<vmem>>) attributes {dimension_semantics = [], scalar_prefetch = 0 : i64, scratch_operands = 0 : i64, tpu.core_type = #tpu.core_type<tc>} {
    %c0 = arith.constant 0 : index
    %c0_0 = arith.constant 0 : index
    %0 = vector.load %arg0[%c0, %c0_0] : memref<2x32xf32, #tpu.memory_space<vmem>>, vector<2x32xf32>
    %c0_1 = arith.constant 0 : index
    %c0_2 = arith.constant 0 : index
    %1 = vector.load %arg1[%c0_1, %c0_2] : memref<2x32xf32, #tpu.memory_space<vmem>>, vector<2x32xf32>
    %2 = arith.mulf %0, %0 : vector<2x32xf32>
    %cst = arith.constant dense<0.000000e+00> : vector<2xf32>
    %3 = vector.multi_reduction <add>, %2, %cst [1] : vector<2x32xf32> to vector<2xf32>
    %4 = vector.shape_cast %3 : vector<2xf32> to vector<2x1xf32>
    %cst_3 = arith.constant 9.99999996E-13 : f32
    %5 = vector.broadcast %cst_3 : f32 to vector<2x1xf32>
    %6 = arith.addf %4, %5 : vector<2x1xf32>
    %7 = math.rsqrt %6 : vector<2x1xf32>
    %8 = vector.broadcast %7 : vector<2x1xf32> to vector<2x32xf32>
    %9 = arith.mulf %0, %8 : vector<2x32xf32>
    %10 = arith.mulf %1, %1 : vector<2x32xf32>
    %cst_4 = arith.constant dense<0.000000e+00> : vector<2xf32>
    %11 = vector.multi_reduction <add>, %10, %cst_4 [1] : vector<2x32xf32> to vector<2xf32>
    %12 = vector.shape_cast %11 : vector<2xf32> to vector<2x1xf32>
    %cst_5 = arith.constant 9.99999996E-13 : f32
    %13 = vector.broadcast %cst_5 : f32 to vector<2x1xf32>
    %14 = arith.addf %12, %13 : vector<2x1xf32>
    %15 = math.rsqrt %14 : vector<2x1xf32>
    %16 = vector.broadcast %15 : vector<2x1xf32> to vector<2x32xf32>
    %17 = arith.mulf %1, %16 : vector<2x32xf32>
    %c0_6 = arith.constant 0 : index
    %18 = memref.load %arg2[%c0_6] : memref<1xf32, #tpu.memory_space<smem>>
    %cst_7 = arith.constant dense<0.000000e+00> : vector<2x2xf32>
    %19 = tpu.matmul %9, %17, %cst_7 {dimension_numbers = #tpu.dot_dimension_numbers<[1], [1], [0], [0], [0, 0, 1, 0], [], []>} : vector<2x32xf32>, vector<2x32xf32>, vector<2x2xf32> -> vector<2x2xf32>
    %20 = vector.broadcast %18 : f32 to vector<2x2xf32>
    %21 = arith.mulf %20, %19 : vector<2x2xf32>
    %cst_8 = arith.constant dense<0xFF800000> : vector<2xf32>
    %22 = vector.multi_reduction <maximumf>, %21, %cst_8 [1] : vector<2x2xf32> to vector<2xf32>
    %23 = vector.shape_cast %22 : vector<2xf32> to vector<2x1xf32>
    %24 = vector.broadcast %23 : vector<2x1xf32> to vector<2x2xf32>
    %25 = arith.subf %21, %24 : vector<2x2xf32>
    %26 = math.exp %25 : vector<2x2xf32>
    %cst_9 = arith.constant dense<0.000000e+00> : vector<2xf32>
    %27 = vector.multi_reduction <add>, %26, %cst_9 [1] : vector<2x2xf32> to vector<2xf32>
    %28 = vector.shape_cast %27 : vector<2xf32> to vector<2x1xf32>
    %29 = vector.broadcast %28 : vector<2x1xf32> to vector<2x2xf32>
    %30 = arith.divf %26, %29 : vector<2x2xf32>
    %31 = vector.extract_strided_slice %30 {offsets = [0, 1], sizes = [2, 1], strides = [1, 1]} : vector<2x2xf32> to vector<2x1xf32>
    %c0_10 = arith.constant 0 : index
    %c0_11 = arith.constant 0 : index
    %32 = vector.load %arg3[%c0_10, %c0_11] : memref<2x1xf32, #tpu.memory_space<vmem>>, vector<2x1xf32>
    tpu.vector_store %arg3[%c0_10, %c0_11], %31 {strides = array<i32>} : memref<2x1xf32, #tpu.memory_space<vmem>>, vector<2x1xf32>,
    return
  }
}

</mosaic_0001>

<llo_original>
// kernel: tile.10
$region0: #{tile.10}
  #allocation0 [shape = 's32[1]{0}', space=sflag, size = 0x4, scoped, tag = 'scoped memory for tile.10']
  %s0 = inlined_call_operand.vmem [shape: f32[8,8], index: 0, kind: input, shape index: {}]
  %s1 = inlined_call_operand.vmem [shape: f32[2,8,2,8], index: 1, kind: output, shape index: {}]
  // Predicated region
  $region2: #{tile.10} parent=0 // pred_check
    _
  $region3: #{tile.10} parent=0 // pred_check_branch
    %3 = sbr.rel (0) target = $region5
  $region4: #{tile.10} parent=0 // pred_region
    _
  $region5: #{tile.10} parent=0 // pred_fallthru
    _
  %v4 = vld [vmem:[%s0] ss:$0 sm:$0xff]
  %5 = vst [vmem:[%s1] sm:$0x3] %v4
  %s6 = scalar_lea.vmem %s1, 16
  %7 = vst [vmem:[%s6] sm:$0x3] %v4
  %s8 = scalar_lea.vmem %s0, 1
  %v9 = vld [vmem:[%s8] ss:$0 sm:$0xff]
  %s10 = scalar_lea.vmem %s1, 2
  %11 = vst [vmem:[%s10] sm:$0x3] %v9
  %s12 = scalar_lea.vmem %s1, 18
  %13 = vst [vmem:[%s12] sm:$0x3] %v9
  %s14 = scalar_lea.vmem %s0, 2
  %v15 = vld [vmem:[%s14] ss:$0 sm:$0xff]
  %s16 = scalar_lea.vmem %s1, 4
  %17 = vst [vmem:[%s16] sm:$0x3] %v15
  %s18 = scalar_lea.vmem %s1, 20
  %19 = vst [vmem:[%s18] sm:$0x3] %v15
  %s20 = scalar_lea.vmem %s0, 3
  %v21 = vld [vmem:[%s20] ss:$0 sm:$0xff]
  %s22 = scalar_lea.vmem %s1, 6
  %23 = vst [vmem:[%s22] sm:$0x3] %v21
  %s24 = scalar_lea.vmem %s1, 22
  %25 = vst [vmem:[%s24] sm:$0x3] %v21
  %s26 = scalar_lea.vmem %s0, 4
  %v27 = vld [vmem:[%s26] ss:$0 sm:$0xff]
  %s28 = scalar_lea.vmem %s1, 8
  %29 = vst [vmem:[%s28] sm:$0x3] %v27
  %s30 = scalar_lea.vmem %s1, 24
  %31 = vst [vmem:[%s30] sm:$0x3] %v27
  %s32 = scalar_lea.vmem %s0, 5
  %v33 = vld [vmem:[%s32] ss:$0 sm:$0xff]
  %s34 = scalar_lea.vmem %s1, 10
  %35 = vst [vmem:[%s34] sm:$0x3] %v33
  %s36 = scalar_lea.vmem %s1, 26
  %37 = vst [vmem:[%s36] sm:$0x3] %v33
  %s38 = scalar_lea.vmem %s0, 6
  %v39 = vld [vmem:[%s38] ss:$0 sm:$0xff]
  %s40 = scalar_lea.vmem %s1, 12
  %41 = vst [vmem:[%s40] sm:$0x3] %v39
  %s42 = scalar_lea.vmem %s1, 28
  %43 = vst [vmem:[%s42] sm:$0x3] %v39
  %s44 = scalar_lea.vmem %s0, 7
  %v45 = vld [vmem:[%s44] ss:$0 sm:$0xff]
  %s46 = scalar_lea.vmem %s1, 14
  %47 = vst [vmem:[%s46] sm:$0x3] %v45
  %s48 = scalar_lea.vmem %s1, 30
  %49 = vst [vmem:[%s48] sm:$0x3] %v45

// kernel: tile.11
$region0: #{tile.11}
  %s0 = inlined_call_operand.vmem [shape: f32[2,8,2,8], index: 0, kind: input, shape index: {}]
  %s1 = inlined_call_operand.vmem [shape: f32[16,16], index: 1, kind: output, shape index: {}]
  $region1: #{tile.11} parent=0
    #allocation0 [shape = 'u8[65536]{0}', space=vmem, size = 0x10000, scoped, tag = 'scoped mem for input reshape']
    %s3 = ssub.s32 4, 1
    %s4 = scalar_lea.vmem %s0, 30
    %v5 = vld [vmem:[%s4] sm:%s3]
    %s6 = scalar_lea.vmem [#allocation0], 120
    %7 = vst [vmem:[%s6] sm:%s3] %v5
    %s8 = scalar_lea.vmem %s0, 28
    %v9 = vld [vmem:[%s8] sm:%s3]
    %s10 = scalar_lea.vmem [#allocation0], 112
    %11 = vst [vmem:[%s10] sm:%s3] %v9
    %s12 = scalar_lea.vmem %s0, 26
    %v13 = vld [vmem:[%s12] sm:%s3]
    %s14 = scalar_lea.vmem [#allocation0], 104
    %15 = vst [vmem:[%s14] sm:%s3] %v13
    %s16 = scalar_lea.vmem %s0, 24
    %v17 = vld [vmem:[%s16] sm:%s3]
    %s18 = scalar_lea.vmem [#allocation0], 96
    %19 = vst [vmem:[%s18] sm:%s3] %v17
    %s20 = scalar_lea.vmem %s0, 22
    %v21 = vld [vmem:[%s20] sm:%s3]
    %s22 = scalar_lea.vmem [#allocation0], 88
    %23 = vst [vmem:[%s22] sm:%s3] %v21
    %s24 = scalar_lea.vmem %s0, 20
    %v25 = vld [vmem:[%s24] sm:%s3]
    %s26 = scalar_lea.vmem [#allocation0], 80
    %27 = vst [vmem:[%s26] sm:%s3] %v25
    %s28 = scalar_lea.vmem %s0, 18
    %v29 = vld [vmem:[%s28] sm:%s3]
    %s30 = scalar_lea.vmem [#allocation0], 72
    %31 = vst [vmem:[%s30] sm:%s3] %v29
    %s32 = scalar_lea.vmem %s0, 16
    %v33 = vld [vmem:[%s32] sm:%s3]
    %s34 = scalar_lea.vmem [#allocation0], 64
    %35 = vst [vmem:[%s34] sm:%s3] %v33
    %s36 = scalar_lea.vmem %s0, 14
    %v37 = vld [vmem:[%s36] sm:%s3]
    %s38 = scalar_lea.vmem [#allocation0], 56
    %39 = vst [vmem:[%s38] sm:%s3] %v37
    %s40 = scalar_lea.vmem %s0, 12
    %v41 = vld [vmem:[%s40] sm:%s3]
    %s42 = scalar_lea.vmem [#allocation0], 48
    %43 = vst [vmem:[%s42] sm:%s3] %v41
    %s44 = scalar_lea.vmem %s0, 10
    %v45 = vld [vmem:[%s44] sm:%s3]
    %s46 = scalar_lea.vmem [#allocation0], 40
    %47 = vst [vmem:[%s46] sm:%s3] %v45
    %s48 = scalar_lea.vmem %s0, 8
    %v49 = vld [vmem:[%s48] sm:%s3]
    %s50 = scalar_lea.vmem [#allocation0], 32
    %51 = vst [vmem:[%s50] sm:%s3] %v49
    %s52 = scalar_lea.vmem %s0, 6
    %v53 = vld [vmem:[%s52] sm:%s3]
    %s54 = scalar_lea.vmem [#allocation0], 24
    %55 = vst [vmem:[%s54] sm:%s3] %v53
    %s56 = scalar_lea.vmem %s0, 4
    %v57 = vld [vmem:[%s56] sm:%s3]
    %s58 = scalar_lea.vmem [#allocation0], 16
    %59 = vst [vmem:[%s58] sm:%s3] %v57
    %s60 = scalar_lea.vmem %s0, 2
    %v61 = vld [vmem:[%s60] sm:%s3]
    %s62 = scalar_lea.vmem [#allocation0], 8
    %63 = vst [vmem:[%s62] sm:%s3] %v61
    %v64 = vld [vmem:[%s0] sm:%s3]
    %65 = vst [vmem:[#allocation0] sm:%s3] %v64
    %v66 = vld [vmem:[#allocation0] ss:$8 sm:$0xf]
    %v67 = vld [vmem:[#allocation0] ss:$8 sm:$0xf0]
    %vm68 = vcmask 1047556
    %v69 = vsel %vm68, %v67, %v66
    %vm70 = vcmask 64512
    %71 = vst.msk [vmem:[%s1] sm:$0xff] %vm70, %v69
    %s72 = scalar_lea.vmem [#allocation0], 64
    %v73 = vld [vmem:[%s72] ss:$8 sm:$0xf]
    %s74 = scalar_lea.vmem [#allocation0], 64
    %v75 = vld [vmem:[%s74] ss:$8 sm:$0xf0]
    %vm76 = vcmask 1047556
    %v77 = vsel %vm76, %v75, %v73
    %vm78 = vcmask 64512
    %s79 = scalar_lea.vmem %s1, 8
    %80 = vst.msk [vmem:[%s79] sm:$0xff] %vm78, %v77
    %s81 = scalar_lea.vmem [#allocation0], 1
    %v82 = vld [vmem:[%s81] ss:$8 sm:$0xf]
    %s83 = scalar_lea.vmem [#allocation0], 1
    %v84 = vld [vmem:[%s83] ss:$8 sm:$0xf0]
    %vm85 = vcmask 1047556
    %v86 = vsel %vm85, %v84, %v82
    %87 = vrot.lane.b32.xlu0 %v86, 8
    %v88 = vpop.permute.xlu0 %87
    %vm89 = vcmask 130112
    %90 = vst.msk [vmem:[%s1] sm:$0xff] %vm89, %v88
    %s91 = scalar_lea.vmem [#allocation0], 65
    %v92 = vld [vmem:[%s91] ss:$8 sm:$0xf]
    %s93 = scalar_lea.vmem [#allocation0], 65
    %v94 = vld [vmem:[%s93] ss:$8 sm:$0xf0]
    %vm95 = vcmask 1047556
    %v96 = vsel %vm95, %v94, %v92
    %97 = vrot.lane.b32.xlu0 %v96, 8
    %v98 = vpop.permute.xlu0 %97
    %vm99 = vcmask 130112
    %s100 = scalar_lea.vmem %s1, 8
    %101 = vst.msk [vmem:[%s100] sm:$0xff] %vm99, %v98

// kernel: custom_clip_forward.14
$region0: #{custom_clip_forward.14}
  #allocation0 [shape = 'u32[]', space=smem, size = 0x4, offset = 0x4, fixed_abs, tag = 'smem constant byte address 0x4 - core index']
  #allocation1 [shape = 'u32[72,128]{1,0:T(1,128)}', space=vmem, size = 0x9000, scoped, tag = 'internal scratch']
  %s0 = inlined_call_operand.vmem [shape: f32[12,4,32], index: 0, kind: input, shape index: {}]
  %s1 = inlined_call_operand.hbm [shape: f32[12,32,32], index: 1, kind: input, shape index: {}]
  %s2 = inlined_call_operand.vmem [shape: f32[12,1,32], index: 2, kind: input, shape index: {}]
  %s3 = inlined_call_operand.vmem [shape: f32[12,4,32], index: 3, kind: output, shape index: {}]
  %s4 = sld [smem:[#allocation0]]
  $region26: #{custom_clip_forward.14} parent=0
    _
  %s6 = ssub.s32 1, %s4
  %s7 = scalar_select 0, %s6, %s4
  $region1: #{custom_clip_forward.14} parent=0
    #allocation2 [shape = 'u8[196608]{0}', space=vmem, size = 0x30000, scoped, tag = 'input window, operand 1, single buffered']
    #allocation3 [shape = 's32[1]{0}', space=sflag, size = 0x4, scoped, tag = 'scoped memory for custom_clip_forward.14']
    %8 = vsyncpa [#allocation3], 0
    // Predicated region
    $region2: #{custom_clip_forward.14} parent=1 // pred_check
      _
    $region3: #{custom_clip_forward.14} parent=1 // pred_check_branch
      %10 = sbr.rel (0) target = $region5
    $region4: #{custom_clip_forward.14} parent=1 // pred_region
      _
    $region5: #{custom_clip_forward.14} parent=1 // pred_fallthru
      _
    // Predicated region
    $region6: #{custom_clip_forward.14} parent=1 // pred_check
      _
    $region7: #{custom_clip_forward.14} parent=1 // pred_check_branch
      %12 = sbr.rel (0) target = $region9
    $region8: #{custom_clip_forward.14} parent=1 // pred_region
      %14 = vsyncadd [#allocation3], 0
      %s15 = sshll.u32 %s1, 4
      %s16 = int_to_ptr.hbm [resolvable:$true] %s15
      %s17 = sshll.u32 [#allocation2], 4
      %s18 = int_to_ptr.vmem [resolvable:$true] %s17
      %23 = dma.hbm_to_vmem [thread:$0]  %s16, 6144, %s18, [#allocation3], 128, 128, 8
    $region9: #{custom_clip_forward.14} parent=1 // pred_fallthru
      _
    // Predicated region
    $region10: #{custom_clip_forward.14} parent=1 // pred_check
      _
    $region11: #{custom_clip_forward.14} parent=1 // pred_check_branch
      %25 = sbr.rel (0) target = $region13
    $region12: #{custom_clip_forward.14} parent=1 // pred_region
      _
    $region13: #{custom_clip_forward.14} parent=1 // pred_fallthru
      _
    // Predicated region
    $region14: #{custom_clip_forward.14} parent=1 // pred_check
      _
    $region15: #{custom_clip_forward.14} parent=1 // pred_check_branch
      %27 = sbr.rel (0) target = $region17
    $region16: #{custom_clip_forward.14} parent=1 // pred_region
      %29 = dma.done [#allocation3], 6144
    $region17: #{custom_clip_forward.14} parent=1 // pred_fallthru
      _
    %v31 = vld [vmem:[%s0] sm:$0xf]
    %v32 = vld [vmem:[%s0 + $0x4] sm:$0xf]
    %v33 = vld [vmem:[%s0 + $0x8] sm:$0xf]
    %v34 = vld [vmem:[%s0 + $0xc] sm:$0xf]
    %v35 = vld [vmem:[%s0 + $0x10] sm:$0xf]
    %v36 = vld [vmem:[%s0 + $0x14] sm:$0xf]
    %v37 = vld [vmem:[%s0 + $0x18] sm:$0xf]
    %v38 = vld [vmem:[%s0 + $0x1c] sm:$0xf]
    %v39 = vld [vmem:[%s0 + $0x20] sm:$0xf]
    %v40 = vld [vmem:[%s0 + $0x24] sm:$0xf]
    %v41 = vld [vmem:[%s0 + $0x28] sm:$0xf]
    %v42 = vld [vmem:[%s0 + $0x2c] sm:$0xf]
    %v43 = vpack.c.bf16 %v31, %v31
    %v44 = vpack.c.bf16 %v32, %v32
    %v45 = vpack.c.bf16 %v33, %v33
    %v46 = vpack.c.bf16 %v34, %v34
    %v47 = vpack.c.bf16 %v35, %v35
    %v48 = vpack.c.bf16 %v36, %v36
    %v49 = vpack.c.bf16 %v37, %v37
    %v50 = vpack.c.bf16 %v38, %v38
    %v51 = vpack.c.bf16 %v39, %v39
    %v52 = vpack.c.bf16 %v40, %v40
    %v53 = vpack.c.bf16 %v41, %v41
    %v54 = vpack.c.bf16 %v42, %v42
    %v55 = vld [vmem:[#allocation2] sm:$0xff]
    %v56 = vld [vmem:[#allocation2 + $0x8] sm:$0xff]
    %v57 = vld [vmem:[#allocation2 + $0x10] sm:$0xff]
    %v58 = vld [vmem:[#allocation2 + $0x18] sm:$0xff]
    %v59 = vld [vmem:[#allocation2 + $0x20] sm:$0xff]
    %v60 = vld [vmem:[#allocation2 + $0x28] sm:$0xff]
    %v61 = vld [vmem:[#allocation2 + $0x30] sm:$0xff]
    %v62 = vld [vmem:[#allocation2 + $0x38] sm:$0xff]
    %v63 = vld [vmem:[#allocation2 + $0x40] sm:$0xff]
    %v64 = vld [vmem:[#allocation2 + $0x48] sm:$0xff]
    %v65 = vld [vmem:[#allocation2 + $0x50] sm:$0xff]
    %v66 = vld [vmem:[#allocation2 + $0x58] sm:$0xff]
    %v67 = vld [vmem:[#allocation2 + $0x60] sm:$0xff]
    %v68 = vld [vmem:[#allocation2 + $0x68] sm:$0xff]
    %v69 = vld [vmem:[#allocation2 + $0x70] sm:$0xff]
    %v70 = vld [vmem:[#allocation2 + $0x78] sm:$0xff]
    %v71 = vld [vmem:[#allocation2 + $0x80] sm:$0xff]
    %v72 = vld [vmem:[#allocation2 + $0x88] sm:$0xff]
    %v73 = vld [vmem:[#allocation2 + $0x90] sm:$0xff]
    %v74 = vld [vmem:[#allocation2 + $0x98] sm:$0xff]
    %v75 = vld [vmem:[#allocation2 + $0xa0] sm:$0xff]
    %v76 = vld [vmem:[#allocation2 + $0xa8] sm:$0xff]
    %v77 = vld [vmem:[#allocation2 + $0xb0] sm:$0xff]
    %v78 = vld [vmem:[#allocation2 + $0xb8] sm:$0xff]
    %v79 = vld [vmem:[#allocation2 + $0xc0] sm:$0xff]
    %v80 = vld [vmem:[#allocation2 + $0xc8] sm:$0xff]
    %v81 = vld [vmem:[#allocation2 + $0xd0] sm:$0xff]
    %v82 = vld [vmem:[#allocation2 + $0xd8] sm:$0xff]
    %v83 = vld [vmem:[#allocation2 + $0xe0] sm:$0xff]
    %v84 = vld [vmem:[#allocation2 + $0xe8] sm:$0xff]
    %v85 = vld [vmem:[#allocation2 + $0xf0] sm:$0xff]
    %v86 = vld [vmem:[#allocation2 + $0xf8] sm:$0xff]
    %v87 = vld [vmem:[#allocation2 + $0x100] sm:$0xff]
    %v88 = vld [vmem:[#allocation2 + $0x108] sm:$0xff]
    %v89 = vld [vmem:[#allocation2 + $0x110] sm:$0xff]
    %v90 = vld [vmem:[#allocation2 + $0x118] sm:$0xff]
    %v91 = vld [vmem:[#allocation2 + $0x120] sm:$0xff]
    %v92 = vld [vmem:[#allocation2 + $0x128] sm:$0xff]
    %v93 = vld [vmem:[#allocation2 + $0x130] sm:$0xff]
    %v94 = vld [vmem:[#allocation2 + $0x138] sm:$0xff]
    %v95 = vld [vmem:[#allocation2 + $0x140] sm:$0xff]
    %v96 = vld [vmem:[#allocation2 + $0x148] sm:$0xff]
    %v97 = vld [vmem:[#allocation2 + $0x150] sm:$0xff]
    %v98 = vld [vmem:[#allocation2 + $0x158] sm:$0xff]
    %v99 = vld [vmem:[#allocation2 + $0x160] sm:$0xff]
    %v100 = vld [vmem:[#allocation2 + $0x168] sm:$0xff]
    %v101 = vld [vmem:[#allocation2 + $0x170] sm:$0xff]
    %v102 = vld [vmem:[#allocation2 + $0x178] sm:$0xff]
    %v103 = vpack.c.bf16 %v55, %v55
    %v104 = vpack.c.bf16 %v56, %v56
    %v105 = vpack.c.bf16 %v57, %v57
    %v106 = vpack.c.bf16 %v58, %v58
    %v107 = vpack.c.bf16 %v59, %v59
    %v108 = vpack.c.bf16 %v60, %v60
    %v109 = vpack.c.bf16 %v61, %v61
    %v110 = vpack.c.bf16 %v62, %v62
    %v111 = vpack.c.bf16 %v63, %v63
    %v112 = vpack.c.bf16 %v64, %v64
    %v113 = vpack.c.bf16 %v65, %v65
    %v114 = vpack.c.bf16 %v66, %v66
    %v115 = vpack.c.bf16 %v67, %v67
    %v116 = vpack.c.bf16 %v68, %v68
    %v117 = vpack.c.bf16 %v69, %v69
    %v118 = vpack.c.bf16 %v70, %v70
    %v119 = vpack.c.bf16 %v71, %v71
    %v120 = vpack.c.bf16 %v72, %v72
    %v121 = vpack.c.bf16 %v73, %v73
    %v122 = vpack.c.bf16 %v74, %v74
    %v123 = vpack.c.bf16 %v75, %v75
    %v124 = vpack.c.bf16 %v76, %v76
    %v125 = vpack.c.bf16 %v77, %v77
    %v126 = vpack.c.bf16 %v78, %v78
    %v127 = vpack.c.bf16 %v79, %v79
    %v128 = vpack.c.bf16 %v80, %v80
    %v129 = vpack.c.bf16 %v81, %v81
    %v130 = vpack.c.bf16 %v82, %v82
    %v131 = vpack.c.bf16 %v83, %v83
    %v132 = vpack.c.bf16 %v84, %v84
    %v133 = vpack.c.bf16 %v85, %v85
    %v134 = vpack.c.bf16 %v86, %v86
    %v135 = vpack.c.bf16 %v87, %v87
    %v136 = vpack.c.bf16 %v88, %v88
    %v137 = vpack.c.bf16 %v89, %v89
    %v138 = vpack.c.bf16 %v90, %v90
    %v139 = vpack.c.bf16 %v91, %v91
    %v140 = vpack.c.bf16 %v92, %v92
    %v141 = vpack.c.bf16 %v93, %v93
    %v142 = vpack.c.bf16 %v94, %v94
    %v143 = vpack.c.bf16 %v95, %v95
    %v144 = vpack.c.bf16 %v96, %v96
    %v145 = vpack.c.bf16 %v97, %v97
    %v146 = vpack.c.bf16 %v98, %v98
    %v147 = vpack.c.bf16 %v99, %v99
    %v148 = vpack.c.bf16 %v100, %v100
    %v149 = vpack.c.bf16 %v101, %v101
    %v150 = vpack.c.bf16 %v102, %v102
    %v151 = vld [vmem:[%s2] sm:$0x1]
    %v152 = vld [vmem:[%s2 + $0x1] sm:$0x1]
    %v153 = vld [vmem:[%s2 + $0x2] sm:$0x1]
    %v154 = vld [vmem:[%s2 + $0x3] sm:$0x1]
    %v155 = vld [vmem:[%s2 + $0x4] sm:$0x1]
    %v156 = vld [vmem:[%s2 + $0x5] sm:$0x1]
    %v157 = vld [vmem:[%s2 + $0x6] sm:$0x1]
    %v158 = vld [vmem:[%s2 + $0x7] sm:$0x1]
    %v159 = vld [vmem:[%s2 + $0x8] sm:$0x1]
    %v160 = vld [vmem:[%s2 + $0x9] sm:$0x1]
    %v161 = vld [vmem:[%s2 + $0xa] sm:$0x1]
    %v162 = vld [vmem:[%s2 + $0xb] sm:$0x1]
    %v175 = vperm.slane %v151, 0
    %v176 = vperm.slane %v152, 0
    %v177 = vperm.slane %v153, 0
    %v178 = vperm.slane %v154, 0
    %v179 = vperm.slane %v155, 0
    %v180 = vperm.slane %v156, 0
    %v181 = vperm.slane %v157, 0
    %v182 = vperm.slane %v158, 0
    %v183 = vperm.slane %v159, 0
    %v184 = vperm.slane %v160, 0
    %v185 = vperm.slane %v161, 0
    %v186 = vperm.slane %v162, 0
    %v203 = vunpack.c.l.b16 %v103
    %v204 = vunpack.c.l.b16 %v104
    %v205 = vunpack.c.l.b16 %v105
    %v206 = vunpack.c.l.b16 %v106
    %v207 = vpack.c.b16 %v204, %v203
    %v208 = vpack.c.b16 %v206, %v205
    %vm211 = vcmask 261120
    %v213 = vsel %vm211, %v43, 0
    %215 = vmatpush.bf16.msra.mxu0 0
    %216 = vmatpush.bf16.msra.mxu0 0
    %217 = vmatpush.bf16.msra.mxu0 0
    %218 = vmatpush.bf16.msra.mxu0 0
    %219 = vmatpush.bf16.msra.mxu0 0
    %220 = vmatpush.bf16.msra.mxu0 0
    %221 = vmatpush.bf16.msra.mxu0 %v208
    %222 = vmatpush.bf16.msra.mxu0 %v207
    %223 = vmatmul.bf16.gmra.mxu0 %v213
    %v224 = vpop.f32.mrf.mxu0
    %v225 = vadd.f32 %v175, %v224
    %v226 = vpop.f32.mrf.mxu0
    %227 = vdwg.mxu0
    %v232 = vunpack.c.l.b16 %v107
    %v233 = vunpack.c.l.b16 %v108
    %v234 = vunpack.c.l.b16 %v109
    %v235 = vunpack.c.l.b16 %v110
    %v236 = vpack.c.b16 %v233, %v232
    %v237 = vpack.c.b16 %v235, %v234
    %v241 = vsel %vm211, %v44, 0
    %243 = vmatpush.bf16.msra.mxu0 0
    %244 = vmatpush.bf16.msra.mxu0 0
    %245 = vmatpush.bf16.msra.mxu0 0
    %246 = vmatpush.bf16.msra.mxu0 0
    %247 = vmatpush.bf16.msra.mxu0 0
    %248 = vmatpush.bf16.msra.mxu0 0
    %249 = vmatpush.bf16.msra.mxu0 %v237
    %250 = vmatpush.bf16.msra.mxu0 %v236
    %251 = vmatmul.bf16.gmra.mxu0 %v241
    %v252 = vpop.f32.mrf.mxu0
    %v253 = vadd.f32 %v176, %v252
    %v254 = vpop.f32.mrf.mxu0
    %255 = vdwg.mxu0
    %v260 = vunpack.c.l.b16 %v111
    %v261 = vunpack.c.l.b16 %v112
    %v262 = vunpack.c.l.b16 %v113
    %v263 = vunpack.c.l.b16 %v114
    %v264 = vpack.c.b16 %v261, %v260
    %v265 = vpack.c.b16 %v263, %v262
    %v269 = vsel %vm211, %v45, 0
    %271 = vmatpush.bf16.msra.mxu0 0
    %272 = vmatpush.bf16.msra.mxu0 0
    %273 = vmatpush.bf16.msra.mxu0 0
    %274 = vmatpush.bf16.msra.mxu0 0
    %275 = vmatpush.bf16.msra.mxu0 0
    %276 = vmatpush.bf16.msra.mxu0 0
    %277 = vmatpush.bf16.msra.mxu0 %v265
    %278 = vmatpush.bf16.msra.mxu0 %v264
    %279 = vmatmul.bf16.gmra.mxu0 %v269
    %v280 = vpop.f32.mrf.mxu0
    %v281 = vadd.f32 %v177, %v280
    %v282 = vpop.f32.mrf.mxu0
    %283 = vdwg.mxu0
    %v288 = vunpack.c.l.b16 %v115
    %v289 = vunpack.c.l.b16 %v116
    %v290 = vunpack.c.l.b16 %v117
    %v291 = vunpack.c.l.b16 %v118
    %v292 = vpack.c.b16 %v289, %v288
    %v293 = vpack.c.b16 %v291, %v290
    %v297 = vsel %vm211, %v46, 0
    %299 = vmatpush.bf16.msra.mxu0 0
    %300 = vmatpush.bf16.msra.mxu0 0
    %301 = vmatpush.bf16.msra.mxu0 0
    %302 = vmatpush.bf16.msra.mxu0 0
    %303 = vmatpush.bf16.msra.mxu0 0
    %304 = vmatpush.bf16.msra.mxu0 0
    %305 = vmatpush.bf16.msra.mxu0 %v293
    %306 = vmatpush.bf16.msra.mxu0 %v292
    %307 = vmatmul.bf16.gmra.mxu0 %v297
    %v308 = vpop.f32.mrf.mxu0
    %v309 = vadd.f32 %v178, %v308
    %v310 = vpop.f32.mrf.mxu0
    %311 = vdwg.mxu0
    %v316 = vunpack.c.l.b16 %v119
    %v317 = vunpack.c.l.b16 %v120
    %v318 = vunpack.c.l.b16 %v121
    %v319 = vunpack.c.l.b16 %v122
    %v320 = vpack.c.b16 %v317, %v316
    %v321 = vpack.c.b16 %v319, %v318
    %v325 = vsel %vm211, %v47, 0
    %327 = vmatpush.bf16.msra.mxu0 0
    %328 = vmatpush.bf16.msra.mxu0 0
    %329 = vmatpush.bf16.msra.mxu0 0
    %330 = vmatpush.bf16.msra.mxu0 0
    %331 = vmatpush.bf16.msra.mxu0 0
    %332 = vmatpush.bf16.msra.mxu0 0
    %333 = vmatpush.bf16.msra.mxu0 %v321
    %334 = vmatpush.bf16.msra.mxu0 %v320
    %335 = vmatmul.bf16.gmra.mxu0 %v325
    %v336 = vpop.f32.mrf.mxu0
    %v337 = vadd.f32 %v179, %v336
    %v338 = vpop.f32.mrf.mxu0
    %339 = vdwg.mxu0
    %v344 = vunpack.c.l.b16 %v123
    %v345 = vunpack.c.l.b16 %v124
    %v346 = vunpack.c.l.b16 %v125
    %v347 = vunpack.c.l.b16 %v126
    %v348 = vpack.c.b16 %v345, %v344
    %v349 = vpack.c.b16 %v347, %v346
    %v353 = vsel %vm211, %v48, 0
    %355 = vmatpush.bf16.msra.mxu0 0
    %356 = vmatpush.bf16.msra.mxu0 0
    %357 = vmatpush.bf16.msra.mxu0 0
    %358 = vmatpush.bf16.msra.mxu0 0
    %359 = vmatpush.bf16.msra.mxu0 0
    %360 = vmatpush.bf16.msra.mxu0 0
    %361 = vmatpush.bf16.msra.mxu0 %v349
    %362 = vmatpush.bf16.msra.mxu0 %v348
    %363 = vmatmul.bf16.gmra.mxu0 %v353
    %v364 = vpop.f32.mrf.mxu0
    %v365 = vadd.f32 %v180, %v364
    %v366 = vpop.f32.mrf.mxu0
    %367 = vdwg.mxu0
    %v372 = vunpack.c.l.b16 %v127
    %v373 = vunpack.c.l.b16 %v128
    %v374 = vunpack.c.l.b16 %v129
    %v375 = vunpack.c.l.b16 %v130
    %v376 = vpack.c.b16 %v373, %v372
    %v377 = vpack.c.b16 %v375, %v374
    %v381 = vsel %vm211, %v49, 0
    %383 = vmatpush.bf16.msra.mxu0 0
    %384 = vmatpush.bf16.msra.mxu0 0
    %385 = vmatpush.bf16.msra.mxu0 0
    %386 = vmatpush.bf16.msra.mxu0 0
    %387 = vmatpush.bf16.msra.mxu0 0
    %388 = vmatpush.bf16.msra.mxu0 0
    %389 = vmatpush.bf16.msra.mxu0 %v377
    %390 = vmatpush.bf16.msra.mxu0 %v376
    %391 = vmatmul.bf16.gmra.mxu0 %v381
    %v392 = vpop.f32.mrf.mxu0
    %v393 = vadd.f32 %v181, %v392
    %v394 = vpop.f32.mrf.mxu0
    %395 = vdwg.mxu0
    %v400 = vunpack.c.l.b16 %v131
    %v401 = vunpack.c.l.b16 %v132
    %v402 = vunpack.c.l.b16 %v133
    %v403 = vunpack.c.l.b16 %v134
    %v404 = vpack.c.b16 %v401, %v400
    %v405 = vpack.c.b16 %v403, %v402
    %v409 = vsel %vm211, %v50, 0
    %411 = vmatpush.bf16.msra.mxu0 0
    %412 = vmatpush.bf16.msra.mxu0 0
    %413 = vmatpush.bf16.msra.mxu0 0
    %414 = vmatpush.bf16.msra.mxu0 0
    %415 = vmatpush.bf16.msra.mxu0 0
    %416 = vmatpush.bf16.msra.mxu0 0
    %417 = vmatpush.bf16.msra.mxu0 %v405
    %418 = vmatpush.bf16.msra.mxu0 %v404
    %419 = vmatmul.bf16.gmra.mxu0 %v409
    %v420 = vpop.f32.mrf.mxu0
    %v421 = vadd.f32 %v182, %v420
    %v422 = vpop.f32.mrf.mxu0
    %423 = vdwg.mxu0
    %v428 = vunpack.c.l.b16 %v135
    %v429 = vunpack.c.l.b16 %v136
    %v430 = vunpack.c.l.b16 %v137
    %v431 = vunpack.c.l.b16 %v138
    %v432 = vpack.c.b16 %v429, %v428
    %v433 = vpack.c.b16 %v431, %v430
    %v437 = vsel %vm211, %v51, 0
    %439 = vmatpush.bf16.msra.mxu0 0
    %440 = vmatpush.bf16.msra.mxu0 0
    %441 = vmatpush.bf16.msra.mxu0 0
    %442 = vmatpush.bf16.msra.mxu0 0
    %443 = vmatpush.bf16.msra.mxu0 0
    %444 = vmatpush.bf16.msra.mxu0 0
    %445 = vmatpush.bf16.msra.mxu0 %v433
    %446 = vmatpush.bf16.msra.mxu0 %v432
    %447 = vmatmul.bf16.gmra.mxu0 %v437
    %v448 = vpop.f32.mrf.mxu0
    %v449 = vadd.f32 %v183, %v448
    %v450 = vpop.f32.mrf.mxu0
    %451 = vdwg.mxu0
    %v456 = vunpack.c.l.b16 %v139
    %v457 = vunpack.c.l.b16 %v140
    %v458 = vunpack.c.l.b16 %v141
    %v459 = vunpack.c.l.b16 %v142
    %v460 = vpack.c.b16 %v457, %v456
    %v461 = vpack.c.b16 %v459, %v458
    %v465 = vsel %vm211, %v52, 0
    %467 = vmatpush.bf16.msra.mxu0 0
    %468 = vmatpush.bf16.msra.mxu0 0
    %469 = vmatpush.bf16.msra.mxu0 0
    %470 = vmatpush.bf16.msra.mxu0 0
    %471 = vmatpush.bf16.msra.mxu0 0
    %472 = vmatpush.bf16.msra.mxu0 0
    %473 = vmatpush.bf16.msra.mxu0 %v461
    %474 = vmatpush.bf16.msra.mxu0 %v460
    %475 = vmatmul.bf16.gmra.mxu0 %v465
    %v476 = vpop.f32.mrf.mxu0
    %v477 = vadd.f32 %v184, %v476
    %v478 = vpop.f32.mrf.mxu0
    %479 = vdwg.mxu0
    %v484 = vunpack.c.l.b16 %v143
    %v485 = vunpack.c.l.b16 %v144
    %v486 = vunpack.c.l.b16 %v145
    %v487 = vunpack.c.l.b16 %v146
    %v488 = vpack.c.b16 %v485, %v484
    %v489 = vpack.c.b16 %v487, %v486
    %v493 = vsel %vm211, %v53, 0
    %495 = vmatpush.bf16.msra.mxu0 0
    %496 = vmatpush.bf16.msra.mxu0 0
    %497 = vmatpush.bf16.msra.mxu0 0
    %498 = vmatpush.bf16.msra.mxu0 0
    %499 = vmatpush.bf16.msra.mxu0 0
    %500 = vmatpush.bf16.msra.mxu0 0
    %501 = vmatpush.bf16.msra.mxu0 %v489
    %502 = vmatpush.bf16.msra.mxu0 %v488
    %503 = vmatmul.bf16.gmra.mxu0 %v493
    %v504 = vpop.f32.mrf.mxu0
    %v505 = vadd.f32 %v185, %v504
    %v506 = vpop.f32.mrf.mxu0
    %507 = vdwg.mxu0
    %v512 = vunpack.c.l.b16 %v147
    %v513 = vunpack.c.l.b16 %v148
    %v514 = vunpack.c.l.b16 %v149
    %v515 = vunpack.c.l.b16 %v150
    %v516 = vpack.c.b16 %v513, %v512
    %v517 = vpack.c.b16 %v515, %v514
    %v521 = vsel %vm211, %v54, 0
    %523 = vmatpush.bf16.msra.mxu0 0
    %524 = vmatpush.bf16.msra.mxu0 0
    %525 = vmatpush.bf16.msra.mxu0 0
    %526 = vmatpush.bf16.msra.mxu0 0
    %527 = vmatpush.bf16.msra.mxu0 0
    %528 = vmatpush.bf16.msra.mxu0 0
    %529 = vmatpush.bf16.msra.mxu0 %v517
    %530 = vmatpush.bf16.msra.mxu0 %v516
    %531 = vmatmul.bf16.gmra.mxu0 %v521
    %v532 = vpop.f32.mrf.mxu0
    %v533 = vadd.f32 %v186, %v532
    %v534 = vpop.f32.mrf.mxu0
    %535 = vdwg.mxu0
    %vm536 = vcmask 257024
    %537 = vst.msk [vmem:[%s3] sm:$0xf] %vm536, %v225
    %538 = vst.msk [vmem:[%s3 + $0x4] sm:$0xf] %vm536, %v253
    %539 = vst.msk [vmem:[%s3 + $0x8] sm:$0xf] %vm536, %v281
    %540 = vst.msk [vmem:[%s3 + $0xc] sm:$0xf] %vm536, %v309
    %541 = vst.msk [vmem:[%s3 + $0x10] sm:$0xf] %vm536, %v337
    %542 = vst.msk [vmem:[%s3 + $0x14] sm:$0xf] %vm536, %v365
    %543 = vst.msk [vmem:[%s3 + $0x18] sm:$0xf] %vm536, %v393
    %544 = vst.msk [vmem:[%s3 + $0x1c] sm:$0xf] %vm536, %v421
    %545 = vst.msk [vmem:[%s3 + $0x20] sm:$0xf] %vm536, %v449
    %546 = vst.msk [vmem:[%s3 + $0x24] sm:$0xf] %vm536, %v477
    %547 = vst.msk [vmem:[%s3 + $0x28] sm:$0xf] %vm536, %v505
    %548 = vst.msk [vmem:[%s3 + $0x2c] sm:$0xf] %vm536, %v533
    // Predicated region
    $region18: #{custom_clip_forward.14} parent=1 // pred_check
      _
    $region19: #{custom_clip_forward.14} parent=1 // pred_check_branch
      %550 = sbr.rel (0) target = $region21
    $region20: #{custom_clip_forward.14} parent=1 // pred_region
      _
    $region21: #{custom_clip_forward.14} parent=1 // pred_fallthru
      _
    // Predicated region
    $region22: #{custom_clip_forward.14} parent=1 // pred_check
      _
    $region23: #{custom_clip_forward.14} parent=1 // pred_check_branch
      %552 = sbr.rel (0) target = $region25
    $region24: #{custom_clip_forward.14} parent=1 // pred_region
      _
    $region25: #{custom_clip_forward.14} parent=1 // pred_fallthru
      _
    %553 = vsyncpa [#allocation3], 1

// kernel: custom_clip_forward.16
$region0: #{custom_clip_forward.16}
  #allocation0 [shape = 'u32[]', space=smem, size = 0x4, offset = 0x4, fixed_abs, tag = 'smem constant byte address 0x4 - core index']
  #allocation1 [shape = 'u32[72,128]{1,0:T(1,128)}', space=vmem, size = 0x9000, scoped, tag = 'internal scratch']
  %s0 = inlined_call_operand.vmem [shape: f32[16,32], index: 0, kind: input, shape index: {}]
  %s1 = inlined_call_operand.vmem [shape: f32[16,16], index: 1, kind: input, shape index: {}]
  %s2 = inlined_call_operand.vmem [shape: f32[1,32], index: 2, kind: input, shape index: {}]
  %s3 = inlined_call_operand.vmem [shape: f32[1,32], index: 3, kind: input, shape index: {}]
  %s4 = inlined_call_operand.vmem [shape: f32[32,96], index: 4, kind: input, shape index: {}]
  %s5 = inlined_call_operand.vmem [shape: f32[1,96], index: 5, kind: input, shape index: {}]
  %s6 = inlined_call_operand.vmem [shape: f32[32,32], index: 6, kind: input, shape index: {}]
  %s7 = inlined_call_operand.vmem [shape: f32[1,32], index: 7, kind: input, shape index: {}]
  %s8 = inlined_call_operand.vmem [shape: f32[1,32], index: 8, kind: input, shape index: {}]
  %s9 = inlined_call_operand.vmem [shape: f32[1,32], index: 9, kind: input, shape index: {}]
  %s10 = inlined_call_operand.vmem [shape: f32[32,128], index: 10, kind: input, shape index: {}]
  %s11 = inlined_call_operand.vmem [shape: f32[1,128], index: 11, kind: input, shape index: {}]
  %s12 = inlined_call_operand.vmem [shape: f32[128,32], index: 12, kind: input, shape index: {}]
  %s13 = inlined_call_operand.vmem [shape: f32[1,32], index: 13, kind: input, shape index: {}]
  %s14 = inlined_call_operand.vmem [shape: f32[16,32], index: 14, kind: output, shape index: {}]
  %s15 = sld [smem:[#allocation0]]
  $region66: #{custom_clip_forward.16} parent=0
    _
  %s17 = ssub.s32 1, %s15
  %s18 = scalar_select 0, %s17, %s15
  // Predicated region
  $region2: #{custom_clip_forward.16} parent=0 // pred_check
    _
  $region3: #{custom_clip_forward.16} parent=0 // pred_check_branch
    %20 = sbr.rel (0) target = $region5
  $region4: #{custom_clip_forward.16} parent=0 // pred_region
    _
  $region5: #{custom_clip_forward.16} parent=0 // pred_fallthru
    _
  // Predicated region
  $region6: #{custom_clip_forward.16} parent=0 // pred_check
    _
  $region7: #{custom_clip_forward.16} parent=0 // pred_check_branch
    %22 = sbr.rel (0) target = $region9
  $region8: #{custom_clip_forward.16} parent=0 // pred_region
    _
  $region9: #{custom_clip_forward.16} parent=0 // pred_fallthru
    _
  // Predicated region
  $region10: #{custom_clip_forward.16} parent=0 // pred_check
    _
  $region11: #{custom_clip_forward.16} parent=0 // pred_check_branch
    %24 = sbr.rel (0) target = $region13
  $region12: #{custom_clip_forward.16} parent=0 // pred_region
    _
  $region13: #{custom_clip_forward.16} parent=0 // pred_fallthru
    _
  // Predicated region
  $region14: #{custom_clip_forward.16} parent=0 // pred_check
    _
  $region15: #{custom_clip_forward.16} parent=0 // pred_check_branch
    %26 = sbr.rel (0) target = $region17
  $region16: #{custom_clip_forward.16} parent=0 // pred_region
    _
  $region17: #{custom_clip_forward.16} parent=0 // pred_fallthru
    _
  // Predicated region
  $region18: #{custom_clip_forward.16} parent=0 // pred_check
    _
  $region19: #{custom_clip_forward.16} parent=0 // pred_check_branch
    %28 = sbr.rel (0) target = $region21
  $region20: #{custom_clip_forward.16} parent=0 // pred_region
    _
  $region21: #{custom_clip_forward.16} parent=0 // pred_fallthru
    _
  // Predicated region
  $region22: #{custom_clip_forward.16} parent=0 // pred_check
    _
  $region23: #{custom_clip_forward.16} parent=0 // pred_check_branch
    %30 = sbr.rel (0) target = $region25
  $region24: #{custom_clip_forward.16} parent=0 // pred_region
    _
  $region25: #{custom_clip_forward.16} parent=0 // pred_fallthru
    _
  // Predicated region
  $region26: #{custom_clip_forward.16} parent=0 // pred_check
    _
  $region27: #{custom_clip_forward.16} parent=0 // pred_check_branch
    %32 = sbr.rel (0) target = $region29
  $region28: #{custom_clip_forward.16} parent=0 // pred_region
    _
  $region29: #{custom_clip_forward.16} parent=0 // pred_fallthru
    _
  // Predicated region
  $region30: #{custom_clip_forward.16} parent=0 // pred_check
    _
  $region31: #{custom_clip_forward.16} parent=0 // pred_check_branch
    %34 = sbr.rel (0) target = $region33
  $region32: #{custom_clip_forward.16} parent=0 // pred_region
    _
  $region33: #{custom_clip_forward.16} parent=0 // pred_fallthru
    _
  // Predicated region
  $region34: #{custom_clip_forward.16} parent=0 // pred_check
    _
  $region35: #{custom_clip_forward.16} parent=0 // pred_check_branch
    %36 = sbr.rel (0) target = $region37
  $region36: #{custom_clip_forward.16} parent=0 // pred_region
    _
  $region37: #{custom_clip_forward.16} parent=0 // pred_fallthru
    _
  // Predicated region
  $region38: #{custom_clip_forward.16} parent=0 // pred_check
    _
  $region39: #{custom_clip_forward.16} parent=0 // pred_check_branch
    %38 = sbr.rel (0) target = $region41
  $region40: #{custom_clip_forward.16} parent=0 // pred_region
    _
  $region41: #{custom_clip_forward.16} parent=0 // pred_fallthru
    _
  // Predicated region
  $region42: #{custom_clip_forward.16} parent=0 // pred_check
    _
  $region43: #{custom_clip_forward.16} parent=0 // pred_check_branch
    %40 = sbr.rel (0) target = $region45
  $region44: #{custom_clip_forward.16} parent=0 // pred_region
    _
  $region45: #{custom_clip_forward.16} parent=0 // pred_fallthru
    _
  // Predicated region
  $region46: #{custom_clip_forward.16} parent=0 // pred_check
    _
  $region47: #{custom_clip_forward.16} parent=0 // pred_check_branch
    %42 = sbr.rel (0) target = $region49
  $region48: #{custom_clip_forward.16} parent=0 // pred_region
    _
  $region49: #{custom_clip_forward.16} parent=0 // pred_fallthru
    _
  // Predicated region
  $region50: #{custom_clip_forward.16} parent=0 // pred_check
    _
  $region51: #{custom_clip_forward.16} parent=0 // pred_check_branch
    %44 = sbr.rel (0) target = $region53
  $region52: #{custom_clip_forward.16} parent=0 // pred_region
    _
  $region53: #{custom_clip_forward.16} parent=0 // pred_fallthru
    _
  // Predicated region
  $region54: #{custom_clip_forward.16} parent=0 // pred_check
    _
  $region55: #{custom_clip_forward.16} parent=0 // pred_check_branch
    %46 = sbr.rel (0) target = $region57
  $region56: #{custom_clip_forward.16} parent=0 // pred_region
    _
  $region57: #{custom_clip_forward.16} parent=0 // pred_fallthru
    _
  %v48 = vld [vmem:[%s0] sm:$0xff]
  %v49 = vld [vmem:[%s0 + $0x8] sm:$0xff]
  %v50 = vld [vmem:[%s1] sm:$0xff]
  %v51 = vld [vmem:[%s1 + $0x8] sm:$0xff]
  %v52 = vld [vmem:[%s2] sm:$0x1]
  %v53 = vld [vmem:[%s3] sm:$0x1]
  %vm54 = vcmask 261120
  %v55 = vsel %vm54, %v48, 0.0
  %56 = vadd.xlane.f32.xlu0 %v55
  %v57 = vpop.xlane.xlu0 %56
  %v58 = vsel %vm54, %v49, 0.0
  %59 = vadd.xlane.f32.xlu0 %v58
  %v60 = vpop.xlane.xlu0 %59
  %v61 = vrcp.pop 32.0
  %v62 = vmul.f32 32.0, %v61
  %v63 = vsub.f32 1.0, %v62
  %v64 = vmul.f32 %v61, %v63
  %v65 = vadd.f32 %v61, %v64
  %vm66 = vweird.f32 %v61
  %v67 = vsel %vm66, %v61, %v65
  %v68 = vmul.f32 %v57, %v67
  %v69 = vmul.f32 %v60, %v67
  %v70 = vsub.f32 %v48, %v68
  %v71 = vsub.f32 %v49, %v69
  %v72 = vmul.f32 %v70, %v70
  %v73 = vmul.f32 %v71, %v71
  %v74 = vsel %vm54, %v72, 0.0
  %75 = vadd.xlane.f32.xlu0 %v74
  %v76 = vpop.xlane.xlu0 %75
  %v77 = vsel %vm54, %v73, 0.0
  %78 = vadd.xlane.f32.xlu0 %v77
  %v79 = vpop.xlane.xlu0 %78
  %v80 = vmul.f32 %v76, %v67
  %v81 = vmul.f32 %v79, %v67
  %v82 = vadd.f32 %v80, 1e-05
  %v83 = vadd.f32 %v81, 1e-05
  %v84 = vrsqrt.pop %v82
  %v85 = vmul.f32 %v84, %v82
  %v86 = vmul.f32 %v85, %v84
  %v87 = vmul.f32 0.5, %v86
  %v88 = vsub.f32 1.5, %v87
  %v89 = vmul.f32 %v84, %v88
  %vm90 = vweird.f32 %v82
  %vm91 = vweird.f32 %v84
  %vm92 = vmor %vm90, %vm91
  %v93 = vsel %vm92, %v84, %v89
  %v94 = vrsqrt.pop %v83
  %v95 = vmul.f32 %v94, %v83
  %v96 = vmul.f32 %v95, %v94
  %v97 = vmul.f32 0.5, %v96
  %v98 = vsub.f32 1.5, %v97
  %v99 = vmul.f32 %v94, %v98
  %vm100 = vweird.f32 %v83
  %vm101 = vweird.f32 %v94
  %vm102 = vmor %vm100, %vm101
  %v103 = vsel %vm102, %v94, %v99
  %v104 = vmul.f32 %v70, %v93
  %v105 = vmul.f32 %v71, %v103
  %v107 = vperm.slane %v52, 0
  %v109 = vmul.f32 %v104, %v107
  %v110 = vmul.f32 %v105, %v107
  %v112 = vperm.slane %v53, 0
  %v114 = vadd.f32 %v109, %v112
  %v115 = vadd.f32 %v110, %v112
  %v116 = vld [vmem:[%s4] sm:$0xff]
  %v117 = vld [vmem:[%s4 + $0x8] sm:$0xff]
  %v118 = vld [vmem:[%s4 + $0x10] sm:$0xff]
  %v119 = vld [vmem:[%s4 + $0x18] sm:$0xff]
  %v120 = vpack.c.bf16 %v115, %v114
  %v121 = vpack.c.bf16 %v117, %v116
  %v122 = vpack.c.bf16 %v119, %v118
  %v123 = vld [vmem:[%s5] sm:$0x1]
  %v125 = vperm.slane %v123, 0
  %v128 = vsel %vm54, %v120, 0
  %130 = vmatpush.bf16.msra.mxu0 0
  %131 = vmatpush.bf16.msra.mxu0 0
  %132 = vmatpush.bf16.msra.mxu0 0
  %133 = vmatpush.bf16.msra.mxu0 0
  %134 = vmatpush.bf16.msra.mxu0 0
  %135 = vmatpush.bf16.msra.mxu0 0
  %136 = vmatpush.bf16.msra.mxu0 %v122
  %137 = vmatpush.bf16.msra.mxu0 %v121
  %138 = vmatmul.bf16.gmra.mxu0 %v128
  %v139 = vpop.f32.mrf.mxu0
  %v140 = vadd.f32 %v125, %v139
  %v141 = vpop.f32.mrf.mxu0
  %v142 = vadd.f32 %v125, %v141
  %143 = vdwg.mxu0
  %v144 = vmul.f32 %v140, 0.35355338
  %v145 = vmul.f32 %v142, 0.35355338
  %v146 = vpack.c.bf16 %v145, %v144
  %v147 = vpack.c.bf16 %v142, %v140
  %149 = vrot.lane.b32.xlu0 %v147, 96
  %v150 = vpop.permute.xlu0 %149
  %vm151 = vcmask 64512
  %v153 = vsel %vm151, %v146, 0
  %v156 = vsel %vm151, %v150, 0
  %158 = vmatpush.bf16.xpose.msra.mxu0 0
  %159 = vmatpush.bf16.xpose.msra.mxu0 0
  %160 = vmatpush.bf16.xpose.msra.mxu0 0
  %161 = vmatpush.bf16.xpose.msra.mxu0 0
  %162 = vmatpush.bf16.xpose.msra.mxu0 0
  %163 = vmatpush.bf16.xpose.msra.mxu0 0
  %164 = vmatpush.bf16.xpose.msra.mxu0 0
  %165 = vmatpush.bf16.xpose.msra.mxu0 %v156
  %166 = vmatmul.bf16.gmra.mxu0 %v153
  %v167 = vpop.f32.mrf.mxu0
  %v168 = vadd.f32 %v50, %v167
  %v169 = vpop.f32.mrf.mxu0
  %v170 = vadd.f32 %v51, %v169
  %171 = vdwg.mxu0
  %vm172 = vcmask 130048
  %v173 = vsel %vm172, %v168, -inf
  %174 = vmax.xlane.f32.xlu0 %v173
  %v175 = vpop.xlane.xlu0 %174
  %v176 = vsel %vm172, %v170, -inf
  %177 = vmax.xlane.f32.xlu0 %v176
  %v178 = vpop.xlane.xlu0 %177
  %v179 = vsub.f32 %v168, %v175
  %v180 = vsub.f32 %v170, %v178
  %v181 = vmul.f32 %v179, 1.442695
  %v182 = vpow.pop %v181
  %v183 = vmul.f32 %v180, 1.442695
  %v184 = vpow.pop %v183
  %v185 = vsel %vm172, %v182, 0.0
  %186 = vadd.xlane.f32.xlu0 %v185
  %v187 = vpop.xlane.xlu0 %186
  %v188 = vsel %vm172, %v184, 0.0
  %189 = vadd.xlane.f32.xlu0 %v188
  %v190 = vpop.xlane.xlu0 %189
  %v191 = vrcp.pop %v187
  %v192 = vmul.f32 %v187, %v191
  %v193 = vsub.f32 1.0, %v192
  %v194 = vmul.f32 %v191, %v193
  %v195 = vadd.f32 %v191, %v194
  %vm196 = vweird.f32 %v187
  %vm197 = vweird.f32 %v191
  %vm198 = vmor %vm196, %vm197
  %v199 = vsel %vm198, %v191, %v195
  %v200 = vand.u32 2147483647, %v187
  %vm201 = vcmp.eq.f32.partialorder %v200, 8.507059e+37
  %v202 = vand.u32 %v187, 2147483648
  %v203 = vor.u32 1.1754944e-38, %v202
  %v204 = vsel %vm201, %v203, %v199
  %v205 = vmul.f32 %v182, %v204
  %v206 = vrcp.pop %v190
  %v207 = vmul.f32 %v190, %v206
  %v208 = vsub.f32 1.0, %v207
  %v209 = vmul.f32 %v206, %v208
  %v210 = vadd.f32 %v206, %v209
  %vm211 = vweird.f32 %v190
  %vm212 = vweird.f32 %v206
  %vm213 = vmor %vm211, %vm212
  %v214 = vsel %vm213, %v206, %v210
  %v215 = vand.u32 2147483647, %v190
  %vm216 = vcmp.eq.f32.partialorder %v215, 8.507059e+37
  %v217 = vand.u32 %v190, 2147483648
  %v218 = vor.u32 1.1754944e-38, %v217
  %v219 = vsel %vm216, %v218, %v214
  %v220 = vmul.f32 %v184, %v219
  %v221 = vpack.c.bf16 %v220, %v205
  %222 = vrot.lane.b32.xlu0 %v147, 64
  %v223 = vpop.permute.xlu0 %222
  %v226 = vsel %vm172, %v221, 0
  %228 = vmatpush.bf16.msra.mxu0 0
  %229 = vmatpush.bf16.msra.mxu0 0
  %230 = vmatpush.bf16.msra.mxu0 0
  %231 = vmatpush.bf16.msra.mxu0 0
  %232 = vmatpush.bf16.msra.mxu0 0
  %233 = vmatpush.bf16.msra.mxu0 0
  %234 = vmatpush.bf16.msra.mxu0 0
  %235 = vmatpush.bf16.msra.mxu0 %v223
  %236 = vmatmul.bf16.gmra.mxu0 %v226
  %v237 = vpop.f32.mrf.mxu0
  %v238 = vadd.f32 0.0, %v237
  %v239 = vpop.f32.mrf.mxu0
  %v240 = vadd.f32 0.0, %v239
  %241 = vdwg.mxu0
  %v242 = vld [vmem:[%s6] sm:$0xff]
  %v243 = vpack.c.bf16 %v240, %v238
  %v244 = vpack.c.bf16 %v242, %v242
  %246 = vrot.lane.b32.xlu0 %v146, 120
  %v247 = vpop.permute.xlu0 %246
  %248 = vrot.lane.b32.xlu0 %v147, 88
  %v249 = vpop.permute.xlu0 %248
  %v251 = vsel %vm151, %v247, 0
  %v254 = vsel %vm151, %v249, 0
  %256 = vmatpush.bf16.xpose.msra.mxu0 0
  %257 = vmatpush.bf16.xpose.msra.mxu0 0
  %258 = vmatpush.bf16.xpose.msra.mxu0 0
  %259 = vmatpush.bf16.xpose.msra.mxu0 0
  %260 = vmatpush.bf16.xpose.msra.mxu0 0
  %261 = vmatpush.bf16.xpose.msra.mxu0 0
  %262 = vmatpush.bf16.xpose.msra.mxu0 0
  %263 = vmatpush.bf16.xpose.msra.mxu0 %v254
  %264 = vmatmul.bf16.gmra.mxu0 %v251
  %v265 = vpop.f32.mrf.mxu0
  %v266 = vadd.f32 %v50, %v265
  %v267 = vpop.f32.mrf.mxu0
  %v268 = vadd.f32 %v51, %v267
  %269 = vdwg.mxu0
  %v270 = vsel %vm172, %v266, -inf
  %271 = vmax.xlane.f32.xlu0 %v270
  %v272 = vpop.xlane.xlu0 %271
  %v273 = vsel %vm172, %v268, -inf
  %274 = vmax.xlane.f32.xlu0 %v273
  %v275 = vpop.xlane.xlu0 %274
  %v276 = vsub.f32 %v266, %v272
  %v277 = vsub.f32 %v268, %v275
  %v278 = vmul.f32 %v276, 1.442695
  %v279 = vpow.pop %v278
  %v280 = vmul.f32 %v277, 1.442695
  %v281 = vpow.pop %v280
  %v282 = vsel %vm172, %v279, 0.0
  %283 = vadd.xlane.f32.xlu0 %v282
  %v284 = vpop.xlane.xlu0 %283
  %v285 = vsel %vm172, %v281, 0.0
  %286 = vadd.xlane.f32.xlu0 %v285
  %v287 = vpop.xlane.xlu0 %286
  %v288 = vrcp.pop %v284
  %v289 = vmul.f32 %v284, %v288
  %v290 = vsub.f32 1.0, %v289
  %v291 = vmul.f32 %v288, %v290
  %v292 = vadd.f32 %v288, %v291
  %vm293 = vweird.f32 %v284
  %vm294 = vweird.f32 %v288
  %vm295 = vmor %vm293, %vm294
  %v296 = vsel %vm295, %v288, %v292
  %v297 = vand.u32 2147483647, %v284
  %vm298 = vcmp.eq.f32.partialorder %v297, 8.507059e+37
  %v299 = vand.u32 %v284, 2147483648
  %v300 = vor.u32 1.1754944e-38, %v299
  %v301 = vsel %vm298, %v300, %v296
  %v302 = vmul.f32 %v279, %v301
  %v303 = vrcp.pop %v287
  %v304 = vmul.f32 %v287, %v303
  %v305 = vsub.f32 1.0, %v304
  %v306 = vmul.f32 %v303, %v305
  %v307 = vadd.f32 %v303, %v306
  %vm308 = vweird.f32 %v287
  %vm309 = vweird.f32 %v303
  %vm310 = vmor %vm308, %vm309
  %v311 = vsel %vm310, %v303, %v307
  %v312 = vand.u32 2147483647, %v287
  %vm313 = vcmp.eq.f32.partialorder %v312, 8.507059e+37
  %v314 = vand.u32 %v287, 2147483648
  %v315 = vor.u32 1.1754944e-38, %v314
  %v316 = vsel %vm313, %v315, %v311
  %v317 = vmul.f32 %v281, %v316
  %v318 = vpack.c.bf16 %v317, %v302
  %319 = vrot.lane.b32.xlu0 %v147, 56
  %v320 = vpop.permute.xlu0 %319
  %v323 = vsel %vm172, %v318, 0
  %325 = vmatpush.bf16.msra.mxu0 0
  %326 = vmatpush.bf16.msra.mxu0 0
  %327 = vmatpush.bf16.msra.mxu0 0
  %328 = vmatpush.bf16.msra.mxu0 0
  %329 = vmatpush.bf16.msra.mxu0 0
  %330 = vmatpush.bf16.msra.mxu0 0
  %331 = vmatpush.bf16.msra.mxu0 0
  %332 = vmatpush.bf16.msra.mxu0 %v320
  %333 = vmatmul.bf16.gmra.mxu0 %v323
  %v334 = vpop.f32.mrf.mxu0
  %v335 = vadd.f32 0.0, %v334
  %v336 = vpop.f32.mrf.mxu0
  %v337 = vadd.f32 0.0, %v336
  %338 = vdwg.mxu0
  %v339 = vld [vmem:[%s6 + $0x8] sm:$0xff]
  %v340 = vpack.c.bf16 %v337, %v335
  %v341 = vpack.c.bf16 %v339, %v339
  %v343 = vsel %vm151, %v340, 0
  %vm345 = vcmask 1043456
  %v347 = vsel %vm345, %v341, 0
  %349 = vmatpush.bf16.msra.mxu0 0
  %350 = vmatpush.bf16.msra.mxu0 0
  %351 = vmatpush.bf16.msra.mxu0 0
  %352 = vmatpush.bf16.msra.mxu0 0
  %353 = vmatpush.bf16.msra.mxu0 0
  %354 = vmatpush.bf16.msra.mxu0 0
  %355 = vmatpush.bf16.msra.mxu0 0
  %356 = vmatpush.bf16.msra.mxu0 %v347
  %357 = vmatmul.bf16.gmra.mxu0 %v343
  %v358 = vpop.f32.mrf.mxu0
  %v359 = vadd.f32 0.0, %v358
  %v360 = vpop.f32.mrf.mxu0
  %v361 = vadd.f32 0.0, %v360
  %362 = vdwg.mxu0
  %v364 = vsel %vm151, %v243, 0
  %v367 = vsel %vm345, %v244, 0
  %369 = vmatpush.bf16.msra.mxu0 0
  %370 = vmatpush.bf16.msra.mxu0 0
  %371 = vmatpush.bf16.msra.mxu0 0
  %372 = vmatpush.bf16.msra.mxu0 0
  %373 = vmatpush.bf16.msra.mxu0 0
  %374 = vmatpush.bf16.msra.mxu0 0
  %375 = vmatpush.bf16.msra.mxu0 0
  %376 = vmatpush.bf16.msra.mxu0 %v367
  %377 = vmatmul.bf16.gmra.mxu0 %v364
  %v378 = vpop.f32.mrf.mxu0
  %v379 = vadd.f32 %v359, %v378
  %v380 = vpop.f32.mrf.mxu0
  %v381 = vadd.f32 %v361, %v380
  %382 = vdwg.mxu0
  %383 = vrot.lane.b32.xlu0 %v146, 112
  %v384 = vpop.permute.xlu0 %383
  %385 = vrot.lane.b32.xlu0 %v147, 80
  %v386 = vpop.permute.xlu0 %385
  %v388 = vsel %vm151, %v384, 0
  %v391 = vsel %vm151, %v386, 0
  %393 = vmatpush.bf16.xpose.msra.mxu0 0
  %394 = vmatpush.bf16.xpose.msra.mxu0 0
  %395 = vmatpush.bf16.xpose.msra.mxu0 0
  %396 = vmatpush.bf16.xpose.msra.mxu0 0
  %397 = vmatpush.bf16.xpose.msra.mxu0 0
  %398 = vmatpush.bf16.xpose.msra.mxu0 0
  %399 = vmatpush.bf16.xpose.msra.mxu0 0
  %400 = vmatpush.bf16.xpose.msra.mxu0 %v391
  %401 = vmatmul.bf16.gmra.mxu0 %v388
  %v402 = vpop.f32.mrf.mxu0
  %v403 = vadd.f32 %v50, %v402
  %v404 = vpop.f32.mrf.mxu0
  %v405 = vadd.f32 %v51, %v404
  %406 = vdwg.mxu0
  %v407 = vsel %vm172, %v403, -inf
  %408 = vmax.xlane.f32.xlu0 %v407
  %v409 = vpop.xlane.xlu0 %408
  %v410 = vsel %vm172, %v405, -inf
  %411 = vmax.xlane.f32.xlu0 %v410
  %v412 = vpop.xlane.xlu0 %411
  %v413 = vsub.f32 %v403, %v409
  %v414 = vsub.f32 %v405, %v412
  %v415 = vmul.f32 %v413, 1.442695
  %v416 = vpow.pop %v415
  %v417 = vmul.f32 %v414, 1.442695
  %v418 = vpow.pop %v417
  %v419 = vsel %vm172, %v416, 0.0
  %420 = vadd.xlane.f32.xlu0 %v419
  %v421 = vpop.xlane.xlu0 %420
  %v422 = vsel %vm172, %v418, 0.0
  %423 = vadd.xlane.f32.xlu0 %v422
  %v424 = vpop.xlane.xlu0 %423
  %v425 = vrcp.pop %v421
  %v426 = vmul.f32 %v421, %v425
  %v427 = vsub.f32 1.0, %v426
  %v428 = vmul.f32 %v425, %v427
  %v429 = vadd.f32 %v425, %v428
  %vm430 = vweird.f32 %v421
  %vm431 = vweird.f32 %v425
  %vm432 = vmor %vm430, %vm431
  %v433 = vsel %vm432, %v425, %v429
  %v434 = vand.u32 2147483647, %v421
  %vm435 = vcmp.eq.f32.partialorder %v434, 8.507059e+37
  %v436 = vand.u32 %v421, 2147483648
  %v437 = vor.u32 1.1754944e-38, %v436
  %v438 = vsel %vm435, %v437, %v433
  %v439 = vmul.f32 %v416, %v438
  %v440 = vrcp.pop %v424
  %v441 = vmul.f32 %v424, %v440
  %v442 = vsub.f32 1.0, %v441
  %v443 = vmul.f32 %v440, %v442
  %v444 = vadd.f32 %v440, %v443
  %vm445 = vweird.f32 %v424
  %vm446 = vweird.f32 %v440
  %vm447 = vmor %vm445, %vm446
  %v448 = vsel %vm447, %v440, %v444
  %v449 = vand.u32 2147483647, %v424
  %vm450 = vcmp.eq.f32.partialorder %v449, 8.507059e+37
  %v451 = vand.u32 %v424, 2147483648
  %v452 = vor.u32 1.1754944e-38, %v451
  %v453 = vsel %vm450, %v452, %v448
  %v454 = vmul.f32 %v418, %v453
  %v455 = vpack.c.bf16 %v454, %v439
  %456 = vrot.lane.b32.xlu0 %v147, 48
  %v457 = vpop.permute.xlu0 %456
  %v460 = vsel %vm172, %v455, 0
  %462 = vmatpush.bf16.msra.mxu0 0
  %463 = vmatpush.bf16.msra.mxu0 0
  %464 = vmatpush.bf16.msra.mxu0 0
  %465 = vmatpush.bf16.msra.mxu0 0
  %466 = vmatpush.bf16.msra.mxu0 0
  %467 = vmatpush.bf16.msra.mxu0 0
  %468 = vmatpush.bf16.msra.mxu0 0
  %469 = vmatpush.bf16.msra.mxu0 %v457
  %470 = vmatmul.bf16.gmra.mxu0 %v460
  %v471 = vpop.f32.mrf.mxu0
  %v472 = vadd.f32 0.0, %v471
  %v473 = vpop.f32.mrf.mxu0
  %v474 = vadd.f32 0.0, %v473
  %475 = vdwg.mxu0
  %v476 = vld [vmem:[%s6 + $0x10] sm:$0xff]
  %v477 = vpack.c.bf16 %v474, %v472
  %v478 = vpack.c.bf16 %v476, %v476
  %v480 = vsel %vm151, %v477, 0
  %v483 = vsel %vm345, %v478, 0
  %485 = vmatpush.bf16.msra.mxu0 0
  %486 = vmatpush.bf16.msra.mxu0 0
  %487 = vmatpush.bf16.msra.mxu0 0
  %488 = vmatpush.bf16.msra.mxu0 0
  %489 = vmatpush.bf16.msra.mxu0 0
  %490 = vmatpush.bf16.msra.mxu0 0
  %491 = vmatpush.bf16.msra.mxu0 0
  %492 = vmatpush.bf16.msra.mxu0 %v483
  %493 = vmatmul.bf16.gmra.mxu0 %v480
  %v494 = vpop.f32.mrf.mxu0
  %v495 = vadd.f32 0.0, %v494
  %v496 = vpop.f32.mrf.mxu0
  %v497 = vadd.f32 0.0, %v496
  %498 = vdwg.mxu0
  %v499 = vadd.f32 %v379, %v495
  %v500 = vadd.f32 %v381, %v497
  %501 = vrot.lane.b32.xlu0 %v146, 104
  %v502 = vpop.permute.xlu0 %501
  %503 = vrot.lane.b32.xlu0 %v147, 72
  %v504 = vpop.permute.xlu0 %503
  %v506 = vsel %vm151, %v502, 0
  %v509 = vsel %vm151, %v504, 0
  %511 = vmatpush.bf16.xpose.msra.mxu0 0
  %512 = vmatpush.bf16.xpose.msra.mxu0 0
  %513 = vmatpush.bf16.xpose.msra.mxu0 0
  %514 = vmatpush.bf16.xpose.msra.mxu0 0
  %515 = vmatpush.bf16.xpose.msra.mxu0 0
  %516 = vmatpush.bf16.xpose.msra.mxu0 0
  %517 = vmatpush.bf16.xpose.msra.mxu0 0
  %518 = vmatpush.bf16.xpose.msra.mxu0 %v509
  %519 = vmatmul.bf16.gmra.mxu0 %v506
  %v520 = vpop.f32.mrf.mxu0
  %v521 = vadd.f32 %v50, %v520
  %v522 = vpop.f32.mrf.mxu0
  %v523 = vadd.f32 %v51, %v522
  %524 = vdwg.mxu0
  %v525 = vsel %vm172, %v521, -inf
  %526 = vmax.xlane.f32.xlu0 %v525
  %v527 = vpop.xlane.xlu0 %526
  %v528 = vsel %vm172, %v523, -inf
  %529 = vmax.xlane.f32.xlu0 %v528
  %v530 = vpop.xlane.xlu0 %529
  %v531 = vsub.f32 %v521, %v527
  %v532 = vsub.f32 %v523, %v530
  %v533 = vmul.f32 %v531, 1.442695
  %v534 = vpow.pop %v533
  %v535 = vmul.f32 %v532, 1.442695
  %v536 = vpow.pop %v535
  %v537 = vsel %vm172, %v534, 0.0
  %538 = vadd.xlane.f32.xlu0 %v537
  %v539 = vpop.xlane.xlu0 %538
  %v540 = vsel %vm172, %v536, 0.0
  %541 = vadd.xlane.f32.xlu0 %v540
  %v542 = vpop.xlane.xlu0 %541
  %v543 = vrcp.pop %v539
  %v544 = vmul.f32 %v539, %v543
  %v545 = vsub.f32 1.0, %v544
  %v546 = vmul.f32 %v543, %v545
  %v547 = vadd.f32 %v543, %v546
  %vm548 = vweird.f32 %v539
  %vm549 = vweird.f32 %v543
  %vm550 = vmor %vm548, %vm549
  %v551 = vsel %vm550, %v543, %v547
  %v552 = vand.u32 2147483647, %v539
  %vm553 = vcmp.eq.f32.partialorder %v552, 8.507059e+37
  %v554 = vand.u32 %v539, 2147483648
  %v555 = vor.u32 1.1754944e-38, %v554
  %v556 = vsel %vm553, %v555, %v551
  %v557 = vmul.f32 %v534, %v556
  %v558 = vrcp.pop %v542
  %v559 = vmul.f32 %v542, %v558
  %v560 = vsub.f32 1.0, %v559
  %v561 = vmul.f32 %v558, %v560
  %v562 = vadd.f32 %v558, %v561
  %vm563 = vweird.f32 %v542
  %vm564 = vweird.f32 %v558
  %vm565 = vmor %vm563, %vm564
  %v566 = vsel %vm565, %v558, %v562
  %v567 = vand.u32 2147483647, %v542
  %vm568 = vcmp.eq.f32.partialorder %v567, 8.507059e+37
  %v569 = vand.u32 %v542, 2147483648
  %v570 = vor.u32 1.1754944e-38, %v569
  %v571 = vsel %vm568, %v570, %v566
  %v572 = vmul.f32 %v536, %v571
  %v573 = vpack.c.bf16 %v572, %v557
  %574 = vrot.lane.b32.xlu0 %v147, 40
  %v575 = vpop.permute.xlu0 %574
  %v578 = vsel %vm172, %v573, 0
  %580 = vmatpush.bf16.msra.mxu0 0
  %581 = vmatpush.bf16.msra.mxu0 0
  %582 = vmatpush.bf16.msra.mxu0 0
  %583 = vmatpush.bf16.msra.mxu0 0
  %584 = vmatpush.bf16.msra.mxu0 0
  %585 = vmatpush.bf16.msra.mxu0 0
  %586 = vmatpush.bf16.msra.mxu0 0
  %587 = vmatpush.bf16.msra.mxu0 %v575
  %588 = vmatmul.bf16.gmra.mxu0 %v578
  %v589 = vpop.f32.mrf.mxu0
  %v590 = vadd.f32 0.0, %v589
  %v591 = vpop.f32.mrf.mxu0
  %v592 = vadd.f32 0.0, %v591
  %593 = vdwg.mxu0
  %v594 = vld [vmem:[%s6 + $0x18] sm:$0xff]
  %v595 = vpack.c.bf16 %v592, %v590
  %v596 = vpack.c.bf16 %v594, %v594
  %v598 = vsel %vm151, %v595, 0
  %v601 = vsel %vm345, %v596, 0
  %603 = vmatpush.bf16.msra.mxu0 0
  %604 = vmatpush.bf16.msra.mxu0 0
  %605 = vmatpush.bf16.msra.mxu0 0
  %606 = vmatpush.bf16.msra.mxu0 0
  %607 = vmatpush.bf16.msra.mxu0 0
  %608 = vmatpush.bf16.msra.mxu0 0
  %609 = vmatpush.bf16.msra.mxu0 0
  %610 = vmatpush.bf16.msra.mxu0 %v601
  %611 = vmatmul.bf16.gmra.mxu0 %v598
  %v612 = vpop.f32.mrf.mxu0
  %v613 = vadd.f32 0.0, %v612
  %v614 = vpop.f32.mrf.mxu0
  %v615 = vadd.f32 0.0, %v614
  %616 = vdwg.mxu0
  %v617 = vadd.f32 %v499, %v613
  %v618 = vadd.f32 %v500, %v615
  %v619 = vadd.f32 %v48, %v617
  %v620 = vadd.f32 %v49, %v618
  %v621 = vld [vmem:[%s7] sm:$0x1]
  %v623 = vperm.slane %v621, 0
  %v625 = vadd.f32 %v619, %v623
  %v626 = vadd.f32 %v620, %v623
  %v627 = vld [vmem:[%s8] sm:$0x1]
  %v628 = vld [vmem:[%s9] sm:$0x1]
  %v629 = vsel %vm54, %v625, 0.0
  %630 = vadd.xlane.f32.xlu0 %v629
  %v631 = vpop.xlane.xlu0 %630
  %v632 = vsel %vm54, %v626, 0.0
  %633 = vadd.xlane.f32.xlu0 %v632
  %v634 = vpop.xlane.xlu0 %633
  %v635 = vmul.f32 %v631, %v67
  %v636 = vmul.f32 %v634, %v67
  %v637 = vsub.f32 %v625, %v635
  %v638 = vsub.f32 %v626, %v636
  %v639 = vmul.f32 %v637, %v637
  %v640 = vmul.f32 %v638, %v638
  %v641 = vsel %vm54, %v639, 0.0
  %642 = vadd.xlane.f32.xlu0 %v641
  %v643 = vpop.xlane.xlu0 %642
  %v644 = vsel %vm54, %v640, 0.0
  %645 = vadd.xlane.f32.xlu0 %v644
  %v646 = vpop.xlane.xlu0 %645
  %v647 = vmul.f32 %v643, %v67
  %v648 = vmul.f32 %v646, %v67
  %v649 = vadd.f32 %v647, 1e-05
  %v650 = vadd.f32 %v648, 1e-05
  %v651 = vrsqrt.pop %v649
  %v652 = vmul.f32 %v651, %v649
  %v653 = vmul.f32 %v652, %v651
  %v654 = vmul.f32 0.5, %v653
  %v655 = vsub.f32 1.5, %v654
  %v656 = vmul.f32 %v651, %v655
  %vm657 = vweird.f32 %v649
  %vm658 = vweird.f32 %v651
  %vm659 = vmor %vm657, %vm658
  %v660 = vsel %vm659, %v651, %v656
  %v661 = vrsqrt.pop %v650
  %v662 = vmul.f32 %v661, %v650
  %v663 = vmul.f32 %v662, %v661
  %v664 = vmul.f32 0.5, %v663
  %v665 = vsub.f32 1.5, %v664
  %v666 = vmul.f32 %v661, %v665
  %vm667 = vweird.f32 %v650
  %vm668 = vweird.f32 %v661
  %vm669 = vmor %vm667, %vm668
  %v670 = vsel %vm669, %v661, %v666
  %v671 = vmul.f32 %v637, %v660
  %v672 = vmul.f32 %v638, %v670
  %v674 = vperm.slane %v627, 0
  %v676 = vmul.f32 %v671, %v674
  %v677 = vmul.f32 %v672, %v674
  %v679 = vperm.slane %v628, 0
  %v681 = vadd.f32 %v676, %v679
  %v682 = vadd.f32 %v677, %v679
  %v683 = vld [vmem:[%s10] sm:$0xff]
  %v684 = vld [vmem:[%s10 + $0x8] sm:$0xff]
  %v685 = vld [vmem:[%s10 + $0x10] sm:$0xff]
  %v686 = vld [vmem:[%s10 + $0x18] sm:$0xff]
  %v687 = vpack.c.bf16 %v682, %v681
  %v688 = vpack.c.bf16 %v684, %v683
  %v689 = vpack.c.bf16 %v686, %v685
  %v690 = vld [vmem:[%s11] sm:$0x1]
  %v692 = vperm.slane %v690, 0
  %v695 = vsel %vm54, %v687, 0
  %697 = vmatpush.bf16.msra.mxu0 0
  %698 = vmatpush.bf16.msra.mxu0 0
  %699 = vmatpush.bf16.msra.mxu0 0
  %700 = vmatpush.bf16.msra.mxu0 0
  %701 = vmatpush.bf16.msra.mxu0 0
  %702 = vmatpush.bf16.msra.mxu0 0
  %703 = vmatpush.bf16.msra.mxu0 %v689
  %704 = vmatpush.bf16.msra.mxu0 %v688
  %705 = vmatmul.bf16.gmra.mxu0 %v695
  %v706 = vpop.f32.mrf.mxu0
  %v707 = vadd.f32 %v692, %v706
  %v708 = vpop.f32.mrf.mxu0
  %v709 = vadd.f32 %v692, %v708
  %710 = vdwg.mxu0
  %v711 = vmul.f32 %v707, 1.702
  %v712 = vmul.f32 %v709, 1.702
  %v713 = vxor.u32 %v711, 2147483648
  %v714 = vxor.u32 %v712, 2147483648
  %v715 = vmul.f32 %v713, 1.442695
  %v716 = vpow.pop %v715
  %v717 = vmul.f32 %v714, 1.442695
  %v718 = vpow.pop %v717
  %v719 = vadd.f32 %v716, 1.0
  %v720 = vadd.f32 %v718, 1.0
  %v721 = vrcp.pop %v719
  %v722 = vmul.f32 %v719, %v721
  %v723 = vsub.f32 1.0, %v722
  %v724 = vmul.f32 %v721, %v723
  %v725 = vadd.f32 %v721, %v724
  %vm726 = vweird.f32 %v719
  %vm727 = vweird.f32 %v721
  %vm728 = vmor %vm726, %vm727
  %v729 = vsel %vm728, %v721, %v725
  %v730 = vand.u32 2147483647, %v719
  %vm731 = vcmp.eq.f32.partialorder %v730, 8.507059e+37
  %v732 = vand.u32 %v719, 2147483648
  %v733 = vor.u32 1.1754944e-38, %v732
  %v734 = vsel %vm731, %v733, %v729
  %v735 = vmul.f32 1.0, %v734
  %v736 = vrcp.pop %v720
  %v737 = vmul.f32 %v720, %v736
  %v738 = vsub.f32 1.0, %v737
  %v739 = vmul.f32 %v736, %v738
  %v740 = vadd.f32 %v736, %v739
  %vm741 = vweird.f32 %v720
  %vm742 = vweird.f32 %v736
  %vm743 = vmor %vm741, %vm742
  %v744 = vsel %vm743, %v736, %v740
  %v745 = vand.u32 2147483647, %v720
  %vm746 = vcmp.eq.f32.partialorder %v745, 8.507059e+37
  %v747 = vand.u32 %v720, 2147483648
  %v748 = vor.u32 1.1754944e-38, %v747
  %v749 = vsel %vm746, %v748, %v744
  %v750 = vmul.f32 1.0, %v749
  %v751 = vmul.f32 %v707, %v735
  %v752 = vmul.f32 %v709, %v750
  %v753 = vld [vmem:[%s12] sm:$0xff]
  %v754 = vld [vmem:[%s12 + $0x8] sm:$0xff]
  %v755 = vld [vmem:[%s12 + $0x10] sm:$0xff]
  %v756 = vld [vmem:[%s12 + $0x18] sm:$0xff]
  %v757 = vld [vmem:[%s12 + $0x20] sm:$0xff]
  %v758 = vld [vmem:[%s12 + $0x28] sm:$0xff]
  %v759 = vld [vmem:[%s12 + $0x30] sm:$0xff]
  %v760 = vld [vmem:[%s12 + $0x38] sm:$0xff]
  %v761 = vld [vmem:[%s12 + $0x40] sm:$0xff]
  %v762 = vld [vmem:[%s12 + $0x48] sm:$0xff]
  %v763 = vld [vmem:[%s12 + $0x50] sm:$0xff]
  %v764 = vld [vmem:[%s12 + $0x58] sm:$0xff]
  %v765 = vld [vmem:[%s12 + $0x60] sm:$0xff]
  %v766 = vld [vmem:[%s12 + $0x68] sm:$0xff]
  %v767 = vld [vmem:[%s12 + $0x70] sm:$0xff]
  %v768 = vld [vmem:[%s12 + $0x78] sm:$0xff]
  %v769 = vpack.c.bf16 %v752, %v751
  %v770 = vpack.c.bf16 %v754, %v753
  %v771 = vpack.c.bf16 %v756, %v755
  %v772 = vpack.c.bf16 %v758, %v757
  %v773 = vpack.c.bf16 %v760, %v759
  %v774 = vpack.c.bf16 %v762, %v761
  %v775 = vpack.c.bf16 %v764, %v763
  %v776 = vpack.c.bf16 %v766, %v765
  %v777 = vpack.c.bf16 %v768, %v767
  %v778 = vld [vmem:[%s13] sm:$0x1]
  %v780 = vperm.slane %v778, 0
  %782 = vmatpush.bf16.msra.mxu0 %v777
  %783 = vmatpush.bf16.msra.mxu0 %v776
  %784 = vmatpush.bf16.msra.mxu0 %v775
  %785 = vmatpush.bf16.msra.mxu0 %v774
  %786 = vmatpush.bf16.msra.mxu0 %v773
  %787 = vmatpush.bf16.msra.mxu0 %v772
  %788 = vmatpush.bf16.msra.mxu0 %v771
  %789 = vmatpush.bf16.msra.mxu0 %v770
  %790 = vmatmul.bf16.gmra.mxu0 %v769
  %v791 = vpop.f32.mrf.mxu0
  %v792 = vadd.f32 %v780, %v791
  %v793 = vpop.f32.mrf.mxu0
  %v794 = vadd.f32 %v780, %v793
  %795 = vdwg.mxu0
  %v796 = vadd.f32 %v625, %v792
  %v797 = vadd.f32 %v626, %v794
  %798 = vst.msk [vmem:[%s14] sm:$0xff] %vm54, %v796
  %799 = vst.msk [vmem:[%s14 + $0x8] sm:$0xff] %vm54, %v797
  // Predicated region
  $region58: #{custom_clip_forward.16} parent=0 // pred_check
    _
  $region59: #{custom_clip_forward.16} parent=0 // pred_check_branch
    %801 = sbr.rel (0) target = $region61
  $region60: #{custom_clip_forward.16} parent=0 // pred_region
    _
  $region61: #{custom_clip_forward.16} parent=0 // pred_fallthru
    _
  // Predicated region
  $region62: #{custom_clip_forward.16} parent=0 // pred_check
    _
  $region63: #{custom_clip_forward.16} parent=0 // pred_check_branch
    %803 = sbr.rel (0) target = $region65
  $region64: #{custom_clip_forward.16} parent=0 // pred_region
    _
  $region65: #{custom_clip_forward.16} parent=0 // pred_fallthru
    _

// kernel: custom_clip_forward.19
$region0: #{custom_clip_forward.19}
  #allocation0 [shape = 'u32[]', space=smem, size = 0x4, offset = 0x4, fixed_abs, tag = 'smem constant byte address 0x4 - core index']
  #allocation1 [shape = 'u32[72,128]{1,0:T(1,128)}', space=vmem, size = 0x9000, scoped, tag = 'internal scratch']
  %s0 = inlined_call_operand.vmem [shape: f32[2,32], index: 0, kind: input, shape index: {}]
  %s1 = inlined_call_operand.vmem [shape: f32[1,32], index: 1, kind: input, shape index: {}]
  %s2 = inlined_call_operand.vmem [shape: f32[1,32], index: 2, kind: input, shape index: {}]
  %s3 = inlined_call_operand.vmem [shape: f32[32,32], index: 3, kind: input, shape index: {}]
  %s4 = inlined_call_operand.vmem [shape: f32[2,32], index: 4, kind: output, shape index: {}]
  %s5 = sld [smem:[#allocation0]]
  $region26: #{custom_clip_forward.19} parent=0
    _
  %s7 = ssub.s32 1, %s5
  %s8 = scalar_select 0, %s7, %s5
  // Predicated region
  $region2: #{custom_clip_forward.19} parent=0 // pred_check
    _
  $region3: #{custom_clip_forward.19} parent=0 // pred_check_branch
    %10 = sbr.rel (0) target = $region5
  $region4: #{custom_clip_forward.19} parent=0 // pred_region
    _
  $region5: #{custom_clip_forward.19} parent=0 // pred_fallthru
    _
  // Predicated region
  $region6: #{custom_clip_forward.19} parent=0 // pred_check
    _
  $region7: #{custom_clip_forward.19} parent=0 // pred_check_branch
    %12 = sbr.rel (0) target = $region9
  $region8: #{custom_clip_forward.19} parent=0 // pred_region
    _
  $region9: #{custom_clip_forward.19} parent=0 // pred_fallthru
    _
  // Predicated region
  $region10: #{custom_clip_forward.19} parent=0 // pred_check
    _
  $region11: #{custom_clip_forward.19} parent=0 // pred_check_branch
    %14 = sbr.rel (0) target = $region13
  $region12: #{custom_clip_forward.19} parent=0 // pred_region
    _
  $region13: #{custom_clip_forward.19} parent=0 // pred_fallthru
    _
  // Predicated region
  $region14: #{custom_clip_forward.19} parent=0 // pred_check
    _
  $region15: #{custom_clip_forward.19} parent=0 // pred_check_branch
    %16 = sbr.rel (0) target = $region17
  $region16: #{custom_clip_forward.19} parent=0 // pred_region
    _
  $region17: #{custom_clip_forward.19} parent=0 // pred_fallthru
    _
  %v18 = vld [vmem:[%s0] sm:$0x3]
  %v19 = vld [vmem:[%s1] sm:$0x1]
  %v20 = vld [vmem:[%s2] sm:$0x1]
  %vm21 = vcmask 254976
  %v22 = vsel %vm21, %v18, 0.0
  %23 = vadd.xlane.f32.xlu0 %v22
  %v24 = vpop.xlane.xlu0 %23
  %v25 = vrcp.pop 32.0
  %v26 = vmul.f32 32.0, %v25
  %v27 = vsub.f32 1.0, %v26
  %v28 = vmul.f32 %v25, %v27
  %v29 = vadd.f32 %v25, %v28
  %vm30 = vweird.f32 %v25
  %v31 = vsel %vm30, %v25, %v29
  %v32 = vmul.f32 %v24, %v31
  %v33 = vsub.f32 %v18, %v32
  %v34 = vmul.f32 %v33, %v33
  %v35 = vsel %vm21, %v34, 0.0
  %36 = vadd.xlane.f32.xlu0 %v35
  %v37 = vpop.xlane.xlu0 %36
  %v38 = vmul.f32 %v37, %v31
  %v39 = vadd.f32 %v38, 1e-05
  %v40 = vrsqrt.pop %v39
  %v41 = vmul.f32 %v40, %v39
  %v42 = vmul.f32 %v41, %v40
  %v43 = vmul.f32 0.5, %v42
  %v44 = vsub.f32 1.5, %v43
  %v45 = vmul.f32 %v40, %v44
  %vm46 = vweird.f32 %v39
  %vm47 = vweird.f32 %v40
  %vm48 = vmor %vm46, %vm47
  %v49 = vsel %vm48, %v40, %v45
  %v50 = vmul.f32 %v33, %v49
  %v52 = vperm.slane %v19, 0
  %v54 = vmul.f32 %v50, %v52
  %v56 = vperm.slane %v20, 0
  %v58 = vadd.f32 %v54, %v56
  %v59 = vld [vmem:[%s3] sm:$0xff]
  %v60 = vld [vmem:[%s3 + $0x8] sm:$0xff]
  %v61 = vld [vmem:[%s3 + $0x10] sm:$0xff]
  %v62 = vld [vmem:[%s3 + $0x18] sm:$0xff]
  %v63 = vpack.c.bf16 %v58, %v58
  %v64 = vpack.c.bf16 %v60, %v59
  %v65 = vpack.c.bf16 %v62, %v61
  %vm66 = vcmask 261120
  %v68 = vsel %vm66, %v63, 0
  %70 = vmatpush.bf16.msra.mxu0 0
  %71 = vmatpush.bf16.msra.mxu0 0
  %72 = vmatpush.bf16.msra.mxu0 0
  %73 = vmatpush.bf16.msra.mxu0 0
  %74 = vmatpush.bf16.msra.mxu0 0
  %75 = vmatpush.bf16.msra.mxu0 0
  %76 = vmatpush.bf16.msra.mxu0 %v65
  %77 = vmatpush.bf16.msra.mxu0 %v64
  %78 = vmatmul.bf16.gmra.mxu0 %v68
  %v79 = vpop.f32.mrf.mxu0
  %v80 = vadd.f32 0.0, %v79
  %v81 = vpop.f32.mrf.mxu0
  %82 = vdwg.mxu0
  %83 = vst.msk [vmem:[%s4] sm:$0x3] %vm21, %v80
  // Predicated region
  $region18: #{custom_clip_forward.19} parent=0 // pred_check
    _
  $region19: #{custom_clip_forward.19} parent=0 // pred_check_branch
    %85 = sbr.rel (0) target = $region21
  $region20: #{custom_clip_forward.19} parent=0 // pred_region
    _
  $region21: #{custom_clip_forward.19} parent=0 // pred_fallthru
    _
  // Predicated region
  $region22: #{custom_clip_forward.19} parent=0 // pred_check
    _
  $region23: #{custom_clip_forward.19} parent=0 // pred_check_branch
    %87 = sbr.rel (0) target = $region25
  $region24: #{custom_clip_forward.19} parent=0 // pred_region
    _
  $region25: #{custom_clip_forward.19} parent=0 // pred_fallthru
    _

// kernel: custom_clip_forward.13
$region0: #{custom_clip_forward.13}
  #allocation0 [shape = 'u32[]', space=smem, size = 0x4, offset = 0x4, fixed_abs, tag = 'smem constant byte address 0x4 - core index']
  #allocation1 [shape = 'u32[72,128]{1,0:T(1,128)}', space=vmem, size = 0x9000, scoped, tag = 'internal scratch']
  %s0 = inlined_call_operand.vmem [shape: f32[16,192], index: 0, kind: input, shape index: {}]
  %s1 = inlined_call_operand.vmem [shape: f32[192,64], index: 1, kind: input, shape index: {}]
  %s2 = inlined_call_operand.vmem [shape: f32[16,64], index: 2, kind: output, shape index: {}]
  %s3 = sld [smem:[#allocation0]]
  $region18: #{custom_clip_forward.13} parent=0
    _
  %s5 = ssub.s32 1, %s3
  %s6 = scalar_select 0, %s5, %s3
  // Predicated region
  $region2: #{custom_clip_forward.13} parent=0 // pred_check
    _
  $region3: #{custom_clip_forward.13} parent=0 // pred_check_branch
    %8 = sbr.rel (0) target = $region5
  $region4: #{custom_clip_forward.13} parent=0 // pred_region
    _
  $region5: #{custom_clip_forward.13} parent=0 // pred_fallthru
    _
  // Predicated region
  $region6: #{custom_clip_forward.13} parent=0 // pred_check
    _
  $region7: #{custom_clip_forward.13} parent=0 // pred_check_branch
    %10 = sbr.rel (0) target = $region9
  $region8: #{custom_clip_forward.13} parent=0 // pred_region
    _
  $region9: #{custom_clip_forward.13} parent=0 // pred_fallthru
    _
  %v12 = vld [vmem:[%s0] sm:$0xff]
  %v13 = vld [vmem:[%s0 + $0x8] sm:$0xff]
  %v14 = vld [vmem:[%s0 + $0x10] sm:$0xff]
  %v15 = vld [vmem:[%s0 + $0x18] sm:$0xff]
  %v16 = vld [vmem:[%s1] sm:$0xff]
  %v17 = vld [vmem:[%s1 + $0x8] sm:$0xff]
  %v18 = vld [vmem:[%s1 + $0x10] sm:$0xff]
  %v19 = vld [vmem:[%s1 + $0x18] sm:$0xff]
  %v20 = vld [vmem:[%s1 + $0x20] sm:$0xff]
  %v21 = vld [vmem:[%s1 + $0x28] sm:$0xff]
  %v22 = vld [vmem:[%s1 + $0x30] sm:$0xff]
  %v23 = vld [vmem:[%s1 + $0x38] sm:$0xff]
  %v24 = vld [vmem:[%s1 + $0x40] sm:$0xff]
  %v25 = vld [vmem:[%s1 + $0x48] sm:$0xff]
  %v26 = vld [vmem:[%s1 + $0x50] sm:$0xff]
  %v27 = vld [vmem:[%s1 + $0x58] sm:$0xff]
  %v28 = vld [vmem:[%s1 + $0x60] sm:$0xff]
  %v29 = vld [vmem:[%s1 + $0x68] sm:$0xff]
  %v30 = vld [vmem:[%s1 + $0x70] sm:$0xff]
  %v31 = vld [vmem:[%s1 + $0x78] sm:$0xff]
  %v32 = vld [vmem:[%s1 + $0x80] sm:$0xff]
  %v33 = vld [vmem:[%s1 + $0x88] sm:$0xff]
  %v34 = vld [vmem:[%s1 + $0x90] sm:$0xff]
  %v35 = vld [vmem:[%s1 + $0x98] sm:$0xff]
  %v36 = vld [vmem:[%s1 + $0xa0] sm:$0xff]
  %v37 = vld [vmem:[%s1 + $0xa8] sm:$0xff]
  %v38 = vld [vmem:[%s1 + $0xb0] sm:$0xff]
  %v39 = vld [vmem:[%s1 + $0xb8] sm:$0xff]
  %v40 = vpack.c.bf16 %v14, %v12
  %v41 = vpack.c.bf16 %v15, %v13
  %v42 = vpack.c.bf16 %v17, %v16
  %v43 = vpack.c.bf16 %v19, %v18
  %v44 = vpack.c.bf16 %v21, %v20
  %v45 = vpack.c.bf16 %v23, %v22
  %v46 = vpack.c.bf16 %v25, %v24
  %v47 = vpack.c.bf16 %v27, %v26
  %v48 = vpack.c.bf16 %v29, %v28
  %v49 = vpack.c.bf16 %v31, %v30
  %v50 = vpack.c.bf16 %v33, %v32
  %v51 = vpack.c.bf16 %v35, %v34
  %v52 = vpack.c.bf16 %v37, %v36
  %v53 = vpack.c.bf16 %v39, %v38
  %vm54 = vcmask 523264
  %v56 = vsel %vm54, %v41, 0
  %58 = vmatpush.bf16.msra.mxu0 %v49
  %59 = vmatpush.bf16.msra.mxu0 %v48
  %60 = vmatpush.bf16.msra.mxu0 %v47
  %61 = vmatpush.bf16.msra.mxu0 %v46
  %62 = vmatpush.bf16.msra.mxu0 %v45
  %63 = vmatpush.bf16.msra.mxu0 %v44
  %64 = vmatpush.bf16.msra.mxu0 %v43
  %65 = vmatpush.bf16.msra.mxu0 %v42
  %66 = vmatmul.bf16.gmra.mxu0 %v40
  %v67 = vpop.f32.mrf.mxu0
  %v68 = vadd.f32 0.0, %v67
  %v69 = vpop.f32.mrf.mxu0
  %v70 = vadd.f32 0.0, %v69
  %71 = vdwg.mxu0
  %72 = vmatpush.bf16.msra.mxu0 0
  %73 = vmatpush.bf16.msra.mxu0 0
  %74 = vmatpush.bf16.msra.mxu0 0
  %75 = vmatpush.bf16.msra.mxu0 0
  %76 = vmatpush.bf16.msra.mxu0 %v53
  %77 = vmatpush.bf16.msra.mxu0 %v52
  %78 = vmatpush.bf16.msra.mxu0 %v51
  %79 = vmatpush.bf16.msra.mxu0 %v50
  %80 = vmatmul.bf16.gmra.mxu0 %v56
  %v81 = vpop.f32.mrf.mxu0
  %v82 = vadd.f32 %v68, %v81
  %v83 = vpop.f32.mrf.mxu0
  %v84 = vadd.f32 %v70, %v83
  %85 = vdwg.mxu0
  %86 = vst.msk [vmem:[%s2] sm:$0xff] %vm54, %v82
  %87 = vst.msk [vmem:[%s2 + $0x8] sm:$0xff] %vm54, %v84
  // Predicated region
  $region10: #{custom_clip_forward.13} parent=0 // pred_check
    _
  $region11: #{custom_clip_forward.13} parent=0 // pred_check_branch
    %89 = sbr.rel (0) target = $region13
  $region12: #{custom_clip_forward.13} parent=0 // pred_region
    _
  $region13: #{custom_clip_forward.13} parent=0 // pred_fallthru
    _
  // Predicated region
  $region14: #{custom_clip_forward.13} parent=0 // pred_check
    _
  $region15: #{custom_clip_forward.13} parent=0 // pred_check_branch
    %91 = sbr.rel (0) target = $region17
  $region16: #{custom_clip_forward.13} parent=0 // pred_region
    _
  $region17: #{custom_clip_forward.13} parent=0 // pred_fallthru
    _

// kernel: custom_clip_forward.20
$region0: #{custom_clip_forward.20}
  #allocation0 [shape = 'u32[]', space=smem, size = 0x4, offset = 0x4, fixed_abs, tag = 'smem constant byte address 0x4 - core index']
  #allocation1 [shape = 'u32[72,128]{1,0:T(1,128)}', space=vmem, size = 0x9000, scoped, tag = 'internal scratch']
  %s0 = inlined_call_operand.vmem [shape: f32[18,64], index: 0, kind: input, shape index: {}]
  %s1 = inlined_call_operand.vmem [shape: f32[1,64], index: 1, kind: input, shape index: {}]
  %s2 = inlined_call_operand.vmem [shape: f32[1,64], index: 2, kind: input, shape index: {}]
  %s3 = inlined_call_operand.vmem [shape: f32[18,64], index: 3, kind: output, shape index: {}]
  %s4 = sld [smem:[#allocation0]]
  $region22: #{custom_clip_forward.20} parent=0
    _
  %s6 = ssub.s32 1, %s4
  %s7 = scalar_select 0, %s6, %s4
  // Predicated region
  $region2: #{custom_clip_forward.20} parent=0 // pred_check
    _
  $region3: #{custom_clip_forward.20} parent=0 // pred_check_branch
    %9 = sbr.rel (0) target = $region5
  $region4: #{custom_clip_forward.20} parent=0 // pred_region
    _
  $region5: #{custom_clip_forward.20} parent=0 // pred_fallthru
    _
  // Predicated region
  $region6: #{custom_clip_forward.20} parent=0 // pred_check
    _
  $region7: #{custom_clip_forward.20} parent=0 // pred_check_branch
    %11 = sbr.rel (0) target = $region9
  $region8: #{custom_clip_forward.20} parent=0 // pred_region
    _
  $region9: #{custom_clip_forward.20} parent=0 // pred_fallthru
    _
  // Predicated region
  $region10: #{custom_clip_forward.20} parent=0 // pred_check
    _
  $region11: #{custom_clip_forward.20} parent=0 // pred_check_branch
    %13 = sbr.rel (0) target = $region13
  $region12: #{custom_clip_forward.20} parent=0 // pred_region
    _
  $region13: #{custom_clip_forward.20} parent=0 // pred_fallthru
    _
  %v14 = vld [vmem:[%s0] sm:$0xff]
  %v15 = vld [vmem:[%s0 + $0x8] sm:$0xff]
  %v16 = vld [vmem:[%s0 + $0x10] sm:$0x3]
  %v17 = vld [vmem:[%s1] sm:$0x1]
  %v18 = vld [vmem:[%s2] sm:$0x1]
  %vm19 = vcmask 523264
  %v20 = vsel %vm19, %v14, 0.0
  %21 = vadd.xlane.f32.xlu0 %v20
  %v22 = vpop.xlane.xlu0 %21
  %v23 = vsel %vm19, %v15, 0.0
  %24 = vadd.xlane.f32.xlu0 %v23
  %v25 = vpop.xlane.xlu0 %24
  %vm26 = vcmask 517120
  %v27 = vsel %vm26, %v16, 0.0
  %28 = vadd.xlane.f32.xlu0 %v27
  %v29 = vpop.xlane.xlu0 %28
  %v30 = vrcp.pop 64.0
  %v31 = vmul.f32 64.0, %v30
  %v32 = vsub.f32 1.0, %v31
  %v33 = vmul.f32 %v30, %v32
  %v34 = vadd.f32 %v30, %v33
  %vm35 = vweird.f32 %v30
  %v36 = vsel %vm35, %v30, %v34
  %v37 = vmul.f32 %v22, %v36
  %v38 = vmul.f32 %v25, %v36
  %v39 = vmul.f32 %v29, %v36
  %v40 = vsub.f32 %v14, %v37
  %v41 = vsub.f32 %v15, %v38
  %v42 = vsub.f32 %v16, %v39
  %v43 = vmul.f32 %v40, %v40
  %v44 = vmul.f32 %v41, %v41
  %v45 = vmul.f32 %v42, %v42
  %v46 = vsel %vm19, %v43, 0.0
  %47 = vadd.xlane.f32.xlu0 %v46
  %v48 = vpop.xlane.xlu0 %47
  %v49 = vsel %vm19, %v44, 0.0
  %50 = vadd.xlane.f32.xlu0 %v49
  %v51 = vpop.xlane.xlu0 %50
  %v52 = vsel %vm26, %v45, 0.0
  %53 = vadd.xlane.f32.xlu0 %v52
  %v54 = vpop.xlane.xlu0 %53
  %v55 = vmul.f32 %v48, %v36
  %v56 = vmul.f32 %v51, %v36
  %v57 = vmul.f32 %v54, %v36
  %v58 = vadd.f32 %v55, 1e-05
  %v59 = vadd.f32 %v56, 1e-05
  %v60 = vadd.f32 %v57, 1e-05
  %v61 = vrsqrt.pop %v58
  %v62 = vmul.f32 %v61, %v58
  %v63 = vmul.f32 %v62, %v61
  %v64 = vmul.f32 0.5, %v63
  %v65 = vsub.f32 1.5, %v64
  %v66 = vmul.f32 %v61, %v65
  %vm67 = vweird.f32 %v58
  %vm68 = vweird.f32 %v61
  %vm69 = vmor %vm67, %vm68
  %v70 = vsel %vm69, %v61, %v66
  %v71 = vrsqrt.pop %v59
  %v72 = vmul.f32 %v71, %v59
  %v73 = vmul.f32 %v72, %v71
  %v74 = vmul.f32 0.5, %v73
  %v75 = vsub.f32 1.5, %v74
  %v76 = vmul.f32 %v71, %v75
  %vm77 = vweird.f32 %v59
  %vm78 = vweird.f32 %v71
  %vm79 = vmor %vm77, %vm78
  %v80 = vsel %vm79, %v71, %v76
  %v81 = vrsqrt.pop %v60
  %v82 = vmul.f32 %v81, %v60
  %v83 = vmul.f32 %v82, %v81
  %v84 = vmul.f32 0.5, %v83
  %v85 = vsub.f32 1.5, %v84
  %v86 = vmul.f32 %v81, %v85
  %vm87 = vweird.f32 %v60
  %vm88 = vweird.f32 %v81
  %vm89 = vmor %vm87, %vm88
  %v90 = vsel %vm89, %v81, %v86
  %v91 = vmul.f32 %v40, %v70
  %v92 = vmul.f32 %v41, %v80
  %v93 = vmul.f32 %v42, %v90
  %v95 = vperm.slane %v17, 0
  %v97 = vmul.f32 %v91, %v95
  %v98 = vmul.f32 %v92, %v95
  %v99 = vmul.f32 %v93, %v95
  %v101 = vperm.slane %v18, 0
  %v103 = vadd.f32 %v97, %v101
  %v104 = vadd.f32 %v98, %v101
  %v105 = vadd.f32 %v99, %v101
  %106 = vst.msk [vmem:[%s3] sm:$0xff] %vm19, %v103
  %107 = vst.msk [vmem:[%s3 + $0x8] sm:$0xff] %vm19, %v104
  %108 = vst.msk [vmem:[%s3 + $0x10] sm:$0x3] %vm26, %v105
  // Predicated region
  $region14: #{custom_clip_forward.20} parent=0 // pred_check
    _
  $region15: #{custom_clip_forward.20} parent=0 // pred_check_branch
    %110 = sbr.rel (0) target = $region17
  $region16: #{custom_clip_forward.20} parent=0 // pred_region
    _
  $region17: #{custom_clip_forward.20} parent=0 // pred_fallthru
    _
  // Predicated region
  $region18: #{custom_clip_forward.20} parent=0 // pred_check
    _
  $region19: #{custom_clip_forward.20} parent=0 // pred_check_branch
    %112 = sbr.rel (0) target = $region21
  $region20: #{custom_clip_forward.20} parent=0 // pred_region
    _
  $region21: #{custom_clip_forward.20} parent=0 // pred_fallthru
    _

// kernel: custom_clip_forward.15
$region0: #{custom_clip_forward.15}
  #allocation0 [shape = 'u32[]', space=smem, size = 0x4, offset = 0x4, fixed_abs, tag = 'smem constant byte address 0x4 - core index']
  #allocation1 [shape = 'u32[72,128]{1,0:T(1,128)}', space=vmem, size = 0x9000, scoped, tag = 'internal scratch']
  %s0 = inlined_call_operand.vmem [shape: f32[12,4,64], index: 0, kind: input, shape index: {}]
  %s1 = inlined_call_operand.vmem [shape: f32[12,64,64], index: 1, kind: input, shape index: {}]
  %s2 = inlined_call_operand.vmem [shape: f32[12,1,64], index: 2, kind: input, shape index: {}]
  %s3 = inlined_call_operand.vmem [shape: f32[12,4,64], index: 3, kind: output, shape index: {}]
  %s4 = sld [smem:[#allocation0]]
  $region22: #{custom_clip_forward.15} parent=0
    _
  %s6 = ssub.s32 1, %s4
  %s7 = scalar_select 0, %s6, %s4
  // Predicated region
  $region2: #{custom_clip_forward.15} parent=0 // pred_check
    _
  $region3: #{custom_clip_forward.15} parent=0 // pred_check_branch
    %9 = sbr.rel (0) target = $region5
  $region4: #{custom_clip_forward.15} parent=0 // pred_region
    _
  $region5: #{custom_clip_forward.15} parent=0 // pred_fallthru
    _
  // Predicated region
  $region6: #{custom_clip_forward.15} parent=0 // pred_check
    _
  $region7: #{custom_clip_forward.15} parent=0 // pred_check_branch
    %11 = sbr.rel (0) target = $region9
  $region8: #{custom_clip_forward.15} parent=0 // pred_region
    _
  $region9: #{custom_clip_forward.15} parent=0 // pred_fallthru
    _
  // Predicated region
  $region10: #{custom_clip_forward.15} parent=0 // pred_check
    _
  $region11: #{custom_clip_forward.15} parent=0 // pred_check_branch
    %13 = sbr.rel (0) target = $region13
  $region12: #{custom_clip_forward.15} parent=0 // pred_region
    _
  $region13: #{custom_clip_forward.15} parent=0 // pred_fallthru
    _
  %v15 = vld [vmem:[%s0] sm:$0xf]
  %v16 = vld [vmem:[%s0 + $0x4] sm:$0xf]
  %v17 = vld [vmem:[%s0 + $0x8] sm:$0xf]
  %v18 = vld [vmem:[%s0 + $0xc] sm:$0xf]
  %v19 = vld [vmem:[%s0 + $0x10] sm:$0xf]
  %v20 = vld [vmem:[%s0 + $0x14] sm:$0xf]
  %v21 = vld [vmem:[%s0 + $0x18] sm:$0xf]
  %v22 = vld [vmem:[%s0 + $0x1c] sm:$0xf]
  %v23 = vld [vmem:[%s0 + $0x20] sm:$0xf]
  %v24 = vld [vmem:[%s0 + $0x24] sm:$0xf]
  %v25 = vld [vmem:[%s0 + $0x28] sm:$0xf]
  %v26 = vld [vmem:[%s0 + $0x2c] sm:$0xf]
  %v27 = vpack.c.bf16 %v15, %v15
  %v28 = vpack.c.bf16 %v16, %v16
  %v29 = vpack.c.bf16 %v17, %v17
  %v30 = vpack.c.bf16 %v18, %v18
  %v31 = vpack.c.bf16 %v19, %v19
  %v32 = vpack.c.bf16 %v20, %v20
  %v33 = vpack.c.bf16 %v21, %v21
  %v34 = vpack.c.bf16 %v22, %v22
  %v35 = vpack.c.bf16 %v23, %v23
  %v36 = vpack.c.bf16 %v24, %v24
  %v37 = vpack.c.bf16 %v25, %v25
  %v38 = vpack.c.bf16 %v26, %v26
  %v39 = vld [vmem:[%s1] sm:$0xff]
  %v40 = vld [vmem:[%s1 + $0x8] sm:$0xff]
  %v41 = vld [vmem:[%s1 + $0x10] sm:$0xff]
  %v42 = vld [vmem:[%s1 + $0x18] sm:$0xff]
  %v43 = vld [vmem:[%s1 + $0x20] sm:$0xff]
  %v44 = vld [vmem:[%s1 + $0x28] sm:$0xff]
  %v45 = vld [vmem:[%s1 + $0x30] sm:$0xff]
  %v46 = vld [vmem:[%s1 + $0x38] sm:$0xff]
  %v47 = vld [vmem:[%s1 + $0x40] sm:$0xff]
  %v48 = vld [vmem:[%s1 + $0x48] sm:$0xff]
  %v49 = vld [vmem:[%s1 + $0x50] sm:$0xff]
  %v50 = vld [vmem:[%s1 + $0x58] sm:$0xff]
  %v51 = vld [vmem:[%s1 + $0x60] sm:$0xff]
  %v52 = vld [vmem:[%s1 + $0x68] sm:$0xff]
  %v53 = vld [vmem:[%s1 + $0x70] sm:$0xff]
  %v54 = vld [vmem:[%s1 + $0x78] sm:$0xff]
  %v55 = vld [vmem:[%s1 + $0x80] sm:$0xff]
  %v56 = vld [vmem:[%s1 + $0x88] sm:$0xff]
  %v57 = vld [vmem:[%s1 + $0x90] sm:$0xff]
  %v58 = vld [vmem:[%s1 + $0x98] sm:$0xff]
  %v59 = vld [vmem:[%s1 + $0xa0] sm:$0xff]
  %v60 = vld [vmem:[%s1 + $0xa8] sm:$0xff]
  %v61 = vld [vmem:[%s1 + $0xb0] sm:$0xff]
  %v62 = vld [vmem:[%s1 + $0xb8] sm:$0xff]
  %v63 = vld [vmem:[%s1 + $0xc0] sm:$0xff]
  %v64 = vld [vmem:[%s1 + $0xc8] sm:$0xff]
  %v65 = vld [vmem:[%s1 + $0xd0] sm:$0xff]
  %v66 = vld [vmem:[%s1 + $0xd8] sm:$0xff]
  %v67 = vld [vmem:[%s1 + $0xe0] sm:$0xff]
  %v68 = vld [vmem:[%s1 + $0xe8] sm:$0xff]
  %v69 = vld [vmem:[%s1 + $0xf0] sm:$0xff]
  %v70 = vld [vmem:[%s1 + $0xf8] sm:$0xff]
  %v71 = vld [vmem:[%s1 + $0x100] sm:$0xff]
  %v72 = vld [vmem:[%s1 + $0x108] sm:$0xff]
  %v73 = vld [vmem:[%s1 + $0x110] sm:$0xff]
  %v74 = vld [vmem:[%s1 + $0x118] sm:$0xff]
  %v75 = vld [vmem:[%s1 + $0x120] sm:$0xff]
  %v76 = vld [vmem:[%s1 + $0x128] sm:$0xff]
  %v77 = vld [vmem:[%s1 + $0x130] sm:$0xff]
  %v78 = vld [vmem:[%s1 + $0x138] sm:$0xff]
  %v79 = vld [vmem:[%s1 + $0x140] sm:$0xff]
  %v80 = vld [vmem:[%s1 + $0x148] sm:$0xff]
  %v81 = vld [vmem:[%s1 + $0x150] sm:$0xff]
  %v82 = vld [vmem:[%s1 + $0x158] sm:$0xff]
  %v83 = vld [vmem:[%s1 + $0x160] sm:$0xff]
  %v84 = vld [vmem:[%s1 + $0x168] sm:$0xff]
  %v85 = vld [vmem:[%s1 + $0x170] sm:$0xff]
  %v86 = vld [vmem:[%s1 + $0x178] sm:$0xff]
  %v87 = vld [vmem:[%s1 + $0x180] sm:$0xff]
  %v88 = vld [vmem:[%s1 + $0x188] sm:$0xff]
  %v89 = vld [vmem:[%s1 + $0x190] sm:$0xff]
  %v90 = vld [vmem:[%s1 + $0x198] sm:$0xff]
  %v91 = vld [vmem:[%s1 + $0x1a0] sm:$0xff]
  %v92 = vld [vmem:[%s1 + $0x1a8] sm:$0xff]
  %v93 = vld [vmem:[%s1 + $0x1b0] sm:$0xff]
  %v94 = vld [vmem:[%s1 + $0x1b8] sm:$0xff]
  %v95 = vld [vmem:[%s1 + $0x1c0] sm:$0xff]
  %v96 = vld [vmem:[%s1 + $0x1c8] sm:$0xff]
  %v97 = vld [vmem:[%s1 + $0x1d0] sm:$0xff]
  %v98 = vld [vmem:[%s1 + $0x1d8] sm:$0xff]
  %v99 = vld [vmem:[%s1 + $0x1e0] sm:$0xff]
  %v100 = vld [vmem:[%s1 + $0x1e8] sm:$0xff]
  %v101 = vld [vmem:[%s1 + $0x1f0] sm:$0xff]
  %v102 = vld [vmem:[%s1 + $0x1f8] sm:$0xff]
  %v103 = vld [vmem:[%s1 + $0x200] sm:$0xff]
  %v104 = vld [vmem:[%s1 + $0x208] sm:$0xff]
  %v105 = vld [vmem:[%s1 + $0x210] sm:$0xff]
  %v106 = vld [vmem:[%s1 + $0x218] sm:$0xff]
  %v107 = vld [vmem:[%s1 + $0x220] sm:$0xff]
  %v108 = vld [vmem:[%s1 + $0x228] sm:$0xff]
  %v109 = vld [vmem:[%s1 + $0x230] sm:$0xff]
  %v110 = vld [vmem:[%s1 + $0x238] sm:$0xff]
  %v111 = vld [vmem:[%s1 + $0x240] sm:$0xff]
  %v112 = vld [vmem:[%s1 + $0x248] sm:$0xff]
  %v113 = vld [vmem:[%s1 + $0x250] sm:$0xff]
  %v114 = vld [vmem:[%s1 + $0x258] sm:$0xff]
  %v115 = vld [vmem:[%s1 + $0x260] sm:$0xff]
  %v116 = vld [vmem:[%s1 + $0x268] sm:$0xff]
  %v117 = vld [vmem:[%s1 + $0x270] sm:$0xff]
  %v118 = vld [vmem:[%s1 + $0x278] sm:$0xff]
  %v119 = vld [vmem:[%s1 + $0x280] sm:$0xff]
  %v120 = vld [vmem:[%s1 + $0x288] sm:$0xff]
  %v121 = vld [vmem:[%s1 + $0x290] sm:$0xff]
  %v122 = vld [vmem:[%s1 + $0x298] sm:$0xff]
  %v123 = vld [vmem:[%s1 + $0x2a0] sm:$0xff]
  %v124 = vld [vmem:[%s1 + $0x2a8] sm:$0xff]
  %v125 = vld [vmem:[%s1 + $0x2b0] sm:$0xff]
  %v126 = vld [vmem:[%s1 + $0x2b8] sm:$0xff]
  %v127 = vld [vmem:[%s1 + $0x2c0] sm:$0xff]
  %v128 = vld [vmem:[%s1 + $0x2c8] sm:$0xff]
  %v129 = vld [vmem:[%s1 + $0x2d0] sm:$0xff]
  %v130 = vld [vmem:[%s1 + $0x2d8] sm:$0xff]
  %v131 = vld [vmem:[%s1 + $0x2e0] sm:$0xff]
  %v132 = vld [vmem:[%s1 + $0x2e8] sm:$0xff]
  %v133 = vld [vmem:[%s1 + $0x2f0] sm:$0xff]
  %v134 = vld [vmem:[%s1 + $0x2f8] sm:$0xff]
  %v135 = vpack.c.bf16 %v39, %v39
  %v136 = vpack.c.bf16 %v40, %v40
  %v137 = vpack.c.bf16 %v41, %v41
  %v138 = vpack.c.bf16 %v42, %v42
  %v139 = vpack.c.bf16 %v43, %v43
  %v140 = vpack.c.bf16 %v44, %v44
  %v141 = vpack.c.bf16 %v45, %v45
  %v142 = vpack.c.bf16 %v46, %v46
  %v143 = vpack.c.bf16 %v47, %v47
  %v144 = vpack.c.bf16 %v48, %v48
  %v145 = vpack.c.bf16 %v49, %v49
  %v146 = vpack.c.bf16 %v50, %v50
  %v147 = vpack.c.bf16 %v51, %v51
  %v148 = vpack.c.bf16 %v52, %v52
  %v149 = vpack.c.bf16 %v53, %v53
  %v150 = vpack.c.bf16 %v54, %v54
  %v151 = vpack.c.bf16 %v55, %v55
  %v152 = vpack.c.bf16 %v56, %v56
  %v153 = vpack.c.bf16 %v57, %v57
  %v154 = vpack.c.bf16 %v58, %v58
  %v155 = vpack.c.bf16 %v59, %v59
  %v156 = vpack.c.bf16 %v60, %v60
  %v157 = vpack.c.bf16 %v61, %v61
  %v158 = vpack.c.bf16 %v62, %v62
  %v159 = vpack.c.bf16 %v63, %v63
  %v160 = vpack.c.bf16 %v64, %v64
  %v161 = vpack.c.bf16 %v65, %v65
  %v162 = vpack.c.bf16 %v66, %v66
  %v163 = vpack.c.bf16 %v67, %v67
  %v164 = vpack.c.bf16 %v68, %v68
  %v165 = vpack.c.bf16 %v69, %v69
  %v166 = vpack.c.bf16 %v70, %v70
  %v167 = vpack.c.bf16 %v71, %v71
  %v168 = vpack.c.bf16 %v72, %v72
  %v169 = vpack.c.bf16 %v73, %v73
  %v170 = vpack.c.bf16 %v74, %v74
  %v171 = vpack.c.bf16 %v75, %v75
  %v172 = vpack.c.bf16 %v76, %v76
  %v173 = vpack.c.bf16 %v77, %v77
  %v174 = vpack.c.bf16 %v78, %v78
  %v175 = vpack.c.bf16 %v79, %v79
  %v176 = vpack.c.bf16 %v80, %v80
  %v177 = vpack.c.bf16 %v81, %v81
  %v178 = vpack.c.bf16 %v82, %v82
  %v179 = vpack.c.bf16 %v83, %v83
  %v180 = vpack.c.bf16 %v84, %v84
  %v181 = vpack.c.bf16 %v85, %v85
  %v182 = vpack.c.bf16 %v86, %v86
  %v183 = vpack.c.bf16 %v87, %v87
  %v184 = vpack.c.bf16 %v88, %v88
  %v185 = vpack.c.bf16 %v89, %v89
  %v186 = vpack.c.bf16 %v90, %v90
  %v187 = vpack.c.bf16 %v91, %v91
  %v188 = vpack.c.bf16 %v92, %v92
  %v189 = vpack.c.bf16 %v93, %v93
  %v190 = vpack.c.bf16 %v94, %v94
  %v191 = vpack.c.bf16 %v95, %v95
  %v192 = vpack.c.bf16 %v96, %v96
  %v193 = vpack.c.bf16 %v97, %v97
  %v194 = vpack.c.bf16 %v98, %v98
  %v195 = vpack.c.bf16 %v99, %v99
  %v196 = vpack.c.bf16 %v100, %v100
  %v197 = vpack.c.bf16 %v101, %v101
  %v198 = vpack.c.bf16 %v102, %v102
  %v199 = vpack.c.bf16 %v103, %v103
  %v200 = vpack.c.bf16 %v104, %v104
  %v201 = vpack.c.bf16 %v105, %v105
  %v202 = vpack.c.bf16 %v106, %v106
  %v203 = vpack.c.bf16 %v107, %v107
  %v204 = vpack.c.bf16 %v108, %v108
  %v205 = vpack.c.bf16 %v109, %v109
  %v206 = vpack.c.bf16 %v110, %v110
  %v207 = vpack.c.bf16 %v111, %v111
  %v208 = vpack.c.bf16 %v112, %v112
  %v209 = vpack.c.bf16 %v113, %v113
  %v210 = vpack.c.bf16 %v114, %v114
  %v211 = vpack.c.bf16 %v115, %v115
  %v212 = vpack.c.bf16 %v116, %v116
  %v213 = vpack.c.bf16 %v117, %v117
  %v214 = vpack.c.bf16 %v118, %v118
  %v215 = vpack.c.bf16 %v119, %v119
  %v216 = vpack.c.bf16 %v120, %v120
  %v217 = vpack.c.bf16 %v121, %v121
  %v218 = vpack.c.bf16 %v122, %v122
  %v219 = vpack.c.bf16 %v123, %v123
  %v220 = vpack.c.bf16 %v124, %v124
  %v221 = vpack.c.bf16 %v125, %v125
  %v222 = vpack.c.bf16 %v126, %v126
  %v223 = vpack.c.bf16 %v127, %v127
  %v224 = vpack.c.bf16 %v128, %v128
  %v225 = vpack.c.bf16 %v129, %v129
  %v226 = vpack.c.bf16 %v130, %v130
  %v227 = vpack.c.bf16 %v131, %v131
  %v228 = vpack.c.bf16 %v132, %v132
  %v229 = vpack.c.bf16 %v133, %v133
  %v230 = vpack.c.bf16 %v134, %v134
  %v231 = vld [vmem:[%s2] sm:$0x1]
  %v232 = vld [vmem:[%s2 + $0x1] sm:$0x1]
  %v233 = vld [vmem:[%s2 + $0x2] sm:$0x1]
  %v234 = vld [vmem:[%s2 + $0x3] sm:$0x1]
  %v235 = vld [vmem:[%s2 + $0x4] sm:$0x1]
  %v236 = vld [vmem:[%s2 + $0x5] sm:$0x1]
  %v237 = vld [vmem:[%s2 + $0x6] sm:$0x1]
  %v238 = vld [vmem:[%s2 + $0x7] sm:$0x1]
  %v239 = vld [vmem:[%s2 + $0x8] sm:$0x1]
  %v240 = vld [vmem:[%s2 + $0x9] sm:$0x1]
  %v241 = vld [vmem:[%s2 + $0xa] sm:$0x1]
  %v242 = vld [vmem:[%s2 + $0xb] sm:$0x1]
  %v255 = vperm.slane %v231, 0
  %v256 = vperm.slane %v232, 0
  %v257 = vperm.slane %v233, 0
  %v258 = vperm.slane %v234, 0
  %v259 = vperm.slane %v235, 0
  %v260 = vperm.slane %v236, 0
  %v261 = vperm.slane %v237, 0
  %v262 = vperm.slane %v238, 0
  %v263 = vperm.slane %v239, 0
  %v264 = vperm.slane %v240, 0
  %v265 = vperm.slane %v241, 0
  %v266 = vperm.slane %v242, 0
  %v287 = vunpack.c.l.b16 %v135
  %v288 = vunpack.c.l.b16 %v136
  %v289 = vunpack.c.l.b16 %v137
  %v290 = vunpack.c.l.b16 %v138
  %v291 = vunpack.c.l.b16 %v139
  %v292 = vunpack.c.l.b16 %v140
  %v293 = vunpack.c.l.b16 %v141
  %v294 = vunpack.c.l.b16 %v142
  %v295 = vpack.c.b16 %v288, %v287
  %v296 = vpack.c.b16 %v290, %v289
  %v297 = vpack.c.b16 %v292, %v291
  %v298 = vpack.c.b16 %v294, %v293
  %vm303 = vcmask 523264
  %v305 = vsel %vm303, %v27, 0
  %307 = vmatpush.bf16.msra.mxu0 0
  %308 = vmatpush.bf16.msra.mxu0 0
  %309 = vmatpush.bf16.msra.mxu0 0
  %310 = vmatpush.bf16.msra.mxu0 0
  %311 = vmatpush.bf16.msra.mxu0 %v298
  %312 = vmatpush.bf16.msra.mxu0 %v297
  %313 = vmatpush.bf16.msra.mxu0 %v296
  %314 = vmatpush.bf16.msra.mxu0 %v295
  %315 = vmatmul.bf16.gmra.mxu0 %v305
  %v316 = vpop.f32.mrf.mxu0
  %v317 = vadd.f32 %v255, %v316
  %v318 = vpop.f32.mrf.mxu0
  %319 = vdwg.mxu0
  %v328 = vunpack.c.l.b16 %v143
  %v329 = vunpack.c.l.b16 %v144
  %v330 = vunpack.c.l.b16 %v145
  %v331 = vunpack.c.l.b16 %v146
  %v332 = vunpack.c.l.b16 %v147
  %v333 = vunpack.c.l.b16 %v148
  %v334 = vunpack.c.l.b16 %v149
  %v335 = vunpack.c.l.b16 %v150
  %v336 = vpack.c.b16 %v329, %v328
  %v337 = vpack.c.b16 %v331, %v330
  %v338 = vpack.c.b16 %v333, %v332
  %v339 = vpack.c.b16 %v335, %v334
  %v345 = vsel %vm303, %v28, 0
  %347 = vmatpush.bf16.msra.mxu0 0
  %348 = vmatpush.bf16.msra.mxu0 0
  %349 = vmatpush.bf16.msra.mxu0 0
  %350 = vmatpush.bf16.msra.mxu0 0
  %351 = vmatpush.bf16.msra.mxu0 %v339
  %352 = vmatpush.bf16.msra.mxu0 %v338
  %353 = vmatpush.bf16.msra.mxu0 %v337
  %354 = vmatpush.bf16.msra.mxu0 %v336
  %355 = vmatmul.bf16.gmra.mxu0 %v345
  %v356 = vpop.f32.mrf.mxu0
  %v357 = vadd.f32 %v256, %v356
  %v358 = vpop.f32.mrf.mxu0
  %359 = vdwg.mxu0
  %v368 = vunpack.c.l.b16 %v151
  %v369 = vunpack.c.l.b16 %v152
  %v370 = vunpack.c.l.b16 %v153
  %v371 = vunpack.c.l.b16 %v154
  %v372 = vunpack.c.l.b16 %v155
  %v373 = vunpack.c.l.b16 %v156
  %v374 = vunpack.c.l.b16 %v157
  %v375 = vunpack.c.l.b16 %v158
  %v376 = vpack.c.b16 %v369, %v368
  %v377 = vpack.c.b16 %v371, %v370
  %v378 = vpack.c.b16 %v373, %v372
  %v379 = vpack.c.b16 %v375, %v374
  %v385 = vsel %vm303, %v29, 0
  %387 = vmatpush.bf16.msra.mxu0 0
  %388 = vmatpush.bf16.msra.mxu0 0
  %389 = vmatpush.bf16.msra.mxu0 0
  %390 = vmatpush.bf16.msra.mxu0 0
  %391 = vmatpush.bf16.msra.mxu0 %v379
  %392 = vmatpush.bf16.msra.mxu0 %v378
  %393 = vmatpush.bf16.msra.mxu0 %v377
  %394 = vmatpush.bf16.msra.mxu0 %v376
  %395 = vmatmul.bf16.gmra.mxu0 %v385
  %v396 = vpop.f32.mrf.mxu0
  %v397 = vadd.f32 %v257, %v396
  %v398 = vpop.f32.mrf.mxu0
  %399 = vdwg.mxu0
  %v408 = vunpack.c.l.b16 %v159
  %v409 = vunpack.c.l.b16 %v160
  %v410 = vunpack.c.l.b16 %v161
  %v411 = vunpack.c.l.b16 %v162
  %v412 = vunpack.c.l.b16 %v163
  %v413 = vunpack.c.l.b16 %v164
  %v414 = vunpack.c.l.b16 %v165
  %v415 = vunpack.c.l.b16 %v166
  %v416 = vpack.c.b16 %v409, %v408
  %v417 = vpack.c.b16 %v411, %v410
  %v418 = vpack.c.b16 %v413, %v412
  %v419 = vpack.c.b16 %v415, %v414
  %v425 = vsel %vm303, %v30, 0
  %427 = vmatpush.bf16.msra.mxu0 0
  %428 = vmatpush.bf16.msra.mxu0 0
  %429 = vmatpush.bf16.msra.mxu0 0
  %430 = vmatpush.bf16.msra.mxu0 0
  %431 = vmatpush.bf16.msra.mxu0 %v419
  %432 = vmatpush.bf16.msra.mxu0 %v418
  %433 = vmatpush.bf16.msra.mxu0 %v417
  %434 = vmatpush.bf16.msra.mxu0 %v416
  %435 = vmatmul.bf16.gmra.mxu0 %v425
  %v436 = vpop.f32.mrf.mxu0
  %v437 = vadd.f32 %v258, %v436
  %v438 = vpop.f32.mrf.mxu0
  %439 = vdwg.mxu0
  %v448 = vunpack.c.l.b16 %v167
  %v449 = vunpack.c.l.b16 %v168
  %v450 = vunpack.c.l.b16 %v169
  %v451 = vunpack.c.l.b16 %v170
  %v452 = vunpack.c.l.b16 %v171
  %v453 = vunpack.c.l.b16 %v172
  %v454 = vunpack.c.l.b16 %v173
  %v455 = vunpack.c.l.b16 %v174
  %v456 = vpack.c.b16 %v449, %v448
  %v457 = vpack.c.b16 %v451, %v450
  %v458 = vpack.c.b16 %v453, %v452
  %v459 = vpack.c.b16 %v455, %v454
  %v465 = vsel %vm303, %v31, 0
  %467 = vmatpush.bf16.msra.mxu0 0
  %468 = vmatpush.bf16.msra.mxu0 0
  %469 = vmatpush.bf16.msra.mxu0 0
  %470 = vmatpush.bf16.msra.mxu0 0
  %471 = vmatpush.bf16.msra.mxu0 %v459
  %472 = vmatpush.bf16.msra.mxu0 %v458
  %473 = vmatpush.bf16.msra.mxu0 %v457
  %474 = vmatpush.bf16.msra.mxu0 %v456
  %475 = vmatmul.bf16.gmra.mxu0 %v465
  %v476 = vpop.f32.mrf.mxu0
  %v477 = vadd.f32 %v259, %v476
  %v478 = vpop.f32.mrf.mxu0
  %479 = vdwg.mxu0
  %v488 = vunpack.c.l.b16 %v175
  %v489 = vunpack.c.l.b16 %v176
  %v490 = vunpack.c.l.b16 %v177
  %v491 = vunpack.c.l.b16 %v178
  %v492 = vunpack.c.l.b16 %v179
  %v493 = vunpack.c.l.b16 %v180
  %v494 = vunpack.c.l.b16 %v181
  %v495 = vunpack.c.l.b16 %v182
  %v496 = vpack.c.b16 %v489, %v488
  %v497 = vpack.c.b16 %v491, %v490
  %v498 = vpack.c.b16 %v493, %v492
  %v499 = vpack.c.b16 %v495, %v494
  %v505 = vsel %vm303, %v32, 0
  %507 = vmatpush.bf16.msra.mxu0 0
  %508 = vmatpush.bf16.msra.mxu0 0
  %509 = vmatpush.bf16.msra.mxu0 0
  %510 = vmatpush.bf16.msra.mxu0 0
  %511 = vmatpush.bf16.msra.mxu0 %v499
  %512 = vmatpush.bf16.msra.mxu0 %v498
  %513 = vmatpush.bf16.msra.mxu0 %v497
  %514 = vmatpush.bf16.msra.mxu0 %v496
  %515 = vmatmul.bf16.gmra.mxu0 %v505
  %v516 = vpop.f32.mrf.mxu0
  %v517 = vadd.f32 %v260, %v516
  %v518 = vpop.f32.mrf.mxu0
  %519 = vdwg.mxu0
  %v528 = vunpack.c.l.b16 %v183
  %v529 = vunpack.c.l.b16 %v184
  %v530 = vunpack.c.l.b16 %v185
  %v531 = vunpack.c.l.b16 %v186
  %v532 = vunpack.c.l.b16 %v187
  %v533 = vunpack.c.l.b16 %v188
  %v534 = vunpack.c.l.b16 %v189
  %v535 = vunpack.c.l.b16 %v190
  %v536 = vpack.c.b16 %v529, %v528
  %v537 = vpack.c.b16 %v531, %v530
  %v538 = vpack.c.b16 %v533, %v532
  %v539 = vpack.c.b16 %v535, %v534
  %v545 = vsel %vm303, %v33, 0
  %547 = vmatpush.bf16.msra.mxu0 0
  %548 = vmatpush.bf16.msra.mxu0 0
  %549 = vmatpush.bf16.msra.mxu0 0
  %550 = vmatpush.bf16.msra.mxu0 0
  %551 = vmatpush.bf16.msra.mxu0 %v539
  %552 = vmatpush.bf16.msra.mxu0 %v538
  %553 = vmatpush.bf16.msra.mxu0 %v537
  %554 = vmatpush.bf16.msra.mxu0 %v536
  %555 = vmatmul.bf16.gmra.mxu0 %v545
  %v556 = vpop.f32.mrf.mxu0
  %v557 = vadd.f32 %v261, %v556
  %v558 = vpop.f32.mrf.mxu0
  %559 = vdwg.mxu0
  %v568 = vunpack.c.l.b16 %v191
  %v569 = vunpack.c.l.b16 %v192
  %v570 = vunpack.c.l.b16 %v193
  %v571 = vunpack.c.l.b16 %v194
  %v572 = vunpack.c.l.b16 %v195
  %v573 = vunpack.c.l.b16 %v196
  %v574 = vunpack.c.l.b16 %v197
  %v575 = vunpack.c.l.b16 %v198
  %v576 = vpack.c.b16 %v569, %v568
  %v577 = vpack.c.b16 %v571, %v570
  %v578 = vpack.c.b16 %v573, %v572
  %v579 = vpack.c.b16 %v575, %v574
  %v585 = vsel %vm303, %v34, 0
  %587 = vmatpush.bf16.msra.mxu0 0
  %588 = vmatpush.bf16.msra.mxu0 0
  %589 = vmatpush.bf16.msra.mxu0 0
  %590 = vmatpush.bf16.msra.mxu0 0
  %591 = vmatpush.bf16.msra.mxu0 %v579
  %592 = vmatpush.bf16.msra.mxu0 %v578
  %593 = vmatpush.bf16.msra.mxu0 %v577
  %594 = vmatpush.bf16.msra.mxu0 %v576
  %595 = vmatmul.bf16.gmra.mxu0 %v585
  %v596 = vpop.f32.mrf.mxu0
  %v597 = vadd.f32 %v262, %v596
  %v598 = vpop.f32.mrf.mxu0
  %599 = vdwg.mxu0
  %v608 = vunpack.c.l.b16 %v199
  %v609 = vunpack.c.l.b16 %v200
  %v610 = vunpack.c.l.b16 %v201
  %v611 = vunpack.c.l.b16 %v202
  %v612 = vunpack.c.l.b16 %v203
  %v613 = vunpack.c.l.b16 %v204
  %v614 = vunpack.c.l.b16 %v205
  %v615 = vunpack.c.l.b16 %v206
  %v616 = vpack.c.b16 %v609, %v608
  %v617 = vpack.c.b16 %v611, %v610
  %v618 = vpack.c.b16 %v613, %v612
  %v619 = vpack.c.b16 %v615, %v614
  %v625 = vsel %vm303, %v35, 0
  %627 = vmatpush.bf16.msra.mxu0 0
  %628 = vmatpush.bf16.msra.mxu0 0
  %629 = vmatpush.bf16.msra.mxu0 0
  %630 = vmatpush.bf16.msra.mxu0 0
  %631 = vmatpush.bf16.msra.mxu0 %v619
  %632 = vmatpush.bf16.msra.mxu0 %v618
  %633 = vmatpush.bf16.msra.mxu0 %v617
  %634 = vmatpush.bf16.msra.mxu0 %v616
  %635 = vmatmul.bf16.gmra.mxu0 %v625
  %v636 = vpop.f32.mrf.mxu0
  %v637 = vadd.f32 %v263, %v636
  %v638 = vpop.f32.mrf.mxu0
  %639 = vdwg.mxu0
  %v648 = vunpack.c.l.b16 %v207
  %v649 = vunpack.c.l.b16 %v208
  %v650 = vunpack.c.l.b16 %v209
  %v651 = vunpack.c.l.b16 %v210
  %v652 = vunpack.c.l.b16 %v211
  %v653 = vunpack.c.l.b16 %v212
  %v654 = vunpack.c.l.b16 %v213
  %v655 = vunpack.c.l.b16 %v214
  %v656 = vpack.c.b16 %v649, %v648
  %v657 = vpack.c.b16 %v651, %v650
  %v658 = vpack.c.b16 %v653, %v652
  %v659 = vpack.c.b16 %v655, %v654
  %v665 = vsel %vm303, %v36, 0
  %667 = vmatpush.bf16.msra.mxu0 0
  %668 = vmatpush.bf16.msra.mxu0 0
  %669 = vmatpush.bf16.msra.mxu0 0
  %670 = vmatpush.bf16.msra.mxu0 0
  %671 = vmatpush.bf16.msra.mxu0 %v659
  %672 = vmatpush.bf16.msra.mxu0 %v658
  %673 = vmatpush.bf16.msra.mxu0 %v657
  %674 = vmatpush.bf16.msra.mxu0 %v656
  %675 = vmatmul.bf16.gmra.mxu0 %v665
  %v676 = vpop.f32.mrf.mxu0
  %v677 = vadd.f32 %v264, %v676
  %v678 = vpop.f32.mrf.mxu0
  %679 = vdwg.mxu0
  %v688 = vunpack.c.l.b16 %v215
  %v689 = vunpack.c.l.b16 %v216
  %v690 = vunpack.c.l.b16 %v217
  %v691 = vunpack.c.l.b16 %v218
  %v692 = vunpack.c.l.b16 %v219
  %v693 = vunpack.c.l.b16 %v220
  %v694 = vunpack.c.l.b16 %v221
  %v695 = vunpack.c.l.b16 %v222
  %v696 = vpack.c.b16 %v689, %v688
  %v697 = vpack.c.b16 %v691, %v690
  %v698 = vpack.c.b16 %v693, %v692
  %v699 = vpack.c.b16 %v695, %v694
  %v705 = vsel %vm303, %v37, 0
  %707 = vmatpush.bf16.msra.mxu0 0
  %708 = vmatpush.bf16.msra.mxu0 0
  %709 = vmatpush.bf16.msra.mxu0 0
  %710 = vmatpush.bf16.msra.mxu0 0
  %711 = vmatpush.bf16.msra.mxu0 %v699
  %712 = vmatpush.bf16.msra.mxu0 %v698
  %713 = vmatpush.bf16.msra.mxu0 %v697
  %714 = vmatpush.bf16.msra.mxu0 %v696
  %715 = vmatmul.bf16.gmra.mxu0 %v705
  %v716 = vpop.f32.mrf.mxu0
  %v717 = vadd.f32 %v265, %v716
  %v718 = vpop.f32.mrf.mxu0
  %719 = vdwg.mxu0
  %v728 = vunpack.c.l.b16 %v223
  %v729 = vunpack.c.l.b16 %v224
  %v730 = vunpack.c.l.b16 %v225
  %v731 = vunpack.c.l.b16 %v226
  %v732 = vunpack.c.l.b16 %v227
  %v733 = vunpack.c.l.b16 %v228
  %v734 = vunpack.c.l.b16 %v229
  %v735 = vunpack.c.l.b16 %v230
  %v736 = vpack.c.b16 %v729, %v728
  %v737 = vpack.c.b16 %v731, %v730
  %v738 = vpack.c.b16 %v733, %v732
  %v739 = vpack.c.b16 %v735, %v734
  %v745 = vsel %vm303, %v38, 0
  %747 = vmatpush.bf16.msra.mxu0 0
  %748 = vmatpush.bf16.msra.mxu0 0
  %749 = vmatpush.bf16.msra.mxu0 0
  %750 = vmatpush.bf16.msra.mxu0 0
  %751 = vmatpush.bf16.msra.mxu0 %v739
  %752 = vmatpush.bf16.msra.mxu0 %v738
  %753 = vmatpush.bf16.msra.mxu0 %v737
  %754 = vmatpush.bf16.msra.mxu0 %v736
  %755 = vmatmul.bf16.gmra.mxu0 %v745
  %v756 = vpop.f32.mrf.mxu0
  %v757 = vadd.f32 %v266, %v756
  %v758 = vpop.f32.mrf.mxu0
  %759 = vdwg.mxu0
  %vm760 = vcmask 519168
  %761 = vst.msk [vmem:[%s3] sm:$0xf] %vm760, %v317
  %762 = vst.msk [vmem:[%s3 + $0x4] sm:$0xf] %vm760, %v357
  %763 = vst.msk [vmem:[%s3 + $0x8] sm:$0xf] %vm760, %v397
  %764 = vst.msk [vmem:[%s3 + $0xc] sm:$0xf] %vm760, %v437
  %765 = vst.msk [vmem:[%s3 + $0x10] sm:$0xf] %vm760, %v477
  %766 = vst.msk [vmem:[%s3 + $0x14] sm:$0xf] %vm760, %v517
  %767 = vst.msk [vmem:[%s3 + $0x18] sm:$0xf] %vm760, %v557
  %768 = vst.msk [vmem:[%s3 + $0x1c] sm:$0xf] %vm760, %v597
  %769 = vst.msk [vmem:[%s3 + $0x20] sm:$0xf] %vm760, %v637
  %770 = vst.msk [vmem:[%s3 + $0x24] sm:$0xf] %vm760, %v677
  %771 = vst.msk [vmem:[%s3 + $0x28] sm:$0xf] %vm760, %v717
  %772 = vst.msk [vmem:[%s3 + $0x2c] sm:$0xf] %vm760, %v757
  // Predicated region
  $region14: #{custom_clip_forward.15} parent=0 // pred_check
    _
  $region15: #{custom_clip_forward.15} parent=0 // pred_check_branch
    %774 = sbr.rel (0) target = $region17
  $region16: #{custom_clip_forward.15} parent=0 // pred_region
    _
  $region17: #{custom_clip_forward.15} parent=0 // pred_fallthru
    _
  // Predicated region
  $region18: #{custom_clip_forward.15} parent=0 // pred_check
    _
  $region19: #{custom_clip_forward.15} parent=0 // pred_check_branch
    %776 = sbr.rel (0) target = $region21
  $region20: #{custom_clip_forward.15} parent=0 // pred_region
    _
  $region21: #{custom_clip_forward.15} parent=0 // pred_fallthru
    _

// kernel: custom_clip_forward.24
$region0: #{custom_clip_forward.24}
  #allocation0 [shape = 'u32[]', space=smem, size = 0x4, offset = 0x4, fixed_abs, tag = 'smem constant byte address 0x4 - core index']
  #allocation1 [shape = 'u32[72,128]{1,0:T(1,128)}', space=vmem, size = 0x9000, scoped, tag = 'internal scratch']
  %s0 = inlined_call_operand.vmem [shape: f32[2,64], index: 0, kind: input, shape index: {}]
  %s1 = inlined_call_operand.vmem [shape: f32[1,64], index: 1, kind: input, shape index: {}]
  %s2 = inlined_call_operand.vmem [shape: f32[1,64], index: 2, kind: input, shape index: {}]
  %s3 = inlined_call_operand.vmem [shape: f32[64,32], index: 3, kind: input, shape index: {}]
  %s4 = inlined_call_operand.vmem [shape: f32[2,32], index: 4, kind: output, shape index: {}]
  %s5 = sld [smem:[#allocation0]]
  $region26: #{custom_clip_forward.24} parent=0
    _
  %s7 = ssub.s32 1, %s5
  %s8 = scalar_select 0, %s7, %s5
  // Predicated region
  $region2: #{custom_clip_forward.24} parent=0 // pred_check
    _
  $region3: #{custom_clip_forward.24} parent=0 // pred_check_branch
    %10 = sbr.rel (0) target = $region5
  $region4: #{custom_clip_forward.24} parent=0 // pred_region
    _
  $region5: #{custom_clip_forward.24} parent=0 // pred_fallthru
    _
  // Predicated region
  $region6: #{custom_clip_forward.24} parent=0 // pred_check
    _
  $region7: #{custom_clip_forward.24} parent=0 // pred_check_branch
    %12 = sbr.rel (0) target = $region9
  $region8: #{custom_clip_forward.24} parent=0 // pred_region
    _
  $region9: #{custom_clip_forward.24} parent=0 // pred_fallthru
    _
  // Predicated region
  $region10: #{custom_clip_forward.24} parent=0 // pred_check
    _
  $region11: #{custom_clip_forward.24} parent=0 // pred_check_branch
    %14 = sbr.rel (0) target = $region13
  $region12: #{custom_clip_forward.24} parent=0 // pred_region
    _
  $region13: #{custom_clip_forward.24} parent=0 // pred_fallthru
    _
  // Predicated region
  $region14: #{custom_clip_forward.24} parent=0 // pred_check
    _
  $region15: #{custom_clip_forward.24} parent=0 // pred_check_branch
    %16 = sbr.rel (0) target = $region17
  $region16: #{custom_clip_forward.24} parent=0 // pred_region
    _
  $region17: #{custom_clip_forward.24} parent=0 // pred_fallthru
    _
  %v18 = vld [vmem:[%s0] sm:$0x3]
  %v19 = vld [vmem:[%s1] sm:$0x1]
  %v20 = vld [vmem:[%s2] sm:$0x1]
  %vm21 = vcmask 517120
  %v22 = vsel %vm21, %v18, 0.0
  %23 = vadd.xlane.f32.xlu0 %v22
  %v24 = vpop.xlane.xlu0 %23
  %v25 = vrcp.pop 64.0
  %v26 = vmul.f32 64.0, %v25
  %v27 = vsub.f32 1.0, %v26
  %v28 = vmul.f32 %v25, %v27
  %v29 = vadd.f32 %v25, %v28
  %vm30 = vweird.f32 %v25
  %v31 = vsel %vm30, %v25, %v29
  %v32 = vmul.f32 %v24, %v31
  %v33 = vsub.f32 %v18, %v32
  %v34 = vmul.f32 %v33, %v33
  %v35 = vsel %vm21, %v34, 0.0
  %36 = vadd.xlane.f32.xlu0 %v35
  %v37 = vpop.xlane.xlu0 %36
  %v38 = vmul.f32 %v37, %v31
  %v39 = vadd.f32 %v38, 1e-05
  %v40 = vrsqrt.pop %v39
  %v41 = vmul.f32 %v40, %v39
  %v42 = vmul.f32 %v41, %v40
  %v43 = vmul.f32 0.5, %v42
  %v44 = vsub.f32 1.5, %v43
  %v45 = vmul.f32 %v40, %v44
  %vm46 = vweird.f32 %v39
  %vm47 = vweird.f32 %v40
  %vm48 = vmor %vm46, %vm47
  %v49 = vsel %vm48, %v40, %v45
  %v50 = vmul.f32 %v33, %v49
  %v52 = vperm.slane %v19, 0
  %v54 = vmul.f32 %v50, %v52
  %v56 = vperm.slane %v20, 0
  %v58 = vadd.f32 %v54, %v56
  %v59 = vld [vmem:[%s3] sm:$0xff]
  %v60 = vld [vmem:[%s3 + $0x8] sm:$0xff]
  %v61 = vld [vmem:[%s3 + $0x10] sm:$0xff]
  %v62 = vld [vmem:[%s3 + $0x18] sm:$0xff]
  %v63 = vld [vmem:[%s3 + $0x20] sm:$0xff]
  %v64 = vld [vmem:[%s3 + $0x28] sm:$0xff]
  %v65 = vld [vmem:[%s3 + $0x30] sm:$0xff]
  %v66 = vld [vmem:[%s3 + $0x38] sm:$0xff]
  %v67 = vpack.c.bf16 %v58, %v58
  %v68 = vpack.c.bf16 %v60, %v59
  %v69 = vpack.c.bf16 %v62, %v61
  %v70 = vpack.c.bf16 %v64, %v63
  %v71 = vpack.c.bf16 %v66, %v65
  %vm72 = vcmask 523264
  %v74 = vsel %vm72, %v67, 0
  %76 = vmatpush.bf16.msra.mxu0 0
  %77 = vmatpush.bf16.msra.mxu0 0
  %78 = vmatpush.bf16.msra.mxu0 0
  %79 = vmatpush.bf16.msra.mxu0 0
  %80 = vmatpush.bf16.msra.mxu0 %v71
  %81 = vmatpush.bf16.msra.mxu0 %v70
  %82 = vmatpush.bf16.msra.mxu0 %v69
  %83 = vmatpush.bf16.msra.mxu0 %v68
  %84 = vmatmul.bf16.gmra.mxu0 %v74
  %v85 = vpop.f32.mrf.mxu0
  %v86 = vadd.f32 0.0, %v85
  %v87 = vpop.f32.mrf.mxu0
  %88 = vdwg.mxu0
  %vm89 = vcmask 254976
  %90 = vst.msk [vmem:[%s4] sm:$0x3] %vm89, %v86
  // Predicated region
  $region18: #{custom_clip_forward.24} parent=0 // pred_check
    _
  $region19: #{custom_clip_forward.24} parent=0 // pred_check_branch
    %92 = sbr.rel (0) target = $region21
  $region20: #{custom_clip_forward.24} parent=0 // pred_region
    _
  $region21: #{custom_clip_forward.24} parent=0 // pred_fallthru
    _
  // Predicated region
  $region22: #{custom_clip_forward.24} parent=0 // pred_check
    _
  $region23: #{custom_clip_forward.24} parent=0 // pred_check_branch
    %94 = sbr.rel (0) target = $region25
  $region24: #{custom_clip_forward.24} parent=0 // pred_region
    _
  $region25: #{custom_clip_forward.24} parent=0 // pred_fallthru
    _

// kernel: custom_clip_forward.25
$region0: #{custom_clip_forward.25}
  #allocation0 [shape = 'u32[]', space=smem, size = 0x4, offset = 0x4, fixed_abs, tag = 'smem constant byte address 0x4 - core index']
  #allocation1 [shape = 'u32[72,128]{1,0:T(1,128)}', space=vmem, size = 0x9000, scoped, tag = 'internal scratch']
  #allocation2 [shape = 'f32[1]{0:T(128)S(6)}', space=smem, size = 0x200, scoped, tag = 'scoped memory for custom_clip_forward.25']
  %s0 = inlined_call_operand.vmem [shape: f32[2,32], index: 0, kind: input, shape index: {}]
  %s1 = inlined_call_operand.vmem [shape: f32[2,32], index: 1, kind: input, shape index: {}]
  %s2 = inlined_call_operand.<no memory space> [shape: f32[1], index: 2, kind: input, shape index: {}]
  %s3 = inlined_call_operand.vmem [shape: f32[2,1], index: 3, kind: output, shape index: {}]
  %s4 = sld [smem:[#allocation0]]
  $region22: #{custom_clip_forward.25} parent=0
    _
  %s6 = ssub.s32 1, %s4
  %s7 = scalar_select 0, %s6, %s4
  %8 = sst [smem:[#allocation2]] %s2
  // Predicated region
  $region2: #{custom_clip_forward.25} parent=0 // pred_check
    _
  $region3: #{custom_clip_forward.25} parent=0 // pred_check_branch
    %10 = sbr.rel (0) target = $region5
  $region4: #{custom_clip_forward.25} parent=0 // pred_region
    _
  $region5: #{custom_clip_forward.25} parent=0 // pred_fallthru
    _
  // Predicated region
  $region6: #{custom_clip_forward.25} parent=0 // pred_check
    _
  $region7: #{custom_clip_forward.25} parent=0 // pred_check_branch
    %12 = sbr.rel (0) target = $region9
  $region8: #{custom_clip_forward.25} parent=0 // pred_region
    _
  $region9: #{custom_clip_forward.25} parent=0 // pred_fallthru
    _
  // Predicated region
  $region10: #{custom_clip_forward.25} parent=0 // pred_check
    _
  $region11: #{custom_clip_forward.25} parent=0 // pred_check_branch
    %14 = sbr.rel (0) target = $region13
  $region12: #{custom_clip_forward.25} parent=0 // pred_region
    _
  $region13: #{custom_clip_forward.25} parent=0 // pred_fallthru
    _
  %v15 = vld [vmem:[%s0] sm:$0x3]
  %v16 = vld [vmem:[%s1] sm:$0x3]
  %v17 = vmul.f32 %v15, %v15
  %vm18 = vcmask 254976
  %v19 = vsel %vm18, %v17, 0.0
  %20 = vadd.xlane.f32.xlu0 %v19
  %v21 = vpop.xlane.xlu0 %20
  %v22 = vadd.f32 %v21, 1e-12
  %v23 = vrsqrt.pop %v22
  %v24 = vmul.f32 %v23, %v22
  %v25 = vmul.f32 %v24, %v23
  %v26 = vmul.f32 0.5, %v25
  %v27 = vsub.f32 1.5, %v26
  %v28 = vmul.f32 %v23, %v27
  %vm29 = vweird.f32 %v22
  %vm30 = vweird.f32 %v23
  %vm31 = vmor %vm29, %vm30
  %v32 = vsel %vm31, %v23, %v28
  %v33 = vmul.f32 %v15, %v32
  %v34 = vmul.f32 %v16, %v16
  %v35 = vsel %vm18, %v34, 0.0
  %36 = vadd.xlane.f32.xlu0 %v35
  %v37 = vpop.xlane.xlu0 %36
  %v38 = vadd.f32 %v37, 1e-12
  %v39 = vrsqrt.pop %v38
  %v40 = vmul.f32 %v39, %v38
  %v41 = vmul.f32 %v40, %v39
  %v42 = vmul.f32 0.5, %v41
  %v43 = vsub.f32 1.5, %v42
  %v44 = vmul.f32 %v39, %v43
  %vm45 = vweird.f32 %v38
  %vm46 = vweird.f32 %v39
  %vm47 = vmor %vm45, %vm46
  %v48 = vsel %vm47, %v39, %v44
  %v49 = vmul.f32 %v16, %v48
  %s50 = sld [smem:[#allocation2]]
  %vm51 = vcmask 261120
  %v53 = vsel %vm51, %v33, 0
  %v56 = vsel %vm51, %v49, 0
  %58 = vmatpush.xpose.msra.mxu0 0.0
  %59 = vmatpush.xpose.msra.mxu0 0.0
  %60 = vmatpush.xpose.msra.mxu0 0.0
  %61 = vmatpush.xpose.msra.mxu0 0.0
  %62 = vmatpush.xpose.msra.mxu0 0.0
  %63 = vmatpush.xpose.msra.mxu0 0.0
  %64 = vmatpush.xpose.msra.mxu0 0.0
  %65 = vmatpush.xpose.msra.mxu0 0.0
  %66 = vmatpush.xpose.msra.mxu0 0.0
  %67 = vmatpush.xpose.msra.mxu0 0.0
  %68 = vmatpush.xpose.msra.mxu0 0.0
  %69 = vmatpush.xpose.msra.mxu0 0.0
  %70 = vmatpush.xpose.msra.mxu0 0.0
  %71 = vmatpush.xpose.msra.mxu0 0.0
  %72 = vmatpush.xpose.msra.mxu0 0.0
  %73 = vmatpush.xpose.msra.mxu0 %v56
  %74 = vmatmul.f32.gmra.mxu0 %v53
  %v75 = vpop.f32.mrf.mxu0
  %v76 = vadd.f32 0.0, %v75
  %77 = vdwg.mxu0
  %v78 = vstv %s50
  %v79 = vmul.f32 %v78, %v76
  %vm80 = vcmask 9216
  %v81 = vsel %vm80, %v79, -inf
  %82 = vmax.xlane.f32.xlu0 %v81
  %v83 = vpop.xlane.xlu0 %82
  %v84 = vsub.f32 %v79, %v83
  %v85 = vmul.f32 %v84, 1.442695
  %v86 = vpow.pop %v85
  %v87 = vsel %vm80, %v86, 0.0
  %88 = vadd.xlane.f32.xlu0 %v87
  %v89 = vpop.xlane.xlu0 %88
  %v90 = vrcp.pop %v89
  %v91 = vmul.f32 %v89, %v90
  %v92 = vsub.f32 1.0, %v91
  %v93 = vmul.f32 %v90, %v92
  %v94 = vadd.f32 %v90, %v93
  %vm95 = vweird.f32 %v89
  %vm96 = vweird.f32 %v90
  %vm97 = vmor %vm95, %vm96
  %v98 = vsel %vm97, %v90, %v94
  %v99 = vand.u32 2147483647, %v89
  %vm100 = vcmp.eq.f32.partialorder %v99, 8.507059e+37
  %v101 = vand.u32 %v89, 2147483648
  %v102 = vor.u32 1.1754944e-38, %v101
  %v103 = vsel %vm100, %v102, %v98
  %v104 = vmul.f32 %v86, %v103
  %106 = vrot.lane.b32.xlu0 %v104, 127
  %v107 = vpop.permute.xlu0 %106
  %vm109 = vcmask 1024
  %110 = vst.msk [vmem:[%s3] sm:$0x3] %vm109, %v107
  // Predicated region
  $region14: #{custom_clip_forward.25} parent=0 // pred_check
    _
  $region15: #{custom_clip_forward.25} parent=0 // pred_check_branch
    %112 = sbr.rel (0) target = $region17
  $region16: #{custom_clip_forward.25} parent=0 // pred_region
    _
  $region17: #{custom_clip_forward.25} parent=0 // pred_fallthru
    _
  // Predicated region
  $region18: #{custom_clip_forward.25} parent=0 // pred_check
    _
  $region19: #{custom_clip_forward.25} parent=0 // pred_check_branch
    %114 = sbr.rel (0) target = $region21
  $region20: #{custom_clip_forward.25} parent=0 // pred_region
    _
  $region21: #{custom_clip_forward.25} parent=0 // pred_fallthru
    _

// kernel: custom_clip_forward.21
$region0: #{custom_clip_forward.21}
  #allocation0 [shape = 'u32[]', space=smem, size = 0x4, offset = 0x4, fixed_abs, tag = 'smem constant byte address 0x4 - core index']
  #allocation1 [shape = 'u32[72,128]{1,0:T(1,128)}', space=vmem, size = 0x9000, scoped, tag = 'internal scratch']
  %s0 = inlined_call_operand.vmem [shape: f32[26,64], index: 0, kind: input, shape index: {}]
  %s1 = inlined_call_operand.vmem [shape: f32[26,26], index: 1, kind: input, shape index: {}]
  %s2 = inlined_call_operand.vmem [shape: f32[1,64], index: 2, kind: input, shape index: {}]
  %s3 = inlined_call_operand.vmem [shape: f32[1,64], index: 3, kind: input, shape index: {}]
  %s4 = inlined_call_operand.vmem [shape: f32[64,192], index: 4, kind: input, shape index: {}]
  %s5 = inlined_call_operand.vmem [shape: f32[1,192], index: 5, kind: input, shape index: {}]
  %s6 = inlined_call_operand.vmem [shape: f32[64,64], index: 6, kind: input, shape index: {}]
  %s7 = inlined_call_operand.vmem [shape: f32[1,64], index: 7, kind: input, shape index: {}]
  %s8 = inlined_call_operand.vmem [shape: f32[1,64], index: 8, kind: input, shape index: {}]
  %s9 = inlined_call_operand.vmem [shape: f32[1,64], index: 9, kind: input, shape index: {}]
  %s10 = inlined_call_operand.vmem [shape: f32[64,256], index: 10, kind: input, shape index: {}]
  %s11 = inlined_call_operand.vmem [shape: f32[1,256], index: 11, kind: input, shape index: {}]
  %s12 = inlined_call_operand.vmem [shape: f32[256,64], index: 12, kind: input, shape index: {}]
  %s13 = inlined_call_operand.vmem [shape: f32[1,64], index: 13, kind: input, shape index: {}]
  %s14 = inlined_call_operand.vmem [shape: f32[26,64], index: 14, kind: output, shape index: {}]
  %s15 = sld [smem:[#allocation0]]
  $region66: #{custom_clip_forward.21} parent=0
    _
  %s17 = ssub.s32 1, %s15
  %s18 = scalar_select 0, %s17, %s15
  // Predicated region
  $region2: #{custom_clip_forward.21} parent=0 // pred_check
    _
  $region3: #{custom_clip_forward.21} parent=0 // pred_check_branch
    %20 = sbr.rel (0) target = $region5
  $region4: #{custom_clip_forward.21} parent=0 // pred_region
    _
  $region5: #{custom_clip_forward.21} parent=0 // pred_fallthru
    _
  // Predicated region
  $region6: #{custom_clip_forward.21} parent=0 // pred_check
    _
  $region7: #{custom_clip_forward.21} parent=0 // pred_check_branch
    %22 = sbr.rel (0) target = $region9
  $region8: #{custom_clip_forward.21} parent=0 // pred_region
    _
  $region9: #{custom_clip_forward.21} parent=0 // pred_fallthru
    _
  // Predicated region
  $region10: #{custom_clip_forward.21} parent=0 // pred_check
    _
  $region11: #{custom_clip_forward.21} parent=0 // pred_check_branch
    %24 = sbr.rel (0) target = $region13
  $region12: #{custom_clip_forward.21} parent=0 // pred_region
    _
  $region13: #{custom_clip_forward.21} parent=0 // pred_fallthru
    _
  // Predicated region
  $region14: #{custom_clip_forward.21} parent=0 // pred_check
    _
  $region15: #{custom_clip_forward.21} parent=0 // pred_check_branch
    %26 = sbr.rel (0) target = $region17
  $region16: #{custom_clip_forward.21} parent=0 // pred_region
    _
  $region17: #{custom_clip_forward.21} parent=0 // pred_fallthru
    _
  // Predicated region
  $region18: #{custom_clip_forward.21} parent=0 // pred_check
    _
  $region19: #{custom_clip_forward.21} parent=0 // pred_check_branch
    %28 = sbr.rel (0) target = $region21
  $region20: #{custom_clip_forward.21} parent=0 // pred_region
    _
  $region21: #{custom_clip_forward.21} parent=0 // pred_fallthru
    _
  // Predicated region
  $region22: #{custom_clip_forward.21} parent=0 // pred_check
    _
  $region23: #{custom_clip_forward.21} parent=0 // pred_check_branch
    %30 = sbr.rel (0) target = $region25
  $region24: #{custom_clip_forward.21} parent=0 // pred_region
    _
  $region25: #{custom_clip_forward.21} parent=0 // pred_fallthru
    _
  // Predicated region
  $region26: #{custom_clip_forward.21} parent=0 // pred_check
    _
  $region27: #{custom_clip_forward.21} parent=0 // pred_check_branch
    %32 = sbr.rel (0) target = $region29
  $region28: #{custom_clip_forward.21} parent=0 // pred_region
    _
  $region29: #{custom_clip_forward.21} parent=0 // pred_fallthru
    _
  // Predicated region
  $region30: #{custom_clip_forward.21} parent=0 // pred_check
    _
  $region31: #{custom_clip_forward.21} parent=0 // pred_check_branch
    %34 = sbr.rel (0) target = $region33
  $region32: #{custom_clip_forward.21} parent=0 // pred_region
    _
  $region33: #{custom_clip_forward.21} parent=0 // pred_fallthru
    _
  // Predicated region
  $region34: #{custom_clip_forward.21} parent=0 // pred_check
    _
  $region35: #{custom_clip_forward.21} parent=0 // pred_check_branch
    %36 = sbr.rel (0) target = $region37
  $region36: #{custom_clip_forward.21} parent=0 // pred_region
    _
  $region37: #{custom_clip_forward.21} parent=0 // pred_fallthru
    _
  // Predicated region
  $region38: #{custom_clip_forward.21} parent=0 // pred_check
    _
  $region39: #{custom_clip_forward.21} parent=0 // pred_check_branch
    %38 = sbr.rel (0) target = $region41
  $region40: #{custom_clip_forward.21} parent=0 // pred_region
    _
  $region41: #{custom_clip_forward.21} parent=0 // pred_fallthru
    _
  // Predicated region
  $region42: #{custom_clip_forward.21} parent=0 // pred_check
    _
  $region43: #{custom_clip_forward.21} parent=0 // pred_check_branch
    %40 = sbr.rel (0) target = $region45
  $region44: #{custom_clip_forward.21} parent=0 // pred_region
    _
  $region45: #{custom_clip_forward.21} parent=0 // pred_fallthru
    _
  // Predicated region
  $region46: #{custom_clip_forward.21} parent=0 // pred_check
    _
  $region47: #{custom_clip_forward.21} parent=0 // pred_check_branch
    %42 = sbr.rel (0) target = $region49
  $region48: #{custom_clip_forward.21} parent=0 // pred_region
    _
  $region49: #{custom_clip_forward.21} parent=0 // pred_fallthru
    _
  // Predicated region
  $region50: #{custom_clip_forward.21} parent=0 // pred_check
    _
  $region51: #{custom_clip_forward.21} parent=0 // pred_check_branch
    %44 = sbr.rel (0) target = $region53
  $region52: #{custom_clip_forward.21} parent=0 // pred_region
    _
  $region53: #{custom_clip_forward.21} parent=0 // pred_fallthru
    _
  // Predicated region
  $region54: #{custom_clip_forward.21} parent=0 // pred_check
    _
  $region55: #{custom_clip_forward.21} parent=0 // pred_check_branch
    %46 = sbr.rel (0) target = $region57
  $region56: #{custom_clip_forward.21} parent=0 // pred_region
    _
  $region57: #{custom_clip_forward.21} parent=0 // pred_fallthru
    _
  %v48 = vld [vmem:[%s0] sm:$0xff]
  %v49 = vld [vmem:[%s0 + $0x8] sm:$0xff]
  %v50 = vld [vmem:[%s0 + $0x10] sm:$0xff]
  %v51 = vld [vmem:[%s0 + $0x18] sm:$0x3]
  %v52 = vld [vmem:[%s1] sm:$0xff]
  %v53 = vld [vmem:[%s1 + $0x8] sm:$0xff]
  %v54 = vld [vmem:[%s1 + $0x10] sm:$0xff]
  %v55 = vld [vmem:[%s1 + $0x18] sm:$0x3]
  %v56 = vld [vmem:[%s2] sm:$0x1]
  %v57 = vld [vmem:[%s3] sm:$0x1]
  %vm58 = vcmask 523264
  %v59 = vsel %vm58, %v48, 0.0
  %60 = vadd.xlane.f32.xlu0 %v59
  %v61 = vpop.xlane.xlu0 %60
  %v62 = vsel %vm58, %v49, 0.0
  %63 = vadd.xlane.f32.xlu0 %v62
  %v64 = vpop.xlane.xlu0 %63
  %v65 = vsel %vm58, %v50, 0.0
  %66 = vadd.xlane.f32.xlu0 %v65
  %v67 = vpop.xlane.xlu0 %66
  %vm68 = vcmask 517120
  %v69 = vsel %vm68, %v51, 0.0
  %70 = vadd.xlane.f32.xlu0 %v69
  %v71 = vpop.xlane.xlu0 %70
  %v72 = vrcp.pop 64.0
  %v73 = vmul.f32 64.0, %v72
  %v74 = vsub.f32 1.0, %v73
  %v75 = vmul.f32 %v72, %v74
  %v76 = vadd.f32 %v72, %v75
  %vm77 = vweird.f32 %v72
  %v78 = vsel %vm77, %v72, %v76
  %v79 = vmul.f32 %v61, %v78
  %v80 = vmul.f32 %v64, %v78
  %v81 = vmul.f32 %v67, %v78
  %v82 = vmul.f32 %v71, %v78
  %v83 = vsub.f32 %v48, %v79
  %v84 = vsub.f32 %v49, %v80
  %v85 = vsub.f32 %v50, %v81
  %v86 = vsub.f32 %v51, %v82
  %v87 = vmul.f32 %v83, %v83
  %v88 = vmul.f32 %v84, %v84
  %v89 = vmul.f32 %v85, %v85
  %v90 = vmul.f32 %v86, %v86
  %v91 = vsel %vm58, %v87, 0.0
  %92 = vadd.xlane.f32.xlu0 %v91
  %v93 = vpop.xlane.xlu0 %92
  %v94 = vsel %vm58, %v88, 0.0
  %95 = vadd.xlane.f32.xlu0 %v94
  %v96 = vpop.xlane.xlu0 %95
  %v97 = vsel %vm58, %v89, 0.0
  %98 = vadd.xlane.f32.xlu0 %v97
  %v99 = vpop.xlane.xlu0 %98
  %v100 = vsel %vm68, %v90, 0.0
  %101 = vadd.xlane.f32.xlu0 %v100
  %v102 = vpop.xlane.xlu0 %101
  %v103 = vmul.f32 %v93, %v78
  %v104 = vmul.f32 %v96, %v78
  %v105 = vmul.f32 %v99, %v78
  %v106 = vmul.f32 %v102, %v78
  %v107 = vadd.f32 %v103, 1e-05
  %v108 = vadd.f32 %v104, 1e-05
  %v109 = vadd.f32 %v105, 1e-05
  %v110 = vadd.f32 %v106, 1e-05
  %v111 = vrsqrt.pop %v107
  %v112 = vmul.f32 %v111, %v107
  %v113 = vmul.f32 %v112, %v111
  %v114 = vmul.f32 0.5, %v113
  %v115 = vsub.f32 1.5, %v114
  %v116 = vmul.f32 %v111, %v115
  %vm117 = vweird.f32 %v107
  %vm118 = vweird.f32 %v111
  %vm119 = vmor %vm117, %vm118
  %v120 = vsel %vm119, %v111, %v116
  %v121 = vrsqrt.pop %v108
  %v122 = vmul.f32 %v121, %v108
  %v123 = vmul.f32 %v122, %v121
  %v124 = vmul.f32 0.5, %v123
  %v125 = vsub.f32 1.5, %v124
  %v126 = vmul.f32 %v121, %v125
  %vm127 = vweird.f32 %v108
  %vm128 = vweird.f32 %v121
  %vm129 = vmor %vm127, %vm128
  %v130 = vsel %vm129, %v121, %v126
  %v131 = vrsqrt.pop %v109
  %v132 = vmul.f32 %v131, %v109
  %v133 = vmul.f32 %v132, %v131
  %v134 = vmul.f32 0.5, %v133
  %v135 = vsub.f32 1.5, %v134
  %v136 = vmul.f32 %v131, %v135
  %vm137 = vweird.f32 %v109
  %vm138 = vweird.f32 %v131
  %vm139 = vmor %vm137, %vm138
  %v140 = vsel %vm139, %v131, %v136
  %v141 = vrsqrt.pop %v110
  %v142 = vmul.f32 %v141, %v110
  %v143 = vmul.f32 %v142, %v141
  %v144 = vmul.f32 0.5, %v143
  %v145 = vsub.f32 1.5, %v144
  %v146 = vmul.f32 %v141, %v145
  %vm147 = vweird.f32 %v110
  %vm148 = vweird.f32 %v141
  %vm149 = vmor %vm147, %vm148
  %v150 = vsel %vm149, %v141, %v146
  %v151 = vmul.f32 %v83, %v120
  %v152 = vmul.f32 %v84, %v130
  %v153 = vmul.f32 %v85, %v140
  %v154 = vmul.f32 %v86, %v150
  %v156 = vperm.slane %v56, 0
  %v158 = vmul.f32 %v151, %v156
  %v159 = vmul.f32 %v152, %v156
  %v160 = vmul.f32 %v153, %v156
  %v161 = vmul.f32 %v154, %v156
  %v163 = vperm.slane %v57, 0
  %v165 = vadd.f32 %v158, %v163
  %v166 = vadd.f32 %v159, %v163
  %v167 = vadd.f32 %v160, %v163
  %v168 = vadd.f32 %v161, %v163
  %v169 = vld [vmem:[%s4] sm:$0xff]
  %v170 = vld [vmem:[%s4 + $0x8] sm:$0xff]
  %v171 = vld [vmem:[%s4 + $0x10] sm:$0xff]
  %v172 = vld [vmem:[%s4 + $0x18] sm:$0xff]
  %v173 = vld [vmem:[%s4 + $0x20] sm:$0xff]
  %v174 = vld [vmem:[%s4 + $0x28] sm:$0xff]
  %v175 = vld [vmem:[%s4 + $0x30] sm:$0xff]
  %v176 = vld [vmem:[%s4 + $0x38] sm:$0xff]
  %v177 = vld [vmem:[%s4 + $0x40] sm:$0xff]
  %v178 = vld [vmem:[%s4 + $0x48] sm:$0xff]
  %v179 = vld [vmem:[%s4 + $0x50] sm:$0xff]
  %v180 = vld [vmem:[%s4 + $0x58] sm:$0xff]
  %v181 = vld [vmem:[%s4 + $0x60] sm:$0xff]
  %v182 = vld [vmem:[%s4 + $0x68] sm:$0xff]
  %v183 = vld [vmem:[%s4 + $0x70] sm:$0xff]
  %v184 = vld [vmem:[%s4 + $0x78] sm:$0xff]
  %v185 = vpack.c.bf16 %v166, %v165
  %v186 = vpack.c.bf16 %v168, %v167
  %v187 = vpack.c.bf16 %v171, %v169
  %v188 = vpack.c.bf16 %v172, %v170
  %v189 = vpack.c.bf16 %v175, %v173
  %v190 = vpack.c.bf16 %v176, %v174
  %v191 = vpack.c.bf16 %v179, %v177
  %v192 = vpack.c.bf16 %v180, %v178
  %v193 = vpack.c.bf16 %v183, %v181
  %v194 = vpack.c.bf16 %v184, %v182
  %v195 = vld [vmem:[%s5] sm:$0x3]
  %v197 = vperm.slane %v195, 0
  %v198 = vperm.slane %v195, 1
  %v202 = vsel %vm58, %v185, 0
  %v205 = vsel %vm58, %v186, 0
  %207 = vmatpush.bf16.msra.mxu0 0
  %208 = vmatpush.bf16.msra.mxu0 0
  %209 = vmatpush.bf16.msra.mxu0 0
  %210 = vmatpush.bf16.msra.mxu0 0
  %211 = vmatpush.bf16.msra.mxu0 %v193
  %212 = vmatpush.bf16.msra.mxu0 %v191
  %213 = vmatpush.bf16.msra.mxu0 %v189
  %214 = vmatpush.bf16.msra.mxu0 %v187
  %215 = vmatmul.bf16.gmra.mxu0 %v202
  %v216 = vpop.f32.mrf.mxu0
  %v217 = vadd.f32 %v197, %v216
  %v218 = vpop.f32.mrf.mxu0
  %v219 = vadd.f32 %v197, %v218
  %220 = vmatmul.bf16.gmra.mxu0 %v205
  %v221 = vpop.f32.mrf.mxu0
  %v222 = vadd.f32 %v197, %v221
  %v223 = vpop.f32.mrf.mxu0
  %v224 = vadd.f32 %v197, %v223
  %225 = vdwg.mxu0
  %226 = vmatpush.bf16.msra.mxu0 0
  %227 = vmatpush.bf16.msra.mxu0 0
  %228 = vmatpush.bf16.msra.mxu0 0
  %229 = vmatpush.bf16.msra.mxu0 0
  %230 = vmatpush.bf16.msra.mxu0 %v194
  %231 = vmatpush.bf16.msra.mxu0 %v192
  %232 = vmatpush.bf16.msra.mxu0 %v190
  %233 = vmatpush.bf16.msra.mxu0 %v188
  %234 = vmatmul.bf16.gmra.mxu0 %v202
  %v235 = vpop.f32.mrf.mxu0
  %v236 = vadd.f32 %v198, %v235
  %v237 = vpop.f32.mrf.mxu0
  %v238 = vadd.f32 %v198, %v237
  %239 = vmatmul.bf16.gmra.mxu0 %v205
  %v240 = vpop.f32.mrf.mxu0
  %v241 = vadd.f32 %v198, %v240
  %v242 = vpop.f32.mrf.mxu0
  %v243 = vadd.f32 %v198, %v242
  %244 = vdwg.mxu0
  %v245 = vmul.f32 %v217, 0.25
  %v246 = vmul.f32 %v219, 0.25
  %v247 = vmul.f32 %v222, 0.25
  %v248 = vmul.f32 %v224, 0.25
  %v249 = vpack.c.bf16 %v246, %v245
  %v250 = vpack.c.bf16 %v248, %v247
  %v251 = vpack.c.bf16 %v219, %v217
  %v252 = vpack.c.bf16 %v224, %v222
  %255 = vrot.lane.b32.xlu0 %v251, 64
  %v256 = vpop.permute.xlu0 %255
  %257 = vrot.lane.b32.xlu0 %v252, 64
  %v258 = vpop.permute.xlu0 %257
  %vm259 = vcmask 130048
  %v261 = vsel %vm259, %v249, 0
  %v264 = vsel %vm259, %v250, 0
  %v267 = vsel %vm259, %v256, 0
  %v270 = vsel %vm259, %v258, 0
  %272 = vmatpush.bf16.xpose.msra.mxu0 0
  %273 = vmatpush.bf16.xpose.msra.mxu0 0
  %274 = vmatpush.bf16.xpose.msra.mxu0 0
  %275 = vmatpush.bf16.xpose.msra.mxu0 0
  %276 = vmatpush.bf16.xpose.msra.mxu0 0
  %277 = vmatpush.bf16.xpose.msra.mxu0 0
  %278 = vmatpush.bf16.xpose.msra.mxu0 %v270
  %279 = vmatpush.bf16.xpose.msra.mxu0 %v267
  %280 = vmatmul.bf16.gmra.mxu0 %v261
  %v281 = vpop.f32.mrf.mxu0
  %v282 = vadd.f32 %v52, %v281
  %v283 = vpop.f32.mrf.mxu0
  %v284 = vadd.f32 %v53, %v283
  %285 = vmatmul.bf16.gmra.mxu0 %v264
  %v286 = vpop.f32.mrf.mxu0
  %v287 = vadd.f32 %v54, %v286
  %v288 = vpop.f32.mrf.mxu0
  %v289 = vadd.f32 %v55, %v288
  %290 = vdwg.mxu0
  %vm291 = vcmask 211968
  %v292 = vsel %vm291, %v282, -inf
  %293 = vmax.xlane.f32.xlu0 %v292
  %v294 = vpop.xlane.xlu0 %293
  %v295 = vsel %vm291, %v284, -inf
  %296 = vmax.xlane.f32.xlu0 %v295
  %v297 = vpop.xlane.xlu0 %296
  %v298 = vsel %vm291, %v287, -inf
  %299 = vmax.xlane.f32.xlu0 %v298
  %v300 = vpop.xlane.xlu0 %299
  %vm301 = vcmask 205824
  %v302 = vsel %vm301, %v289, -inf
  %303 = vmax.xlane.f32.xlu0 %v302
  %v304 = vpop.xlane.xlu0 %303
  %v305 = vsub.f32 %v282, %v294
  %v306 = vsub.f32 %v284, %v297
  %v307 = vsub.f32 %v287, %v300
  %v308 = vsub.f32 %v289, %v304
  %v309 = vmul.f32 %v305, 1.442695
  %v310 = vpow.pop %v309
  %v311 = vmul.f32 %v306, 1.442695
  %v312 = vpow.pop %v311
  %v313 = vmul.f32 %v307, 1.442695
  %v314 = vpow.pop %v313
  %v315 = vmul.f32 %v308, 1.442695
  %v316 = vpow.pop %v315
  %v317 = vsel %vm291, %v310, 0.0
  %318 = vadd.xlane.f32.xlu0 %v317
  %v319 = vpop.xlane.xlu0 %318
  %v320 = vsel %vm291, %v312, 0.0
  %321 = vadd.xlane.f32.xlu0 %v320
  %v322 = vpop.xlane.xlu0 %321
  %v323 = vsel %vm291, %v314, 0.0
  %324 = vadd.xlane.f32.xlu0 %v323
  %v325 = vpop.xlane.xlu0 %324
  %v326 = vsel %vm301, %v316, 0.0
  %327 = vadd.xlane.f32.xlu0 %v326
  %v328 = vpop.xlane.xlu0 %327
  %v329 = vrcp.pop %v319
  %v330 = vmul.f32 %v319, %v329
  %v331 = vsub.f32 1.0, %v330
  %v332 = vmul.f32 %v329, %v331
  %v333 = vadd.f32 %v329, %v332
  %vm334 = vweird.f32 %v319
  %vm335 = vweird.f32 %v329
  %vm336 = vmor %vm334, %vm335
  %v337 = vsel %vm336, %v329, %v333
  %v338 = vand.u32 2147483647, %v319
  %vm339 = vcmp.eq.f32.partialorder %v338, 8.507059e+37
  %v340 = vand.u32 %v319, 2147483648
  %v341 = vor.u32 1.1754944e-38, %v340
  %v342 = vsel %vm339, %v341, %v337
  %v343 = vmul.f32 %v310, %v342
  %v344 = vrcp.pop %v322
  %v345 = vmul.f32 %v322, %v344
  %v346 = vsub.f32 1.0, %v345
  %v347 = vmul.f32 %v344, %v346
  %v348 = vadd.f32 %v344, %v347
  %vm349 = vweird.f32 %v322
  %vm350 = vweird.f32 %v344
  %vm351 = vmor %vm349, %vm350
  %v352 = vsel %vm351, %v344, %v348
  %v353 = vand.u32 2147483647, %v322
  %vm354 = vcmp.eq.f32.partialorder %v353, 8.507059e+37
  %v355 = vand.u32 %v322, 2147483648
  %v356 = vor.u32 1.1754944e-38, %v355
  %v357 = vsel %vm354, %v356, %v352
  %v358 = vmul.f32 %v312, %v357
  %v359 = vrcp.pop %v325
  %v360 = vmul.f32 %v325, %v359
  %v361 = vsub.f32 1.0, %v360
  %v362 = vmul.f32 %v359, %v361
  %v363 = vadd.f32 %v359, %v362
  %vm364 = vweird.f32 %v325
  %vm365 = vweird.f32 %v359
  %vm366 = vmor %vm364, %vm365
  %v367 = vsel %vm366, %v359, %v363
  %v368 = vand.u32 2147483647, %v325
  %vm369 = vcmp.eq.f32.partialorder %v368, 8.507059e+37
  %v370 = vand.u32 %v325, 2147483648
  %v371 = vor.u32 1.1754944e-38, %v370
  %v372 = vsel %vm369, %v371, %v367
  %v373 = vmul.f32 %v314, %v372
  %v374 = vrcp.pop %v328
  %v375 = vmul.f32 %v328, %v374
  %v376 = vsub.f32 1.0, %v375
  %v377 = vmul.f32 %v374, %v376
  %v378 = vadd.f32 %v374, %v377
  %vm379 = vweird.f32 %v328
  %vm380 = vweird.f32 %v374
  %vm381 = vmor %vm379, %vm380
  %v382 = vsel %vm381, %v374, %v378
  %v383 = vand.u32 2147483647, %v328
  %vm384 = vcmp.eq.f32.partialorder %v383, 8.507059e+37
  %v385 = vand.u32 %v328, 2147483648
  %v386 = vor.u32 1.1754944e-38, %v385
  %v387 = vsel %vm384, %v386, %v382
  %v388 = vmul.f32 %v316, %v387
  %v389 = vpack.c.bf16 %v358, %v343
  %v390 = vpack.c.bf16 %v388, %v373
  %v391 = vpack.c.bf16 %v238, %v236
  %v392 = vpack.c.bf16 %v243, %v241
  %v394 = vsel %vm291, %v389, 0
  %v397 = vsel %vm291, %v390, 0
  %vm399 = vcmask 1044480
  %v401 = vsel %vm399, %v392, 0
  %403 = vmatpush.bf16.msra.mxu0 0
  %404 = vmatpush.bf16.msra.mxu0 0
  %405 = vmatpush.bf16.msra.mxu0 0
  %406 = vmatpush.bf16.msra.mxu0 0
  %407 = vmatpush.bf16.msra.mxu0 0
  %408 = vmatpush.bf16.msra.mxu0 0
  %409 = vmatpush.bf16.msra.mxu0 %v401
  %410 = vmatpush.bf16.msra.mxu0 %v391
  %411 = vmatmul.bf16.gmra.mxu0 %v394
  %v412 = vpop.f32.mrf.mxu0
  %v413 = vadd.f32 0.0, %v412
  %v414 = vpop.f32.mrf.mxu0
  %v415 = vadd.f32 0.0, %v414
  %416 = vmatmul.bf16.gmra.mxu0 %v397
  %v417 = vpop.f32.mrf.mxu0
  %v418 = vadd.f32 0.0, %v417
  %v419 = vpop.f32.mrf.mxu0
  %v420 = vadd.f32 0.0, %v419
  %421 = vdwg.mxu0
  %v422 = vld [vmem:[%s6] sm:$0xff]
  %v423 = vld [vmem:[%s6 + $0x8] sm:$0xff]
  %v424 = vpack.c.bf16 %v415, %v413
  %v425 = vpack.c.bf16 %v420, %v418
  %v426 = vpack.c.bf16 %v423, %v422
  %429 = vrot.lane.b32.xlu0 %v249, 112
  %v430 = vpop.permute.xlu0 %429
  %431 = vrot.lane.b32.xlu0 %v250, 112
  %v432 = vpop.permute.xlu0 %431
  %433 = vrot.lane.b32.xlu0 %v251, 48
  %v434 = vpop.permute.xlu0 %433
  %435 = vrot.lane.b32.xlu0 %v252, 48
  %v436 = vpop.permute.xlu0 %435
  %v438 = vsel %vm259, %v430, 0
  %v441 = vsel %vm259, %v432, 0
  %v444 = vsel %vm259, %v434, 0
  %v447 = vsel %vm259, %v436, 0
  %449 = vmatpush.bf16.xpose.msra.mxu0 0
  %450 = vmatpush.bf16.xpose.msra.mxu0 0
  %451 = vmatpush.bf16.xpose.msra.mxu0 0
  %452 = vmatpush.bf16.xpose.msra.mxu0 0
  %453 = vmatpush.bf16.xpose.msra.mxu0 0
  %454 = vmatpush.bf16.xpose.msra.mxu0 0
  %455 = vmatpush.bf16.xpose.msra.mxu0 %v447
  %456 = vmatpush.bf16.xpose.msra.mxu0 %v444
  %457 = vmatmul.bf16.gmra.mxu0 %v438
  %v458 = vpop.f32.mrf.mxu0
  %v459 = vadd.f32 %v52, %v458
  %v460 = vpop.f32.mrf.mxu0
  %v461 = vadd.f32 %v53, %v460
  %462 = vmatmul.bf16.gmra.mxu0 %v441
  %v463 = vpop.f32.mrf.mxu0
  %v464 = vadd.f32 %v54, %v463
  %v465 = vpop.f32.mrf.mxu0
  %v466 = vadd.f32 %v55, %v465
  %467 = vdwg.mxu0
  %v468 = vsel %vm291, %v459, -inf
  %469 = vmax.xlane.f32.xlu0 %v468
  %v470 = vpop.xlane.xlu0 %469
  %v471 = vsel %vm291, %v461, -inf
  %472 = vmax.xlane.f32.xlu0 %v471
  %v473 = vpop.xlane.xlu0 %472
  %v474 = vsel %vm291, %v464, -inf
  %475 = vmax.xlane.f32.xlu0 %v474
  %v476 = vpop.xlane.xlu0 %475
  %v477 = vsel %vm301, %v466, -inf
  %478 = vmax.xlane.f32.xlu0 %v477
  %v479 = vpop.xlane.xlu0 %478
  %v480 = vsub.f32 %v459, %v470
  %v481 = vsub.f32 %v461, %v473
  %v482 = vsub.f32 %v464, %v476
  %v483 = vsub.f32 %v466, %v479
  %v484 = vmul.f32 %v480, 1.442695
  %v485 = vpow.pop %v484
  %v486 = vmul.f32 %v481, 1.442695
  %v487 = vpow.pop %v486
  %v488 = vmul.f32 %v482, 1.442695
  %v489 = vpow.pop %v488
  %v490 = vmul.f32 %v483, 1.442695
  %v491 = vpow.pop %v490
  %v492 = vsel %vm291, %v485, 0.0
  %493 = vadd.xlane.f32.xlu0 %v492
  %v494 = vpop.xlane.xlu0 %493
  %v495 = vsel %vm291, %v487, 0.0
  %496 = vadd.xlane.f32.xlu0 %v495
  %v497 = vpop.xlane.xlu0 %496
  %v498 = vsel %vm291, %v489, 0.0
  %499 = vadd.xlane.f32.xlu0 %v498
  %v500 = vpop.xlane.xlu0 %499
  %v501 = vsel %vm301, %v491, 0.0
  %502 = vadd.xlane.f32.xlu0 %v501
  %v503 = vpop.xlane.xlu0 %502
  %v504 = vrcp.pop %v494
  %v505 = vmul.f32 %v494, %v504
  %v506 = vsub.f32 1.0, %v505
  %v507 = vmul.f32 %v504, %v506
  %v508 = vadd.f32 %v504, %v507
  %vm509 = vweird.f32 %v494
  %vm510 = vweird.f32 %v504
  %vm511 = vmor %vm509, %vm510
  %v512 = vsel %vm511, %v504, %v508
  %v513 = vand.u32 2147483647, %v494
  %vm514 = vcmp.eq.f32.partialorder %v513, 8.507059e+37
  %v515 = vand.u32 %v494, 2147483648
  %v516 = vor.u32 1.1754944e-38, %v515
  %v517 = vsel %vm514, %v516, %v512
  %v518 = vmul.f32 %v485, %v517
  %v519 = vrcp.pop %v497
  %v520 = vmul.f32 %v497, %v519
  %v521 = vsub.f32 1.0, %v520
  %v522 = vmul.f32 %v519, %v521
  %v523 = vadd.f32 %v519, %v522
  %vm524 = vweird.f32 %v497
  %vm525 = vweird.f32 %v519
  %vm526 = vmor %vm524, %vm525
  %v527 = vsel %vm526, %v519, %v523
  %v528 = vand.u32 2147483647, %v497
  %vm529 = vcmp.eq.f32.partialorder %v528, 8.507059e+37
  %v530 = vand.u32 %v497, 2147483648
  %v531 = vor.u32 1.1754944e-38, %v530
  %v532 = vsel %vm529, %v531, %v527
  %v533 = vmul.f32 %v487, %v532
  %v534 = vrcp.pop %v500
  %v535 = vmul.f32 %v500, %v534
  %v536 = vsub.f32 1.0, %v535
  %v537 = vmul.f32 %v534, %v536
  %v538 = vadd.f32 %v534, %v537
  %vm539 = vweird.f32 %v500
  %vm540 = vweird.f32 %v534
  %vm541 = vmor %vm539, %vm540
  %v542 = vsel %vm541, %v534, %v538
  %v543 = vand.u32 2147483647, %v500
  %vm544 = vcmp.eq.f32.partialorder %v543, 8.507059e+37
  %v545 = vand.u32 %v500, 2147483648
  %v546 = vor.u32 1.1754944e-38, %v545
  %v547 = vsel %vm544, %v546, %v542
  %v548 = vmul.f32 %v489, %v547
  %v549 = vrcp.pop %v503
  %v550 = vmul.f32 %v503, %v549
  %v551 = vsub.f32 1.0, %v550
  %v552 = vmul.f32 %v549, %v551
  %v553 = vadd.f32 %v549, %v552
  %vm554 = vweird.f32 %v503
  %vm555 = vweird.f32 %v549
  %vm556 = vmor %vm554, %vm555
  %v557 = vsel %vm556, %v549, %v553
  %v558 = vand.u32 2147483647, %v503
  %vm559 = vcmp.eq.f32.partialorder %v558, 8.507059e+37
  %v560 = vand.u32 %v503, 2147483648
  %v561 = vor.u32 1.1754944e-38, %v560
  %v562 = vsel %vm559, %v561, %v557
  %v563 = vmul.f32 %v491, %v562
  %v564 = vpack.c.bf16 %v533, %v518
  %v565 = vpack.c.bf16 %v563, %v548
  %568 = vrot.lane.b32.xlu0 %v391, 112
  %v569 = vpop.permute.xlu0 %568
  %570 = vrot.lane.b32.xlu0 %v392, 112
  %v571 = vpop.permute.xlu0 %570
  %v574 = vsel %vm291, %v564, 0
  %v577 = vsel %vm291, %v565, 0
  %v580 = vsel %vm399, %v571, 0
  %582 = vmatpush.bf16.msra.mxu0 0
  %583 = vmatpush.bf16.msra.mxu0 0
  %584 = vmatpush.bf16.msra.mxu0 0
  %585 = vmatpush.bf16.msra.mxu0 0
  %586 = vmatpush.bf16.msra.mxu0 0
  %587 = vmatpush.bf16.msra.mxu0 0
  %588 = vmatpush.bf16.msra.mxu0 %v580
  %589 = vmatpush.bf16.msra.mxu0 %v569
  %590 = vmatmul.bf16.gmra.mxu0 %v574
  %v591 = vpop.f32.mrf.mxu0
  %v592 = vadd.f32 0.0, %v591
  %v593 = vpop.f32.mrf.mxu0
  %v594 = vadd.f32 0.0, %v593
  %595 = vmatmul.bf16.gmra.mxu0 %v577
  %v596 = vpop.f32.mrf.mxu0
  %v597 = vadd.f32 0.0, %v596
  %v598 = vpop.f32.mrf.mxu0
  %v599 = vadd.f32 0.0, %v598
  %600 = vdwg.mxu0
  %v601 = vld [vmem:[%s6 + $0x10] sm:$0xff]
  %v602 = vld [vmem:[%s6 + $0x18] sm:$0xff]
  %v603 = vpack.c.bf16 %v594, %v592
  %v604 = vpack.c.bf16 %v599, %v597
  %v605 = vpack.c.bf16 %v602, %v601
  %v607 = vsel %vm259, %v603, 0
  %v610 = vsel %vm259, %v604, 0
  %612 = vmatpush.bf16.msra.mxu0 0
  %613 = vmatpush.bf16.msra.mxu0 0
  %614 = vmatpush.bf16.msra.mxu0 0
  %615 = vmatpush.bf16.msra.mxu0 0
  %616 = vmatpush.bf16.msra.mxu0 0
  %617 = vmatpush.bf16.msra.mxu0 0
  %618 = vmatpush.bf16.msra.mxu0 0
  %619 = vmatpush.bf16.msra.mxu0 %v605
  %620 = vmatmul.bf16.gmra.mxu0 %v607
  %v621 = vpop.f32.mrf.mxu0
  %v622 = vadd.f32 0.0, %v621
  %v623 = vpop.f32.mrf.mxu0
  %v624 = vadd.f32 0.0, %v623
  %625 = vmatmul.bf16.gmra.mxu0 %v610
  %v626 = vpop.f32.mrf.mxu0
  %v627 = vadd.f32 0.0, %v626
  %v628 = vpop.f32.mrf.mxu0
  %v629 = vadd.f32 0.0, %v628
  %630 = vdwg.mxu0
  %v632 = vsel %vm259, %v424, 0
  %v635 = vsel %vm259, %v425, 0
  %637 = vmatpush.bf16.msra.mxu0 0
  %638 = vmatpush.bf16.msra.mxu0 0
  %639 = vmatpush.bf16.msra.mxu0 0
  %640 = vmatpush.bf16.msra.mxu0 0
  %641 = vmatpush.bf16.msra.mxu0 0
  %642 = vmatpush.bf16.msra.mxu0 0
  %643 = vmatpush.bf16.msra.mxu0 0
  %644 = vmatpush.bf16.msra.mxu0 %v426
  %645 = vmatmul.bf16.gmra.mxu0 %v632
  %v646 = vpop.f32.mrf.mxu0
  %v647 = vadd.f32 %v622, %v646
  %v648 = vpop.f32.mrf.mxu0
  %v649 = vadd.f32 %v624, %v648
  %650 = vmatmul.bf16.gmra.mxu0 %v635
  %v651 = vpop.f32.mrf.mxu0
  %v652 = vadd.f32 %v627, %v651
  %v653 = vpop.f32.mrf.mxu0
  %v654 = vadd.f32 %v629, %v653
  %655 = vdwg.mxu0
  %656 = vrot.lane.b32.xlu0 %v249, 96
  %v657 = vpop.permute.xlu0 %656
  %658 = vrot.lane.b32.xlu0 %v250, 96
  %v659 = vpop.permute.xlu0 %658
  %660 = vrot.lane.b32.xlu0 %v251, 32
  %v661 = vpop.permute.xlu0 %660
  %662 = vrot.lane.b32.xlu0 %v252, 32
  %v663 = vpop.permute.xlu0 %662
  %v665 = vsel %vm259, %v657, 0
  %v668 = vsel %vm259, %v659, 0
  %v671 = vsel %vm259, %v661, 0
  %v674 = vsel %vm259, %v663, 0
  %676 = vmatpush.bf16.xpose.msra.mxu0 0
  %677 = vmatpush.bf16.xpose.msra.mxu0 0
  %678 = vmatpush.bf16.xpose.msra.mxu0 0
  %679 = vmatpush.bf16.xpose.msra.mxu0 0
  %680 = vmatpush.bf16.xpose.msra.mxu0 0
  %681 = vmatpush.bf16.xpose.msra.mxu0 0
  %682 = vmatpush.bf16.xpose.msra.mxu0 %v674
  %683 = vmatpush.bf16.xpose.msra.mxu0 %v671
  %684 = vmatmul.bf16.gmra.mxu0 %v665
  %v685 = vpop.f32.mrf.mxu0
  %v686 = vadd.f32 %v52, %v685
  %v687 = vpop.f32.mrf.mxu0
  %v688 = vadd.f32 %v53, %v687
  %689 = vmatmul.bf16.gmra.mxu0 %v668
  %v690 = vpop.f32.mrf.mxu0
  %v691 = vadd.f32 %v54, %v690
  %v692 = vpop.f32.mrf.mxu0
  %v693 = vadd.f32 %v55, %v692
  %694 = vdwg.mxu0
  %v695 = vsel %vm291, %v686, -inf
  %696 = vmax.xlane.f32.xlu0 %v695
  %v697 = vpop.xlane.xlu0 %696
  %v698 = vsel %vm291, %v688, -inf
  %699 = vmax.xlane.f32.xlu0 %v698
  %v700 = vpop.xlane.xlu0 %699
  %v701 = vsel %vm291, %v691, -inf
  %702 = vmax.xlane.f32.xlu0 %v701
  %v703 = vpop.xlane.xlu0 %702
  %v704 = vsel %vm301, %v693, -inf
  %705 = vmax.xlane.f32.xlu0 %v704
  %v706 = vpop.xlane.xlu0 %705
  %v707 = vsub.f32 %v686, %v697
  %v708 = vsub.f32 %v688, %v700
  %v709 = vsub.f32 %v691, %v703
  %v710 = vsub.f32 %v693, %v706
  %v711 = vmul.f32 %v707, 1.442695
  %v712 = vpow.pop %v711
  %v713 = vmul.f32 %v708, 1.442695
  %v714 = vpow.pop %v713
  %v715 = vmul.f32 %v709, 1.442695
  %v716 = vpow.pop %v715
  %v717 = vmul.f32 %v710, 1.442695
  %v718 = vpow.pop %v717
  %v719 = vsel %vm291, %v712, 0.0
  %720 = vadd.xlane.f32.xlu0 %v719
  %v721 = vpop.xlane.xlu0 %720
  %v722 = vsel %vm291, %v714, 0.0
  %723 = vadd.xlane.f32.xlu0 %v722
  %v724 = vpop.xlane.xlu0 %723
  %v725 = vsel %vm291, %v716, 0.0
  %726 = vadd.xlane.f32.xlu0 %v725
  %v727 = vpop.xlane.xlu0 %726
  %v728 = vsel %vm301, %v718, 0.0
  %729 = vadd.xlane.f32.xlu0 %v728
  %v730 = vpop.xlane.xlu0 %729
  %v731 = vrcp.pop %v721
  %v732 = vmul.f32 %v721, %v731
  %v733 = vsub.f32 1.0, %v732
  %v734 = vmul.f32 %v731, %v733
  %v735 = vadd.f32 %v731, %v734
  %vm736 = vweird.f32 %v721
  %vm737 = vweird.f32 %v731
  %vm738 = vmor %vm736, %vm737
  %v739 = vsel %vm738, %v731, %v735
  %v740 = vand.u32 2147483647, %v721
  %vm741 = vcmp.eq.f32.partialorder %v740, 8.507059e+37
  %v742 = vand.u32 %v721, 2147483648
  %v743 = vor.u32 1.1754944e-38, %v742
  %v744 = vsel %vm741, %v743, %v739
  %v745 = vmul.f32 %v712, %v744
  %v746 = vrcp.pop %v724
  %v747 = vmul.f32 %v724, %v746
  %v748 = vsub.f32 1.0, %v747
  %v749 = vmul.f32 %v746, %v748
  %v750 = vadd.f32 %v746, %v749
  %vm751 = vweird.f32 %v724
  %vm752 = vweird.f32 %v746
  %vm753 = vmor %vm751, %vm752
  %v754 = vsel %vm753, %v746, %v750
  %v755 = vand.u32 2147483647, %v724
  %vm756 = vcmp.eq.f32.partialorder %v755, 8.507059e+37
  %v757 = vand.u32 %v724, 2147483648
  %v758 = vor.u32 1.1754944e-38, %v757
  %v759 = vsel %vm756, %v758, %v754
  %v760 = vmul.f32 %v714, %v759
  %v761 = vrcp.pop %v727
  %v762 = vmul.f32 %v727, %v761
  %v763 = vsub.f32 1.0, %v762
  %v764 = vmul.f32 %v761, %v763
  %v765 = vadd.f32 %v761, %v764
  %vm766 = vweird.f32 %v727
  %vm767 = vweird.f32 %v761
  %vm768 = vmor %vm766, %vm767
  %v769 = vsel %vm768, %v761, %v765
  %v770 = vand.u32 2147483647, %v727
  %vm771 = vcmp.eq.f32.partialorder %v770, 8.507059e+37
  %v772 = vand.u32 %v727, 2147483648
  %v773 = vor.u32 1.1754944e-38, %v772
  %v774 = vsel %vm771, %v773, %v769
  %v775 = vmul.f32 %v716, %v774
  %v776 = vrcp.pop %v730
  %v777 = vmul.f32 %v730, %v776
  %v778 = vsub.f32 1.0, %v777
  %v779 = vmul.f32 %v776, %v778
  %v780 = vadd.f32 %v776, %v779
  %vm781 = vweird.f32 %v730
  %vm782 = vweird.f32 %v776
  %vm783 = vmor %vm781, %vm782
  %v784 = vsel %vm783, %v776, %v780
  %v785 = vand.u32 2147483647, %v730
  %vm786 = vcmp.eq.f32.partialorder %v785, 8.507059e+37
  %v787 = vand.u32 %v730, 2147483648
  %v788 = vor.u32 1.1754944e-38, %v787
  %v789 = vsel %vm786, %v788, %v784
  %v790 = vmul.f32 %v718, %v789
  %v791 = vpack.c.bf16 %v760, %v745
  %v792 = vpack.c.bf16 %v790, %v775
  %793 = vrot.lane.b32.xlu0 %v391, 96
  %v794 = vpop.permute.xlu0 %793
  %795 = vrot.lane.b32.xlu0 %v392, 96
  %v796 = vpop.permute.xlu0 %795
  %v799 = vsel %vm291, %v791, 0
  %v802 = vsel %vm291, %v792, 0
  %v805 = vsel %vm399, %v796, 0
  %807 = vmatpush.bf16.msra.mxu0 0
  %808 = vmatpush.bf16.msra.mxu0 0
  %809 = vmatpush.bf16.msra.mxu0 0
  %810 = vmatpush.bf16.msra.mxu0 0
  %811 = vmatpush.bf16.msra.mxu0 0
  %812 = vmatpush.bf16.msra.mxu0 0
  %813 = vmatpush.bf16.msra.mxu0 %v805
  %814 = vmatpush.bf16.msra.mxu0 %v794
  %815 = vmatmul.bf16.gmra.mxu0 %v799
  %v816 = vpop.f32.mrf.mxu0
  %v817 = vadd.f32 0.0, %v816
  %v818 = vpop.f32.mrf.mxu0
  %v819 = vadd.f32 0.0, %v818
  %820 = vmatmul.bf16.gmra.mxu0 %v802
  %v821 = vpop.f32.mrf.mxu0
  %v822 = vadd.f32 0.0, %v821
  %v823 = vpop.f32.mrf.mxu0
  %v824 = vadd.f32 0.0, %v823
  %825 = vdwg.mxu0
  %v826 = vld [vmem:[%s6 + $0x20] sm:$0xff]
  %v827 = vld [vmem:[%s6 + $0x28] sm:$0xff]
  %v828 = vpack.c.bf16 %v819, %v817
  %v829 = vpack.c.bf16 %v824, %v822
  %v830 = vpack.c.bf16 %v827, %v826
  %v832 = vsel %vm259, %v828, 0
  %v835 = vsel %vm259, %v829, 0
  %837 = vmatpush.bf16.msra.mxu0 0
  %838 = vmatpush.bf16.msra.mxu0 0
  %839 = vmatpush.bf16.msra.mxu0 0
  %840 = vmatpush.bf16.msra.mxu0 0
  %841 = vmatpush.bf16.msra.mxu0 0
  %842 = vmatpush.bf16.msra.mxu0 0
  %843 = vmatpush.bf16.msra.mxu0 0
  %844 = vmatpush.bf16.msra.mxu0 %v830
  %845 = vmatmul.bf16.gmra.mxu0 %v832
  %v846 = vpop.f32.mrf.mxu0
  %v847 = vadd.f32 0.0, %v846
  %v848 = vpop.f32.mrf.mxu0
  %v849 = vadd.f32 0.0, %v848
  %850 = vmatmul.bf16.gmra.mxu0 %v835
  %v851 = vpop.f32.mrf.mxu0
  %v852 = vadd.f32 0.0, %v851
  %v853 = vpop.f32.mrf.mxu0
  %v854 = vadd.f32 0.0, %v853
  %855 = vdwg.mxu0
  %v856 = vadd.f32 %v647, %v847
  %v857 = vadd.f32 %v649, %v849
  %v858 = vadd.f32 %v652, %v852
  %v859 = vadd.f32 %v654, %v854
  %860 = vrot.lane.b32.xlu0 %v249, 80
  %v861 = vpop.permute.xlu0 %860
  %862 = vrot.lane.b32.xlu0 %v250, 80
  %v863 = vpop.permute.xlu0 %862
  %864 = vrot.lane.b32.xlu0 %v251, 16
  %v865 = vpop.permute.xlu0 %864
  %866 = vrot.lane.b32.xlu0 %v252, 16
  %v867 = vpop.permute.xlu0 %866
  %v869 = vsel %vm259, %v861, 0
  %v872 = vsel %vm259, %v863, 0
  %v875 = vsel %vm259, %v865, 0
  %v878 = vsel %vm259, %v867, 0
  %880 = vmatpush.bf16.xpose.msra.mxu0 0
  %881 = vmatpush.bf16.xpose.msra.mxu0 0
  %882 = vmatpush.bf16.xpose.msra.mxu0 0
  %883 = vmatpush.bf16.xpose.msra.mxu0 0
  %884 = vmatpush.bf16.xpose.msra.mxu0 0
  %885 = vmatpush.bf16.xpose.msra.mxu0 0
  %886 = vmatpush.bf16.xpose.msra.mxu0 %v878
  %887 = vmatpush.bf16.xpose.msra.mxu0 %v875
  %888 = vmatmul.bf16.gmra.mxu0 %v869
  %v889 = vpop.f32.mrf.mxu0
  %v890 = vadd.f32 %v52, %v889
  %v891 = vpop.f32.mrf.mxu0
  %v892 = vadd.f32 %v53, %v891
  %893 = vmatmul.bf16.gmra.mxu0 %v872
  %v894 = vpop.f32.mrf.mxu0
  %v895 = vadd.f32 %v54, %v894
  %v896 = vpop.f32.mrf.mxu0
  %v897 = vadd.f32 %v55, %v896
  %898 = vdwg.mxu0
  %v899 = vsel %vm291, %v890, -inf
  %900 = vmax.xlane.f32.xlu0 %v899
  %v901 = vpop.xlane.xlu0 %900
  %v902 = vsel %vm291, %v892, -inf
  %903 = vmax.xlane.f32.xlu0 %v902
  %v904 = vpop.xlane.xlu0 %903
  %v905 = vsel %vm291, %v895, -inf
  %906 = vmax.xlane.f32.xlu0 %v905
  %v907 = vpop.xlane.xlu0 %906
  %v908 = vsel %vm301, %v897, -inf
  %909 = vmax.xlane.f32.xlu0 %v908
  %v910 = vpop.xlane.xlu0 %909
  %v911 = vsub.f32 %v890, %v901
  %v912 = vsub.f32 %v892, %v904
  %v913 = vsub.f32 %v895, %v907
  %v914 = vsub.f32 %v897, %v910
  %v915 = vmul.f32 %v911, 1.442695
  %v916 = vpow.pop %v915
  %v917 = vmul.f32 %v912, 1.442695
  %v918 = vpow.pop %v917
  %v919 = vmul.f32 %v913, 1.442695
  %v920 = vpow.pop %v919
  %v921 = vmul.f32 %v914, 1.442695
  %v922 = vpow.pop %v921
  %v923 = vsel %vm291, %v916, 0.0
  %924 = vadd.xlane.f32.xlu0 %v923
  %v925 = vpop.xlane.xlu0 %924
  %v926 = vsel %vm291, %v918, 0.0
  %927 = vadd.xlane.f32.xlu0 %v926
  %v928 = vpop.xlane.xlu0 %927
  %v929 = vsel %vm291, %v920, 0.0
  %930 = vadd.xlane.f32.xlu0 %v929
  %v931 = vpop.xlane.xlu0 %930
  %v932 = vsel %vm301, %v922, 0.0
  %933 = vadd.xlane.f32.xlu0 %v932
  %v934 = vpop.xlane.xlu0 %933
  %v935 = vrcp.pop %v925
  %v936 = vmul.f32 %v925, %v935
  %v937 = vsub.f32 1.0, %v936
  %v938 = vmul.f32 %v935, %v937
  %v939 = vadd.f32 %v935, %v938
  %vm940 = vweird.f32 %v925
  %vm941 = vweird.f32 %v935
  %vm942 = vmor %vm940, %vm941
  %v943 = vsel %vm942, %v935, %v939
  %v944 = vand.u32 2147483647, %v925
  %vm945 = vcmp.eq.f32.partialorder %v944, 8.507059e+37
  %v946 = vand.u32 %v925, 2147483648
  %v947 = vor.u32 1.1754944e-38, %v946
  %v948 = vsel %vm945, %v947, %v943
  %v949 = vmul.f32 %v916, %v948
  %v950 = vrcp.pop %v928
  %v951 = vmul.f32 %v928, %v950
  %v952 = vsub.f32 1.0, %v951
  %v953 = vmul.f32 %v950, %v952
  %v954 = vadd.f32 %v950, %v953
  %vm955 = vweird.f32 %v928
  %vm956 = vweird.f32 %v950
  %vm957 = vmor %vm955, %vm956
  %v958 = vsel %vm957, %v950, %v954
  %v959 = vand.u32 2147483647, %v928
  %vm960 = vcmp.eq.f32.partialorder %v959, 8.507059e+37
  %v961 = vand.u32 %v928, 2147483648
  %v962 = vor.u32 1.1754944e-38, %v961
  %v963 = vsel %vm960, %v962, %v958
  %v964 = vmul.f32 %v918, %v963
  %v965 = vrcp.pop %v931
  %v966 = vmul.f32 %v931, %v965
  %v967 = vsub.f32 1.0, %v966
  %v968 = vmul.f32 %v965, %v967
  %v969 = vadd.f32 %v965, %v968
  %vm970 = vweird.f32 %v931
  %vm971 = vweird.f32 %v965
  %vm972 = vmor %vm970, %vm971
  %v973 = vsel %vm972, %v965, %v969
  %v974 = vand.u32 2147483647, %v931
  %vm975 = vcmp.eq.f32.partialorder %v974, 8.507059e+37
  %v976 = vand.u32 %v931, 2147483648
  %v977 = vor.u32 1.1754944e-38, %v976
  %v978 = vsel %vm975, %v977, %v973
  %v979 = vmul.f32 %v920, %v978
  %v980 = vrcp.pop %v934
  %v981 = vmul.f32 %v934, %v980
  %v982 = vsub.f32 1.0, %v981
  %v983 = vmul.f32 %v980, %v982
  %v984 = vadd.f32 %v980, %v983
  %vm985 = vweird.f32 %v934
  %vm986 = vweird.f32 %v980
  %vm987 = vmor %vm985, %vm986
  %v988 = vsel %vm987, %v980, %v984
  %v989 = vand.u32 2147483647, %v934
  %vm990 = vcmp.eq.f32.partialorder %v989, 8.507059e+37
  %v991 = vand.u32 %v934, 2147483648
  %v992 = vor.u32 1.1754944e-38, %v991
  %v993 = vsel %vm990, %v992, %v988
  %v994 = vmul.f32 %v922, %v993
  %v995 = vpack.c.bf16 %v964, %v949
  %v996 = vpack.c.bf16 %v994, %v979
  %997 = vrot.lane.b32.xlu0 %v391, 80
  %v998 = vpop.permute.xlu0 %997
  %999 = vrot.lane.b32.xlu0 %v392, 80
  %v1000 = vpop.permute.xlu0 %999
  %v1003 = vsel %vm291, %v995, 0
  %v1006 = vsel %vm291, %v996, 0
  %v1009 = vsel %vm399, %v1000, 0
  %1011 = vmatpush.bf16.msra.mxu0 0
  %1012 = vmatpush.bf16.msra.mxu0 0
  %1013 = vmatpush.bf16.msra.mxu0 0
  %1014 = vmatpush.bf16.msra.mxu0 0
  %1015 = vmatpush.bf16.msra.mxu0 0
  %1016 = vmatpush.bf16.msra.mxu0 0
  %1017 = vmatpush.bf16.msra.mxu0 %v1009
  %1018 = vmatpush.bf16.msra.mxu0 %v998
  %1019 = vmatmul.bf16.gmra.mxu0 %v1003
  %v1020 = vpop.f32.mrf.mxu0
  %v1021 = vadd.f32 0.0, %v1020
  %v1022 = vpop.f32.mrf.mxu0
  %v1023 = vadd.f32 0.0, %v1022
  %1024 = vmatmul.bf16.gmra.mxu0 %v1006
  %v1025 = vpop.f32.mrf.mxu0
  %v1026 = vadd.f32 0.0, %v1025
  %v1027 = vpop.f32.mrf.mxu0
  %v1028 = vadd.f32 0.0, %v1027
  %1029 = vdwg.mxu0
  %v1030 = vld [vmem:[%s6 + $0x30] sm:$0xff]
  %v1031 = vld [vmem:[%s6 + $0x38] sm:$0xff]
  %v1032 = vpack.c.bf16 %v1023, %v1021
  %v1033 = vpack.c.bf16 %v1028, %v1026
  %v1034 = vpack.c.bf16 %v1031, %v1030
  %v1036 = vsel %vm259, %v1032, 0
  %v1039 = vsel %vm259, %v1033, 0
  %1041 = vmatpush.bf16.msra.mxu0 0
  %1042 = vmatpush.bf16.msra.mxu0 0
  %1043 = vmatpush.bf16.msra.mxu0 0
  %1044 = vmatpush.bf16.msra.mxu0 0
  %1045 = vmatpush.bf16.msra.mxu0 0
  %1046 = vmatpush.bf16.msra.mxu0 0
  %1047 = vmatpush.bf16.msra.mxu0 0
  %1048 = vmatpush.bf16.msra.mxu0 %v1034
  %1049 = vmatmul.bf16.gmra.mxu0 %v1036
  %v1050 = vpop.f32.mrf.mxu0
  %v1051 = vadd.f32 0.0, %v1050
  %v1052 = vpop.f32.mrf.mxu0
  %v1053 = vadd.f32 0.0, %v1052
  %1054 = vmatmul.bf16.gmra.mxu0 %v1039
  %v1055 = vpop.f32.mrf.mxu0
  %v1056 = vadd.f32 0.0, %v1055
  %v1057 = vpop.f32.mrf.mxu0
  %v1058 = vadd.f32 0.0, %v1057
  %1059 = vdwg.mxu0
  %v1060 = vadd.f32 %v856, %v1051
  %v1061 = vadd.f32 %v857, %v1053
  %v1062 = vadd.f32 %v858, %v1056
  %v1063 = vadd.f32 %v859, %v1058
  %v1064 = vadd.f32 %v48, %v1060
  %v1065 = vadd.f32 %v49, %v1061
  %v1066 = vadd.f32 %v50, %v1062
  %v1067 = vadd.f32 %v51, %v1063
  %v1068 = vld [vmem:[%s7] sm:$0x1]
  %v1070 = vperm.slane %v1068, 0
  %v1072 = vadd.f32 %v1064, %v1070
  %v1073 = vadd.f32 %v1065, %v1070
  %v1074 = vadd.f32 %v1066, %v1070
  %v1075 = vadd.f32 %v1067, %v1070
  %v1076 = vld [vmem:[%s8] sm:$0x1]
  %v1077 = vld [vmem:[%s9] sm:$0x1]
  %v1078 = vsel %vm58, %v1072, 0.0
  %1079 = vadd.xlane.f32.xlu0 %v1078
  %v1080 = vpop.xlane.xlu0 %1079
  %v1081 = vsel %vm58, %v1073, 0.0
  %1082 = vadd.xlane.f32.xlu0 %v1081
  %v1083 = vpop.xlane.xlu0 %1082
  %v1084 = vsel %vm58, %v1074, 0.0
  %1085 = vadd.xlane.f32.xlu0 %v1084
  %v1086 = vpop.xlane.xlu0 %1085
  %v1087 = vsel %vm68, %v1075, 0.0
  %1088 = vadd.xlane.f32.xlu0 %v1087
  %v1089 = vpop.xlane.xlu0 %1088
  %v1090 = vmul.f32 %v1080, %v78
  %v1091 = vmul.f32 %v1083, %v78
  %v1092 = vmul.f32 %v1086, %v78
  %v1093 = vmul.f32 %v1089, %v78
  %v1094 = vsub.f32 %v1072, %v1090
  %v1095 = vsub.f32 %v1073, %v1091
  %v1096 = vsub.f32 %v1074, %v1092
  %v1097 = vsub.f32 %v1075, %v1093
  %v1098 = vmul.f32 %v1094, %v1094
  %v1099 = vmul.f32 %v1095, %v1095
  %v1100 = vmul.f32 %v1096, %v1096
  %v1101 = vmul.f32 %v1097, %v1097
  %v1102 = vsel %vm58, %v1098, 0.0
  %1103 = vadd.xlane.f32.xlu0 %v1102
  %v1104 = vpop.xlane.xlu0 %1103
  %v1105 = vsel %vm58, %v1099, 0.0
  %1106 = vadd.xlane.f32.xlu0 %v1105
  %v1107 = vpop.xlane.xlu0 %1106
  %v1108 = vsel %vm58, %v1100, 0.0
  %1109 = vadd.xlane.f32.xlu0 %v1108
  %v1110 = vpop.xlane.xlu0 %1109
  %v1111 = vsel %vm68, %v1101, 0.0
  %1112 = vadd.xlane.f32.xlu0 %v1111
  %v1113 = vpop.xlane.xlu0 %1112
  %v1114 = vmul.f32 %v1104, %v78
  %v1115 = vmul.f32 %v1107, %v78
  %v1116 = vmul.f32 %v1110, %v78
  %v1117 = vmul.f32 %v1113, %v78
  %v1118 = vadd.f32 %v1114, 1e-05
  %v1119 = vadd.f32 %v1115, 1e-05
  %v1120 = vadd.f32 %v1116, 1e-05
  %v1121 = vadd.f32 %v1117, 1e-05
  %v1122 = vrsqrt.pop %v1118
  %v1123 = vmul.f32 %v1122, %v1118
  %v1124 = vmul.f32 %v1123, %v1122
  %v1125 = vmul.f32 0.5, %v1124
  %v1126 = vsub.f32 1.5, %v1125
  %v1127 = vmul.f32 %v1122, %v1126
  %vm1128 = vweird.f32 %v1118
  %vm1129 = vweird.f32 %v1122
  %vm1130 = vmor %vm1128, %vm1129
  %v1131 = vsel %vm1130, %v1122, %v1127
  %v1132 = vrsqrt.pop %v1119
  %v1133 = vmul.f32 %v1132, %v1119
  %v1134 = vmul.f32 %v1133, %v1132
  %v1135 = vmul.f32 0.5, %v1134
  %v1136 = vsub.f32 1.5, %v1135
  %v1137 = vmul.f32 %v1132, %v1136
  %vm1138 = vweird.f32 %v1119
  %vm1139 = vweird.f32 %v1132
  %vm1140 = vmor %vm1138, %vm1139
  %v1141 = vsel %vm1140, %v1132, %v1137
  %v1142 = vrsqrt.pop %v1120
  %v1143 = vmul.f32 %v1142, %v1120
  %v1144 = vmul.f32 %v1143, %v1142
  %v1145 = vmul.f32 0.5, %v1144
  %v1146 = vsub.f32 1.5, %v1145
  %v1147 = vmul.f32 %v1142, %v1146
  %vm1148 = vweird.f32 %v1120
  %vm1149 = vweird.f32 %v1142
  %vm1150 = vmor %vm1148, %vm1149
  %v1151 = vsel %vm1150, %v1142, %v1147
  %v1152 = vrsqrt.pop %v1121
  %v1153 = vmul.f32 %v1152, %v1121
  %v1154 = vmul.f32 %v1153, %v1152
  %v1155 = vmul.f32 0.5, %v1154
  %v1156 = vsub.f32 1.5, %v1155
  %v1157 = vmul.f32 %v1152, %v1156
  %vm1158 = vweird.f32 %v1121
  %vm1159 = vweird.f32 %v1152
  %vm1160 = vmor %vm1158, %vm1159
  %v1161 = vsel %vm1160, %v1152, %v1157
  %v1162 = vmul.f32 %v1094, %v1131
  %v1163 = vmul.f32 %v1095, %v1141
  %v1164 = vmul.f32 %v1096, %v1151
  %v1165 = vmul.f32 %v1097, %v1161
  %v1167 = vperm.slane %v1076, 0
  %v1169 = vmul.f32 %v1162, %v1167
  %v1170 = vmul.f32 %v1163, %v1167
  %v1171 = vmul.f32 %v1164, %v1167
  %v1172 = vmul.f32 %v1165, %v1167
  %v1174 = vperm.slane %v1077, 0
  %v1176 = vadd.f32 %v1169, %v1174
  %v1177 = vadd.f32 %v1170, %v1174
  %v1178 = vadd.f32 %v1171, %v1174
  %v1179 = vadd.f32 %v1172, %v1174
  %v1180 = vld [vmem:[%s10] sm:$0xff]
  %v1181 = vld [vmem:[%s10 + $0x8] sm:$0xff]
  %v1182 = vld [vmem:[%s10 + $0x10] sm:$0xff]
  %v1183 = vld [vmem:[%s10 + $0x18] sm:$0xff]
  %v1184 = vld [vmem:[%s10 + $0x20] sm:$0xff]
  %v1185 = vld [vmem:[%s10 + $0x28] sm:$0xff]
  %v1186 = vld [vmem:[%s10 + $0x30] sm:$0xff]
  %v1187 = vld [vmem:[%s10 + $0x38] sm:$0xff]
  %v1188 = vld [vmem:[%s10 + $0x40] sm:$0xff]
  %v1189 = vld [vmem:[%s10 + $0x48] sm:$0xff]
  %v1190 = vld [vmem:[%s10 + $0x50] sm:$0xff]
  %v1191 = vld [vmem:[%s10 + $0x58] sm:$0xff]
  %v1192 = vld [vmem:[%s10 + $0x60] sm:$0xff]
  %v1193 = vld [vmem:[%s10 + $0x68] sm:$0xff]
  %v1194 = vld [vmem:[%s10 + $0x70] sm:$0xff]
  %v1195 = vld [vmem:[%s10 + $0x78] sm:$0xff]
  %v1196 = vpack.c.bf16 %v1177, %v1176
  %v1197 = vpack.c.bf16 %v1179, %v1178
  %v1198 = vpack.c.bf16 %v1182, %v1180
  %v1199 = vpack.c.bf16 %v1183, %v1181
  %v1200 = vpack.c.bf16 %v1186, %v1184
  %v1201 = vpack.c.bf16 %v1187, %v1185
  %v1202 = vpack.c.bf16 %v1190, %v1188
  %v1203 = vpack.c.bf16 %v1191, %v1189
  %v1204 = vpack.c.bf16 %v1194, %v1192
  %v1205 = vpack.c.bf16 %v1195, %v1193
  %v1206 = vld [vmem:[%s11] sm:$0x3]
  %v1208 = vperm.slane %v1206, 0
  %v1209 = vperm.slane %v1206, 1
  %v1213 = vsel %vm58, %v1196, 0
  %v1216 = vsel %vm58, %v1197, 0
  %1218 = vmatpush.bf16.msra.mxu0 0
  %1219 = vmatpush.bf16.msra.mxu0 0
  %1220 = vmatpush.bf16.msra.mxu0 0
  %1221 = vmatpush.bf16.msra.mxu0 0
  %1222 = vmatpush.bf16.msra.mxu0 %v1204
  %1223 = vmatpush.bf16.msra.mxu0 %v1202
  %1224 = vmatpush.bf16.msra.mxu0 %v1200
  %1225 = vmatpush.bf16.msra.mxu0 %v1198
  %1226 = vmatmul.bf16.gmra.mxu0 %v1213
  %v1227 = vpop.f32.mrf.mxu0
  %v1228 = vadd.f32 %v1208, %v1227
  %v1229 = vpop.f32.mrf.mxu0
  %v1230 = vadd.f32 %v1208, %v1229
  %1231 = vmatmul.bf16.gmra.mxu0 %v1216
  %v1232 = vpop.f32.mrf.mxu0
  %v1233 = vadd.f32 %v1208, %v1232
  %v1234 = vpop.f32.mrf.mxu0
  %v1235 = vadd.f32 %v1208, %v1234
  %1236 = vdwg.mxu0
  %1237 = vmatpush.bf16.msra.mxu0 0
  %1238 = vmatpush.bf16.msra.mxu0 0
  %1239 = vmatpush.bf16.msra.mxu0 0
  %1240 = vmatpush.bf16.msra.mxu0 0
  %1241 = vmatpush.bf16.msra.mxu0 %v1205
  %1242 = vmatpush.bf16.msra.mxu0 %v1203
  %1243 = vmatpush.bf16.msra.mxu0 %v1201
  %1244 = vmatpush.bf16.msra.mxu0 %v1199
  %1245 = vmatmul.bf16.gmra.mxu0 %v1213
  %v1246 = vpop.f32.mrf.mxu0
  %v1247 = vadd.f32 %v1209, %v1246
  %v1248 = vpop.f32.mrf.mxu0
  %v1249 = vadd.f32 %v1209, %v1248
  %1250 = vmatmul.bf16.gmra.mxu0 %v1216
  %v1251 = vpop.f32.mrf.mxu0
  %v1252 = vadd.f32 %v1209, %v1251
  %v1253 = vpop.f32.mrf.mxu0
  %v1254 = vadd.f32 %v1209, %v1253
  %1255 = vdwg.mxu0
  %v1256 = vmul.f32 %v1228, 1.702
  %v1257 = vmul.f32 %v1247, 1.702
  %v1258 = vmul.f32 %v1230, 1.702
  %v1259 = vmul.f32 %v1249, 1.702
  %v1260 = vmul.f32 %v1233, 1.702
  %v1261 = vmul.f32 %v1252, 1.702
  %v1262 = vmul.f32 %v1235, 1.702
  %v1263 = vmul.f32 %v1254, 1.702
  %v1264 = vxor.u32 %v1256, 2147483648
  %v1265 = vxor.u32 %v1257, 2147483648
  %v1266 = vxor.u32 %v1258, 2147483648
  %v1267 = vxor.u32 %v1259, 2147483648
  %v1268 = vxor.u32 %v1260, 2147483648
  %v1269 = vxor.u32 %v1261, 2147483648
  %v1270 = vxor.u32 %v1262, 2147483648
  %v1271 = vxor.u32 %v1263, 2147483648
  %v1272 = vmul.f32 %v1264, 1.442695
  %v1273 = vpow.pop %v1272
  %v1274 = vmul.f32 %v1265, 1.442695
  %v1275 = vpow.pop %v1274
  %v1276 = vmul.f32 %v1266, 1.442695
  %v1277 = vpow.pop %v1276
  %v1278 = vmul.f32 %v1267, 1.442695
  %v1279 = vpow.pop %v1278
  %v1280 = vmul.f32 %v1268, 1.442695
  %v1281 = vpow.pop %v1280
  %v1282 = vmul.f32 %v1269, 1.442695
  %v1283 = vpow.pop %v1282
  %v1284 = vmul.f32 %v1270, 1.442695
  %v1285 = vpow.pop %v1284
  %v1286 = vmul.f32 %v1271, 1.442695
  %v1287 = vpow.pop %v1286
  %v1288 = vadd.f32 %v1273, 1.0
  %v1289 = vadd.f32 %v1275, 1.0
  %v1290 = vadd.f32 %v1277, 1.0
  %v1291 = vadd.f32 %v1279, 1.0
  %v1292 = vadd.f32 %v1281, 1.0
  %v1293 = vadd.f32 %v1283, 1.0
  %v1294 = vadd.f32 %v1285, 1.0
  %v1295 = vadd.f32 %v1287, 1.0
  %v1296 = vrcp.pop %v1288
  %v1297 = vmul.f32 %v1288, %v1296
  %v1298 = vsub.f32 1.0, %v1297
  %v1299 = vmul.f32 %v1296, %v1298
  %v1300 = vadd.f32 %v1296, %v1299
  %vm1301 = vweird.f32 %v1288
  %vm1302 = vweird.f32 %v1296
  %vm1303 = vmor %vm1301, %vm1302
  %v1304 = vsel %vm1303, %v1296, %v1300
  %v1305 = vand.u32 2147483647, %v1288
  %vm1306 = vcmp.eq.f32.partialorder %v1305, 8.507059e+37
  %v1307 = vand.u32 %v1288, 2147483648
  %v1308 = vor.u32 1.1754944e-38, %v1307
  %v1309 = vsel %vm1306, %v1308, %v1304
  %v1310 = vmul.f32 1.0, %v1309
  %v1311 = vrcp.pop %v1289
  %v1312 = vmul.f32 %v1289, %v1311
  %v1313 = vsub.f32 1.0, %v1312
  %v1314 = vmul.f32 %v1311, %v1313
  %v1315 = vadd.f32 %v1311, %v1314
  %vm1316 = vweird.f32 %v1289
  %vm1317 = vweird.f32 %v1311
  %vm1318 = vmor %vm1316, %vm1317
  %v1319 = vsel %vm1318, %v1311, %v1315
  %v1320 = vand.u32 2147483647, %v1289
  %vm1321 = vcmp.eq.f32.partialorder %v1320, 8.507059e+37
  %v1322 = vand.u32 %v1289, 2147483648
  %v1323 = vor.u32 1.1754944e-38, %v1322
  %v1324 = vsel %vm1321, %v1323, %v1319
  %v1325 = vmul.f32 1.0, %v1324
  %v1326 = vrcp.pop %v1290
  %v1327 = vmul.f32 %v1290, %v1326
  %v1328 = vsub.f32 1.0, %v1327
  %v1329 = vmul.f32 %v1326, %v1328
  %v1330 = vadd.f32 %v1326, %v1329
  %vm1331 = vweird.f32 %v1290
  %vm1332 = vweird.f32 %v1326
  %vm1333 = vmor %vm1331, %vm1332
  %v1334 = vsel %vm1333, %v1326, %v1330
  %v1335 = vand.u32 2147483647, %v1290
  %vm1336 = vcmp.eq.f32.partialorder %v1335, 8.507059e+37
  %v1337 = vand.u32 %v1290, 2147483648
  %v1338 = vor.u32 1.1754944e-38, %v1337
  %v1339 = vsel %vm1336, %v1338, %v1334
  %v1340 = vmul.f32 1.0, %v1339
  %v1341 = vrcp.pop %v1291
  %v1342 = vmul.f32 %v1291, %v1341
  %v1343 = vsub.f32 1.0, %v1342
  %v1344 = vmul.f32 %v1341, %v1343
  %v1345 = vadd.f32 %v1341, %v1344
  %vm1346 = vweird.f32 %v1291
  %vm1347 = vweird.f32 %v1341
  %vm1348 = vmor %vm1346, %vm1347
  %v1349 = vsel %vm1348, %v1341, %v1345
  %v1350 = vand.u32 2147483647, %v1291
  %vm1351 = vcmp.eq.f32.partialorder %v1350, 8.507059e+37
  %v1352 = vand.u32 %v1291, 2147483648
  %v1353 = vor.u32 1.1754944e-38, %v1352
  %v1354 = vsel %vm1351, %v1353, %v1349
  %v1355 = vmul.f32 1.0, %v1354
  %v1356 = vrcp.pop %v1292
  %v1357 = vmul.f32 %v1292, %v1356
  %v1358 = vsub.f32 1.0, %v1357
  %v1359 = vmul.f32 %v1356, %v1358
  %v1360 = vadd.f32 %v1356, %v1359
  %vm1361 = vweird.f32 %v1292
  %vm1362 = vweird.f32 %v1356
  %vm1363 = vmor %vm1361, %vm1362
  %v1364 = vsel %vm1363, %v1356, %v1360
  %v1365 = vand.u32 2147483647, %v1292
  %vm1366 = vcmp.eq.f32.partialorder %v1365, 8.507059e+37
  %v1367 = vand.u32 %v1292, 2147483648
  %v1368 = vor.u32 1.1754944e-38, %v1367
  %v1369 = vsel %vm1366, %v1368, %v1364
  %v1370 = vmul.f32 1.0, %v1369
  %v1371 = vrcp.pop %v1293
  %v1372 = vmul.f32 %v1293, %v1371
  %v1373 = vsub.f32 1.0, %v1372
  %v1374 = vmul.f32 %v1371, %v1373
  %v1375 = vadd.f32 %v1371, %v1374
  %vm1376 = vweird.f32 %v1293
  %vm1377 = vweird.f32 %v1371
  %vm1378 = vmor %vm1376, %vm1377
  %v1379 = vsel %vm1378, %v1371, %v1375
  %v1380 = vand.u32 2147483647, %v1293
  %vm1381 = vcmp.eq.f32.partialorder %v1380, 8.507059e+37
  %v1382 = vand.u32 %v1293, 2147483648
  %v1383 = vor.u32 1.1754944e-38, %v1382
  %v1384 = vsel %vm1381, %v1383, %v1379
  %v1385 = vmul.f32 1.0, %v1384
  %v1386 = vrcp.pop %v1294
  %v1387 = vmul.f32 %v1294, %v1386
  %v1388 = vsub.f32 1.0, %v1387
  %v1389 = vmul.f32 %v1386, %v1388
  %v1390 = vadd.f32 %v1386, %v1389
  %vm1391 = vweird.f32 %v1294
  %vm1392 = vweird.f32 %v1386
  %vm1393 = vmor %vm1391, %vm1392
  %v1394 = vsel %vm1393, %v1386, %v1390
  %v1395 = vand.u32 2147483647, %v1294
  %vm1396 = vcmp.eq.f32.partialorder %v1395, 8.507059e+37
  %v1397 = vand.u32 %v1294, 2147483648
  %v1398 = vor.u32 1.1754944e-38, %v1397
  %v1399 = vsel %vm1396, %v1398, %v1394
  %v1400 = vmul.f32 1.0, %v1399
  %v1401 = vrcp.pop %v1295
  %v1402 = vmul.f32 %v1295, %v1401
  %v1403 = vsub.f32 1.0, %v1402
  %v1404 = vmul.f32 %v1401, %v1403
  %v1405 = vadd.f32 %v1401, %v1404
  %vm1406 = vweird.f32 %v1295
  %vm1407 = vweird.f32 %v1401
  %vm1408 = vmor %vm1406, %vm1407
  %v1409 = vsel %vm1408, %v1401, %v1405
  %v1410 = vand.u32 2147483647, %v1295
  %vm1411 = vcmp.eq.f32.partialorder %v1410, 8.507059e+37
  %v1412 = vand.u32 %v1295, 2147483648
  %v1413 = vor.u32 1.1754944e-38, %v1412
  %v1414 = vsel %vm1411, %v1413, %v1409
  %v1415 = vmul.f32 1.0, %v1414
  %v1416 = vmul.f32 %v1228, %v1310
  %v1417 = vmul.f32 %v1247, %v1325
  %v1418 = vmul.f32 %v1230, %v1340
  %v1419 = vmul.f32 %v1249, %v1355
  %v1420 = vmul.f32 %v1233, %v1370
  %v1421 = vmul.f32 %v1252, %v1385
  %v1422 = vmul.f32 %v1235, %v1400
  %v1423 = vmul.f32 %v1254, %v1415
  %v1424 = vld [vmem:[%s12] sm:$0xff]
  %v1425 = vld [vmem:[%s12 + $0x8] sm:$0xff]
  %v1426 = vld [vmem:[%s12 + $0x10] sm:$0xff]
  %v1427 = vld [vmem:[%s12 + $0x18] sm:$0xff]
  %v1428 = vld [vmem:[%s12 + $0x20] sm:$0xff]
  %v1429 = vld [vmem:[%s12 + $0x28] sm:$0xff]
  %v1430 = vld [vmem:[%s12 + $0x30] sm:$0xff]
  %v1431 = vld [vmem:[%s12 + $0x38] sm:$0xff]
  %v1432 = vld [vmem:[%s12 + $0x40] sm:$0xff]
  %v1433 = vld [vmem:[%s12 + $0x48] sm:$0xff]
  %v1434 = vld [vmem:[%s12 + $0x50] sm:$0xff]
  %v1435 = vld [vmem:[%s12 + $0x58] sm:$0xff]
  %v1436 = vld [vmem:[%s12 + $0x60] sm:$0xff]
  %v1437 = vld [vmem:[%s12 + $0x68] sm:$0xff]
  %v1438 = vld [vmem:[%s12 + $0x70] sm:$0xff]
  %v1439 = vld [vmem:[%s12 + $0x78] sm:$0xff]
  %v1440 = vld [vmem:[%s12 + $0x80] sm:$0xff]
  %v1441 = vld [vmem:[%s12 + $0x88] sm:$0xff]
  %v1442 = vld [vmem:[%s12 + $0x90] sm:$0xff]
  %v1443 = vld [vmem:[%s12 + $0x98] sm:$0xff]
  %v1444 = vld [vmem:[%s12 + $0xa0] sm:$0xff]
  %v1445 = vld [vmem:[%s12 + $0xa8] sm:$0xff]
  %v1446 = vld [vmem:[%s12 + $0xb0] sm:$0xff]
  %v1447 = vld [vmem:[%s12 + $0xb8] sm:$0xff]
  %v1448 = vld [vmem:[%s12 + $0xc0] sm:$0xff]
  %v1449 = vld [vmem:[%s12 + $0xc8] sm:$0xff]
  %v1450 = vld [vmem:[%s12 + $0xd0] sm:$0xff]
  %v1451 = vld [vmem:[%s12 + $0xd8] sm:$0xff]
  %v1452 = vld [vmem:[%s12 + $0xe0] sm:$0xff]
  %v1453 = vld [vmem:[%s12 + $0xe8] sm:$0xff]
  %v1454 = vld [vmem:[%s12 + $0xf0] sm:$0xff]
  %v1455 = vld [vmem:[%s12 + $0xf8] sm:$0xff]
  %v1456 = vpack.c.bf16 %v1418, %v1416
  %v1457 = vpack.c.bf16 %v1419, %v1417
  %v1458 = vpack.c.bf16 %v1422, %v1420
  %v1459 = vpack.c.bf16 %v1423, %v1421
  %v1460 = vpack.c.bf16 %v1425, %v1424
  %v1461 = vpack.c.bf16 %v1427, %v1426
  %v1462 = vpack.c.bf16 %v1429, %v1428
  %v1463 = vpack.c.bf16 %v1431, %v1430
  %v1464 = vpack.c.bf16 %v1433, %v1432
  %v1465 = vpack.c.bf16 %v1435, %v1434
  %v1466 = vpack.c.bf16 %v1437, %v1436
  %v1467 = vpack.c.bf16 %v1439, %v1438
  %v1468 = vpack.c.bf16 %v1441, %v1440
  %v1469 = vpack.c.bf16 %v1443, %v1442
  %v1470 = vpack.c.bf16 %v1445, %v1444
  %v1471 = vpack.c.bf16 %v1447, %v1446
  %v1472 = vpack.c.bf16 %v1449, %v1448
  %v1473 = vpack.c.bf16 %v1451, %v1450
  %v1474 = vpack.c.bf16 %v1453, %v1452
  %v1475 = vpack.c.bf16 %v1455, %v1454
  %v1476 = vld [vmem:[%s13] sm:$0x1]
  %v1478 = vperm.slane %v1476, 0
  %1480 = vmatpush.bf16.msra.mxu0 %v1467
  %1481 = vmatpush.bf16.msra.mxu0 %v1466
  %1482 = vmatpush.bf16.msra.mxu0 %v1465
  %1483 = vmatpush.bf16.msra.mxu0 %v1464
  %1484 = vmatpush.bf16.msra.mxu0 %v1463
  %1485 = vmatpush.bf16.msra.mxu0 %v1462
  %1486 = vmatpush.bf16.msra.mxu0 %v1461
  %1487 = vmatpush.bf16.msra.mxu0 %v1460
  %1488 = vmatmul.bf16.gmra.mxu0 %v1456
  %v1489 = vpop.f32.mrf.mxu0
  %v1490 = vadd.f32 %v1478, %v1489
  %v1491 = vpop.f32.mrf.mxu0
  %v1492 = vadd.f32 %v1478, %v1491
  %1493 = vmatmul.bf16.gmra.mxu0 %v1458
  %v1494 = vpop.f32.mrf.mxu0
  %v1495 = vadd.f32 %v1478, %v1494
  %v1496 = vpop.f32.mrf.mxu0
  %v1497 = vadd.f32 %v1478, %v1496
  %1498 = vdwg.mxu0
  %1499 = vmatpush.bf16.msra.mxu0 %v1475
  %1500 = vmatpush.bf16.msra.mxu0 %v1474
  %1501 = vmatpush.bf16.msra.mxu0 %v1473
  %1502 = vmatpush.bf16.msra.mxu0 %v1472
  %1503 = vmatpush.bf16.msra.mxu0 %v1471
  %1504 = vmatpush.bf16.msra.mxu0 %v1470
  %1505 = vmatpush.bf16.msra.mxu0 %v1469
  %1506 = vmatpush.bf16.msra.mxu0 %v1468
  %1507 = vmatmul.bf16.gmra.mxu0 %v1457
  %v1508 = vpop.f32.mrf.mxu0
  %v1509 = vadd.f32 %v1490, %v1508
  %v1510 = vpop.f32.mrf.mxu0
  %v1511 = vadd.f32 %v1492, %v1510
  %1512 = vmatmul.bf16.gmra.mxu0 %v1459
  %v1513 = vpop.f32.mrf.mxu0
  %v1514 = vadd.f32 %v1495, %v1513
  %v1515 = vpop.f32.mrf.mxu0
  %v1516 = vadd.f32 %v1497, %v1515
  %1517 = vdwg.mxu0
  %v1518 = vadd.f32 %v1072, %v1509
  %v1519 = vadd.f32 %v1073, %v1511
  %v1520 = vadd.f32 %v1074, %v1514
  %v1521 = vadd.f32 %v1075, %v1516
  %1522 = vst.msk [vmem:[%s14] sm:$0xff] %vm58, %v1518
  %1523 = vst.msk [vmem:[%s14 + $0x8] sm:$0xff] %vm58, %v1519
  %1524 = vst.msk [vmem:[%s14 + $0x10] sm:$0xff] %vm58, %v1520
  %1525 = vst.msk [vmem:[%s14 + $0x18] sm:$0x3] %vm68, %v1521
  // Predicated region
  $region58: #{custom_clip_forward.21} parent=0 // pred_check
    _
  $region59: #{custom_clip_forward.21} parent=0 // pred_check_branch
    %1527 = sbr.rel (0) target = $region61
  $region60: #{custom_clip_forward.21} parent=0 // pred_region
    _
  $region61: #{custom_clip_forward.21} parent=0 // pred_fallthru
    _
  // Predicated region
  $region62: #{custom_clip_forward.21} parent=0 // pred_check
    _
  $region63: #{custom_clip_forward.21} parent=0 // pred_check_branch
    %1529 = sbr.rel (0) target = $region65
  $region64: #{custom_clip_forward.21} parent=0 // pred_region
    _
  $region65: #{custom_clip_forward.21} parent=0 // pred_fallthru
    _

</llo_original>
